<compile_context>
chip_gen: v6e
topology: v6e:2x2x1
jax: 0.10.0
libtpu: 0.0.40
codegen_flags: <defaults>
</compile_context>

<pallas_src>
import math

import jax
import jax.numpy as jnp
from jax.experimental import pallas as pl
from jax.experimental.pallas import tpu as pltpu

VMEM = pl.BlockSpec(memory_space=pltpu.MemorySpace.VMEM)


# ------------------------------ fused forward kernel ---------------------------------

def _fused_kernel(ts_ref, gts_ref, w_in_ts_ref, b_in_ts_ref, w_in_g_ref, b_in_g_ref,
                  enc_whh_ref, whh_g_ref,
                  wq_ref, bq_ref, wk_ref, bk_ref, wv_ref, bv_ref,
                  wf_ctx_ref, wf_q_ref, bf_ref,
                  f1_wg_ref, f1_wh_ref, f1_b_ref,
                  mlp_w1_ref, mlp_b1_ref, mlp_w2_ref, mlp_b2_ref,
                  o_ref,
                  gx_ts_ref, gx_g_ref):
    T, B, G4 = gx_ts_ref.shape          # (T, B, 4U)
    U = G4 // 4
    NU = gx_g_ref.shape[-1] // 4        # N * U  (packed node hidden width)
    N = NU // U
    f32 = jnp.float32
    inv_sqrt_u = 1.0 / math.sqrt(U)

    def dot(a, b):
        return jnp.dot(a, b, preferred_element_type=f32)

    # ---- pre-pass: hoist ALL input-to-hidden projections out of the recurrence ----
    # One batched matmul over T (embedding already folded into the weights); the
    # sequential loop below only touches the hidden-to-hidden terms.
    gx_ts_ref[...] = (jnp.einsum('tbf,tfg->tbg', ts_ref[...], w_in_ts_ref[...],
                                 preferred_element_type=f32) + b_in_ts_ref[...])
    gx_g_ref[...] = (jnp.einsum('tbf,tfg->tbg', gts_ref[...], w_in_g_ref[...],
                                preferred_element_type=f32) + b_in_g_ref[...])

    def step(t, carry):
        h_att, c_ts, h_g, c_g = carry

        # ---- target-series LSTM cell (hidden input = previous attention output) ----
        # NOTE: the 32-lane gate slices are static sub-vreg slices; acceptable
        # micro-cost now that the kernel is no longer DMA/launch bound.
        gts_gates = gx_ts_ref[t] + dot(h_att, enc_whh_ref[t])            # (B, 4U)
        i = jax.nn.sigmoid(gts_gates[:, 0 * U:1 * U])
        f = jax.nn.sigmoid(gts_gates[:, 1 * U:2 * U])
        g = jnp.tanh(gts_gates[:, 2 * U:3 * U])
        o = jax.nn.sigmoid(gts_gates[:, 3 * U:4 * U])
        c_ts_new = f * c_ts + i * g
        h_ts = o * jnp.tanh(c_ts_new)

        # ---- all N node LSTM cells as ONE lane-dense matmul (block-diag, gate-major) ----
        g_gates = gx_g_ref[t] + dot(h_g, whh_g_ref[t])                   # (B, 4*N*U)
        gi = jax.nn.sigmoid(g_gates[:, 0 * NU:1 * NU])                   # (B, N*U)
        gf = jax.nn.sigmoid(g_gates[:, 1 * NU:2 * NU])
        gg = jnp.tanh(g_gates[:, 2 * NU:3 * NU])
        go = jax.nn.sigmoid(g_gates[:, 3 * NU:4 * NU])
        c_g_new = gf * c_g + gi * gg
        hg = go * jnp.tanh(c_g_new)                                      # (B, N*U)

        # step 0: the PyTorch module discards the freshly computed cell states
        # (intentional -- do NOT "fix"; it matches the reference model).
        keep = (t > 0).astype(f32)
        c_ts_new = c_ts_new * keep
        c_g_new = c_g_new * keep

        # ---- ATT block: shared K/V projections as single block-diag matmuls ----
        q = dot(h_ts, wq_ref[...]) + bq_ref[...]                         # (B, U)
        k_pk = dot(hg, wk_ref[...]) + bk_ref[...]                        # (B, N*U)
        v_pk = dot(hg, wv_ref[...]) + bv_ref[...]                        # (B, N*U)
        scores = [jnp.sum(q * k_pk[:, n * U:(n + 1) * U], axis=-1, keepdims=True)
                  * inv_sqrt_u for n in range(N)]                        # N x (B, 1)
        m = scores[0]
        for n in range(1, N):
            m = jnp.maximum(m, scores[n])
        exps = [jnp.exp(s - m) for s in scores]
        denom = exps[0]
        for n in range(1, N):
            denom = denom + exps[n]
        ctx = exps[0] * v_pk[:, 0:U]
        for n in range(1, N):
            ctx = ctx + exps[n] * v_pk[:, n * U:(n + 1) * U]
        ctx = ctx / denom                                                # (B, U)
        h_att_new = jnp.maximum(dot(ctx, wf_ctx_ref[...]) + dot(h_ts, wf_q_ref[...])
                                + bf_ref[...], 0.0)

        # ---- fuse1 on every node hidden: two 2D matmuls, no concat / broadcast ----
        h_g_new = jnp.maximum(dot(hg, f1_wg_ref[...]) + dot(h_ts, f1_wh_ref[...])
                              + f1_b_ref[...], 0.0)                      # (B, N*U)

        return h_att_new, c_ts_new, h_g_new, c_g_new

    zeros_bu = jnp.zeros((B, U), f32)
    zeros_bnu = jnp.zeros((B, NU), f32)
    h_att, _, _, _ = jax.lax.fori_loop(
        0, T, step, (zeros_bu, zeros_bu, zeros_bnu, zeros_bnu), unroll=True)

    # ---- final MLP head (nn.Dropout(p=0.2) is identity in eval mode) ----
    hdn = jnp.maximum(dot(h_att, mlp_w1_ref[...]) + mlp_b1_ref[...], 0.0)
    o_ref[...] = jnp.sum(hdn * mlp_w2_ref[...], axis=-1, keepdims=True) + mlp_b2_ref[...]


# ------------------------------------ wrapper -----------------------------------------

def forward(ts, gts, p):
    """Pallas-backed forward pass (lstm path, distance=None, eval mode)."""
    B, T, F = ts.shape
    N = gts.shape[1]
    U = p['att_wq'].shape[0]
    HIGH = jax.lax.Precision.HIGHEST
    NF, NU, G = N * F, N * U, 4 * N * U

    # ---------- wrapper-side weight repacking (would be done once at load time) -------
    # Fold the (linear) embedding into the input-to-hidden LSTM weights:
    #   emb(x) @ W_ih == x @ (emb_w @ W_ih) + (emb_b @ W_ih)
    w_in_ts = jnp.einsum('fh,thg->tfg', p['emb_w'], p['enc_wih'], precision=HIGH)
    b_in_ts = jnp.einsum('oh,thg->tog', p['emb_b'], p['enc_wih'], precision=HIGH) + p['enc_b']
    w_in_g_n = jnp.einsum('fh,tnhg->tnfg', p['emb_w'], p['enc2_wih'], precision=HIGH)
    b_in_g_n = jnp.einsum('oh,tnhg->tnog', p['emb_b'], p['enc2_wih'], precision=HIGH) + p['enc2_b']

    # Block-diagonal, gate-major packing of the per-node weights so the node LSTM is a
    # single lane-dense matmul: gate k / node n lives at cols [k*N*U + n*U : k*N*U + (n+1)*U].
    w_in_g = jnp.zeros((T, NF, G), jnp.float32)
    b_in_g = jnp.zeros((T, 1, G), jnp.float32)
    whh_g = jnp.zeros((T, NU, G), jnp.float32)
    for n in range(N):
        for k in range(4):
            col = slice(k * NU + n * U, k * NU + (n + 1) * U)
            w_in_g = w_in_g.at[:, n * F:(n + 1) * F, col].set(
                w_in_g_n[:, n, :, k * U:(k + 1) * U])
            b_in_g = b_in_g.at[:, :, col].set(b_in_g_n[:, n, :, k * U:(k + 1) * U])
            whh_g = whh_g.at[:, n * U:(n + 1) * U, col].set(
                p['enc2_whh'][:, n, :, k * U:(k + 1) * U])

    def bd_repeat(w):  # block_diag(w, ..., w), N copies -> (N*U, N*U)
        out = jnp.zeros((NU, NU), jnp.float32)
        for n in range(N):
            out = out.at[n * U:(n + 1) * U, n * U:(n + 1) * U].set(w)
        return out

    wk_bd = bd_repeat(p['att_wk'])
    wv_bd = bd_repeat(p['att_wv'])
    f1_wg_bd = bd_repeat(p['fuse1_wg'])
    bk_t = jnp.tile(p['att_bk'], (1, N))
    bv_t = jnp.tile(p['att_bv'], (1, N))
    f1_b_t = jnp.tile(p['fuse1_b'], (1, N))
    f1_wh_rep = jnp.tile(p['fuse1_wh'], (1, N))        # (U, N*U): h_ts term for every node

    # time-major activations; node inputs packed node-major along lanes
    ts_tm = jnp.transpose(ts, (1, 0, 2))                               # (T, B, F)
    gts_pk = jnp.transpose(gts, (2, 0, 1, 3)).reshape(T, B, NF)        # (T, B, N*F)

    args = [ts_tm, gts_pk, w_in_ts, b_in_ts, w_in_g, b_in_g,
            p['enc_whh'], whh_g,
            p['att_wq'], p['att_bq'], wk_bd, bk_t, wv_bd, bv_t,
            p['att_wf_ctx'], p['att_wf_q'], p['att_bf'],
            f1_wg_bd, f1_wh_rep, f1_b_t,
            p['mlp_w1'], p['mlp_b1'], p['mlp_w2'], p['mlp_b2']]

    return pl.pallas_call(
        _fused_kernel,
        out_shape=jax.ShapeDtypeStruct((B, 1), jnp.float32),
        in_specs=[VMEM] * len(args),
        out_specs=VMEM,
        scratch_shapes=[pltpu.VMEM((T, B, 4 * U), jnp.float32),   # hoisted target gates
                        pltpu.VMEM((T, B, G), jnp.float32)],      # hoisted node gates
        compiler_params=pltpu.CompilerParams(vmem_limit_bytes=32 * 1024 * 1024),
    )(*args)


# ------------------------------------ parameter init ----------------------------------

def init_params(key, units, num_node, seq_len, input_dim):
    U_, H_ = units, units // 2
    keys = iter(jax.random.split(key, 32))

    def xavier(shape):
        limit = math.sqrt(6.0 / (shape[-2] + shape[-1]))
        return jax.random.uniform(next(keys), shape, jnp.float32, -limit, limit)

    def u(shape, scale=0.1):
        return jax.random.uniform(next(keys), shape, jnp.float32, -scale, scale)

    return dict(
        emb_w=xavier((input_dim, H_)), emb_b=u((1, H_)),
        # per-timestep LSTMCells (weights transposed to (in, 4U); b = b_ih + b_hh combined)
        enc_wih=u((seq_len, H_, 4 * U_)),
        enc_whh=u((seq_len, U_, 4 * U_)),
        enc_b=u((seq_len, 1, 4 * U_)),
        enc2_wih=u((seq_len, num_node, H_, 4 * U_)),
        enc2_whh=u((seq_len, num_node, U_, 4 * U_)),
        enc2_b=u((seq_len, num_node, 1, 4 * U_)),
        # ATT block
        att_wq=xavier((U_, U_)), att_bq=u((1, U_)),
        att_wk=xavier((U_, U_)), att_bk=u((1, U_)),
        att_wv=xavier((U_, U_)), att_bv=u((1, U_)),
        att_wf_ctx=xavier((U_, U_)), att_wf_q=xavier((U_, U_)), att_bf=u((1, U_)),
        # fuse1 (Linear(2U, U) weight split into its two U-wide halves)
        fuse1_wg=xavier((U_, U_)), fuse1_wh=xavier((U_, U_)), fuse1_b=u((1, U_)),
        # mlp head
        mlp_w1=xavier((U_, H_)), mlp_b1=u((1, H_)),
        mlp_w2=u((1, H_)), mlp_b2=u((1, 1)),
    )


# ------------------------------ pure-JAX reference check ------------------------------

def ref_forward(ts, gts, p):
    HIGH = jax.lax.Precision.HIGHEST

    def dot(a, b):
        return jnp.dot(a, b, precision=HIGH)

    def lstm(x, h, c, wih, whh, b):
        g = dot(x, wih) + dot(h, whh) + b
        i, f, gg, o = jnp.split(g, 4, axis=-1)
        i, f, o = jax.nn.sigmoid(i), jax.nn.sigmoid(f), jax.nn.sigmoid(o)
        gg = jnp.tanh(gg)
        c2 = f * c + i * gg
        return o * jnp.tanh(c2), c2

    def att(query, keys):
        q = dot(query, p['att_wq']) + p['att_bq']
        k = jnp.einsum('bnu,uv->bnv', keys, p['att_wk'], precision=HIGH) + p['att_bk']
        v = jnp.einsum('bnu,uv->bnv', keys, p['att_wv'], precision=HIGH) + p['att_bv']
        s = jnp.einsum('bu,bnu->bn', q, k, precision=HIGH) / math.sqrt(q.shape[-1])
        pr = jax.nn.softmax(s, axis=-1)
        ctx = jnp.einsum('bn,bnu->bu', pr, v, precision=HIGH)
        return jax.nn.relu(dot(ctx, p['att_wf_ctx']) + dot(query, p['att_wf_q']) + p['att_bf'])

    def fuse1(a, b):
        return jax.nn.relu(dot(a, p['fuse1_wg']) + dot(b, p['fuse1_wh']) + p['fuse1_b'])

    def emb(x):
        return dot(x, p['emb_w']) + p['emb_b']

    B_, T_, _ = ts.shape
    N_ = gts.shape[1]
    U_ = p['att_wq'].shape[0]
    zeros = jnp.zeros((B_, U_), jnp.float32)
    h_ts, _ = lstm(emb(ts[:, 0, :]), zeros, zeros,
                   p['enc_wih'][0], p['enc_whh'][0], p['enc_b'][0])
    h_gts = []
    for j in range(N_):
        hg, _ = lstm(emb(gts[:, j, 0, :]), zeros, zeros,
                     p['enc2_wih'][0, j], p['enc2_whh'][0, j], p['enc2_b'][0, j])
        h_gts.append(hg)
    h_ts_a = att(h_ts, jnp.stack(h_gts, axis=1))
    for j in range(N_):
        h_gts[j] = fuse1(h_gts[j], h_ts)
    c_ts = zeros
    c_gts = [zeros for _ in range(N_)]
    for i in range(1, T_):
        h_ts, c_ts = lstm(emb(ts[:, i, :]), h_ts_a, c_ts,
                          p['enc_wih'][i], p['enc_whh'][i], p['enc_b'][i])
        for j in range(N_):
            h_gts[j], c_gts[j] = lstm(emb(gts[:, j, i, :]), h_gts[j], c_gts[j],
                                      p['enc2_wih'][i, j], p['enc2_whh'][i, j],
                                      p['enc2_b'][i, j])
        h_ts_a = att(h_ts, jnp.stack(h_gts, axis=1))
        for j in range(N_):
            h_gts[j] = fuse1(h_gts[j], h_ts)
    hidden = jax.nn.relu(dot(h_ts_a, p['mlp_w1']) + p['mlp_b1'])
    return jnp.sum(hidden * p['mlp_w2'], axis=-1, keepdims=True) + p['mlp_b2']


# ------------------------------------------ main ---------------------------------------

if __name__ == "__main__":
    U, N, T, F_IN, B = 32, 2, 4, 8, 2   # units, num_node, seq_len, input feature dim, batch
    key = jax.random.PRNGKey(0)
    kp, kts, kgts = jax.random.split(key, 3)
    params = init_params(kp, U, N, T, F_IN)
    ts = jax.random.normal(kts, (B, T, F_IN), jnp.float32)
    gts = jax.random.normal(kgts, (B, N, T, F_IN), jnp.float32)

    fwd = jax.jit(forward)
    out = jax.block_until_ready(fwd(ts, gts, params))
    ref = jax.block_until_ready(ref_forward(ts, gts, params))

    assert out.shape == (B, 1), out.shape
    max_err = float(jnp.max(jnp.abs(out - ref)))
    assert max_err < 5e-3, f"mismatch vs reference: {max_err}"
    print("KERNEL_OK")
</pallas_src>

<mosaic_0001>
module attributes {stable_mosaic.version = 11 : i64} {
  func.func @_fused_kernel(%arg0: memref<4x2x8xf32, #tpu.memory_space<vmem>>, %arg1: memref<4x2x16xf32, #tpu.memory_space<vmem>>, %arg2: memref<4x8x128xf32, #tpu.memory_space<vmem>>, %arg3: memref<4x1x128xf32, #tpu.memory_space<vmem>>, %arg4: memref<4x16x256xf32, #tpu.memory_space<vmem>>, %arg5: memref<4x1x256xf32, #tpu.memory_space<vmem>>, %arg6: memref<4x32x128xf32, #tpu.memory_space<vmem>>, %arg7: memref<4x64x256xf32, #tpu.memory_space<vmem>>, %arg8: memref<32x32xf32, #tpu.memory_space<vmem>>, %arg9: memref<1x32xf32, #tpu.memory_space<vmem>>, %arg10: memref<64x64xf32, #tpu.memory_space<vmem>>, %arg11: memref<1x64xf32, #tpu.memory_space<vmem>>, %arg12: memref<64x64xf32, #tpu.memory_space<vmem>>, %arg13: memref<1x64xf32, #tpu.memory_space<vmem>>, %arg14: memref<32x32xf32, #tpu.memory_space<vmem>>, %arg15: memref<32x32xf32, #tpu.memory_space<vmem>>, %arg16: memref<1x32xf32, #tpu.memory_space<vmem>>, %arg17: memref<64x64xf32, #tpu.memory_space<vmem>>, %arg18: memref<32x64xf32, #tpu.memory_space<vmem>>, %arg19: memref<1x64xf32, #tpu.memory_space<vmem>>, %arg20: memref<32x16xf32, #tpu.memory_space<vmem>>, %arg21: memref<1x16xf32, #tpu.memory_space<vmem>>, %arg22: memref<1x16xf32, #tpu.memory_space<vmem>>, %arg23: memref<1x1xf32, #tpu.memory_space<vmem>>, %arg24: memref<2x1xf32, #tpu.memory_space<vmem>>, %arg25: memref<4x2x128xf32, #tpu.memory_space<vmem>>, %arg26: memref<4x2x256xf32, #tpu.memory_space<vmem>>) attributes {dimension_semantics = [], scalar_prefetch = 0 : i64, scratch_operands = 2 : i64, tpu.core_type = #tpu.core_type<tc>} {
    %c0 = arith.constant 0 : index
    %c0_0 = arith.constant 0 : index
    %c0_1 = arith.constant 0 : index
    %0 = vector.load %arg0[%c0, %c0_0, %c0_1] : memref<4x2x8xf32, #tpu.memory_space<vmem>>, vector<4x2x8xf32>
    %c0_2 = arith.constant 0 : index
    %c0_3 = arith.constant 0 : index
    %c0_4 = arith.constant 0 : index
    %1 = vector.load %arg2[%c0_2, %c0_3, %c0_4] : memref<4x8x128xf32, #tpu.memory_space<vmem>>, vector<4x8x128xf32>
    "tpu.trace_start"() <{level = 10 : i32, message = "tbf,tfg->tbg"}> : () -> ()
    %cst = arith.constant dense<0.000000e+00> : vector<4x2x128xf32>
    %2 = tpu.matmul %0, %1, %cst {dimension_numbers = #tpu.dot_dimension_numbers<[2], [1], [1], [2], [0, 0, 0, 1, 1, 2], [0], [0]>} : vector<4x2x8xf32>, vector<4x8x128xf32>, vector<4x2x128xf32> -> vector<4x2x128xf32>
    "tpu.trace_stop"() : () -> ()
    %c0_5 = arith.constant 0 : index
    %c0_6 = arith.constant 0 : index
    %c0_7 = arith.constant 0 : index
    %3 = vector.load %arg3[%c0_5, %c0_6, %c0_7] : memref<4x1x128xf32, #tpu.memory_space<vmem>>, vector<4x1x128xf32>
    %4 = vector.broadcast %3 : vector<4x1x128xf32> to vector<4x2x128xf32>
    %5 = arith.addf %2, %4 : vector<4x2x128xf32>
    %c0_8 = arith.constant 0 : index
    %c0_9 = arith.constant 0 : index
    %c0_10 = arith.constant 0 : index
    %6 = vector.load %arg25[%c0_8, %c0_9, %c0_10] : memref<4x2x128xf32, #tpu.memory_space<vmem>>, vector<4x2x128xf32>
    tpu.vector_store %arg25[%c0_8, %c0_9, %c0_10], %5 {strides = array<i32>} : memref<4x2x128xf32, #tpu.memory_space<vmem>>, vector<4x2x128xf32>,
    %c0_11 = arith.constant 0 : index
    %c0_12 = arith.constant 0 : index
    %c0_13 = arith.constant 0 : index
    %7 = vector.load %arg1[%c0_11, %c0_12, %c0_13] : memref<4x2x16xf32, #tpu.memory_space<vmem>>, vector<4x2x16xf32>
    %c0_14 = arith.constant 0 : index
    %c0_15 = arith.constant 0 : index
    %c0_16 = arith.constant 0 : index
    %8 = vector.load %arg4[%c0_14, %c0_15, %c0_16] : memref<4x16x256xf32, #tpu.memory_space<vmem>>, vector<4x16x256xf32>
    "tpu.trace_start"() <{level = 10 : i32, message = "tbf,tfg->tbg"}> : () -> ()
    %cst_17 = arith.constant dense<0.000000e+00> : vector<4x2x256xf32>
    %9 = tpu.matmul %7, %8, %cst_17 {dimension_numbers = #tpu.dot_dimension_numbers<[2], [1], [1], [2], [0, 0, 0, 1, 1, 2], [0], [0]>} : vector<4x2x16xf32>, vector<4x16x256xf32>, vector<4x2x256xf32> -> vector<4x2x256xf32>
    "tpu.trace_stop"() : () -> ()
    %c0_18 = arith.constant 0 : index
    %c0_19 = arith.constant 0 : index
    %c0_20 = arith.constant 0 : index
    %10 = vector.load %arg5[%c0_18, %c0_19, %c0_20] : memref<4x1x256xf32, #tpu.memory_space<vmem>>, vector<4x1x256xf32>
    %11 = vector.broadcast %10 : vector<4x1x256xf32> to vector<4x2x256xf32>
    %12 = arith.addf %9, %11 : vector<4x2x256xf32>
    %c0_21 = arith.constant 0 : index
    %c0_22 = arith.constant 0 : index
    %c0_23 = arith.constant 0 : index
    %13 = vector.load %arg26[%c0_21, %c0_22, %c0_23] : memref<4x2x256xf32, #tpu.memory_space<vmem>>, vector<4x2x256xf32>
    tpu.vector_store %arg26[%c0_21, %c0_22, %c0_23], %12 {strides = array<i32>} : memref<4x2x256xf32, #tpu.memory_space<vmem>>, vector<4x2x256xf32>,
    %cst_24 = arith.constant 0.000000e+00 : f32
    %14 = vector.broadcast %cst_24 : f32 to vector<2x32xf32>
    %cst_25 = arith.constant 0.000000e+00 : f32
    %15 = vector.broadcast %cst_25 : f32 to vector<2x64xf32>
    %c0_i32 = arith.constant 0 : i32
    %16 = arith.index_cast %c0_i32 : i32 to index
    %c0_26 = arith.constant 0 : index
    %c0_27 = arith.constant 0 : index
    %17 = vector.load %arg25[%16, %c0_26, %c0_27] : memref<4x2x128xf32, #tpu.memory_space<vmem>>, vector<1x2x128xf32>
    %18 = vector.shape_cast %17 : vector<1x2x128xf32> to vector<2x128xf32>
    %19 = arith.index_cast %c0_i32 : i32 to index
    %c0_28 = arith.constant 0 : index
    %c0_29 = arith.constant 0 : index
    %20 = vector.load %arg6[%19, %c0_28, %c0_29] : memref<4x32x128xf32, #tpu.memory_space<vmem>>, vector<1x32x128xf32>
    %21 = vector.shape_cast %20 : vector<1x32x128xf32> to vector<32x128xf32>
    %cst_30 = arith.constant dense<0.000000e+00> : vector<2x128xf32>
    %22 = tpu.matmul %14, %21, %cst_30 {dimension_numbers = #tpu.dot_dimension_numbers<[1], [0], [0], [1], [0, 0, 1, 1], [], []>} : vector<2x32xf32>, vector<32x128xf32>, vector<2x128xf32> -> vector<2x128xf32>
    %23 = arith.addf %18, %22 : vector<2x128xf32>
    %24 = vector.extract_strided_slice %23 {offsets = [0, 0], sizes = [2, 32], strides = [1, 1]} : vector<2x128xf32> to vector<2x32xf32>
    %25 = arith.negf %24 : vector<2x32xf32>
    %26 = math.exp %25 : vector<2x32xf32>
    %cst_31 = arith.constant 1.000000e+00 : f32
    %27 = vector.broadcast %cst_31 : f32 to vector<2x32xf32>
    %28 = arith.addf %27, %26 : vector<2x32xf32>
    %29 = arith.divf %27, %28 : vector<2x32xf32>
    %30 = vector.extract_strided_slice %23 {offsets = [0, 32], sizes = [2, 32], strides = [1, 1]} : vector<2x128xf32> to vector<2x32xf32>
    %31 = arith.negf %30 : vector<2x32xf32>
    %32 = math.exp %31 : vector<2x32xf32>
    %cst_32 = arith.constant 1.000000e+00 : f32
    %33 = vector.broadcast %cst_32 : f32 to vector<2x32xf32>
    %34 = arith.addf %33, %32 : vector<2x32xf32>
    %35 = arith.divf %33, %34 : vector<2x32xf32>
    %36 = vector.extract_strided_slice %23 {offsets = [0, 64], sizes = [2, 32], strides = [1, 1]} : vector<2x128xf32> to vector<2x32xf32>
    %37 = math.tanh %36 : vector<2x32xf32>
    %38 = vector.extract_strided_slice %23 {offsets = [0, 96], sizes = [2, 32], strides = [1, 1]} : vector<2x128xf32> to vector<2x32xf32>
    %39 = arith.negf %38 : vector<2x32xf32>
    %40 = math.exp %39 : vector<2x32xf32>
    %cst_33 = arith.constant 1.000000e+00 : f32
    %41 = vector.broadcast %cst_33 : f32 to vector<2x32xf32>
    %42 = arith.addf %41, %40 : vector<2x32xf32>
    %43 = arith.divf %41, %42 : vector<2x32xf32>
    %44 = arith.mulf %35, %14 : vector<2x32xf32>
    %45 = arith.mulf %29, %37 : vector<2x32xf32>
    %46 = arith.addf %44, %45 : vector<2x32xf32>
    %47 = math.tanh %46 : vector<2x32xf32>
    %48 = arith.mulf %43, %47 : vector<2x32xf32>
    %49 = arith.index_cast %c0_i32 : i32 to index
    %c0_34 = arith.constant 0 : index
    %c0_35 = arith.constant 0 : index
    %50 = vector.load %arg26[%49, %c0_34, %c0_35] : memref<4x2x256xf32, #tpu.memory_space<vmem>>, vector<1x2x256xf32>
    %51 = vector.shape_cast %50 : vector<1x2x256xf32> to vector<2x256xf32>
    %52 = arith.index_cast %c0_i32 : i32 to index
    %c0_36 = arith.constant 0 : index
    %c0_37 = arith.constant 0 : index
    %53 = vector.load %arg7[%52, %c0_36, %c0_37] : memref<4x64x256xf32, #tpu.memory_space<vmem>>, vector<1x64x256xf32>
    %54 = vector.shape_cast %53 : vector<1x64x256xf32> to vector<64x256xf32>
    %cst_38 = arith.constant dense<0.000000e+00> : vector<2x256xf32>
    %55 = tpu.matmul %15, %54, %cst_38 {dimension_numbers = #tpu.dot_dimension_numbers<[1], [0], [0], [1], [0, 0, 1, 1], [], []>} : vector<2x64xf32>, vector<64x256xf32>, vector<2x256xf32> -> vector<2x256xf32>
    %56 = arith.addf %51, %55 : vector<2x256xf32>
    %57 = vector.extract_strided_slice %56 {offsets = [0, 0], sizes = [2, 64], strides = [1, 1]} : vector<2x256xf32> to vector<2x64xf32>
    %58 = arith.negf %57 : vector<2x64xf32>
    %59 = math.exp %58 : vector<2x64xf32>
    %cst_39 = arith.constant 1.000000e+00 : f32
    %60 = vector.broadcast %cst_39 : f32 to vector<2x64xf32>
    %61 = arith.addf %60, %59 : vector<2x64xf32>
    %62 = arith.divf %60, %61 : vector<2x64xf32>
    %63 = vector.extract_strided_slice %56 {offsets = [0, 64], sizes = [2, 64], strides = [1, 1]} : vector<2x256xf32> to vector<2x64xf32>
    %64 = arith.negf %63 : vector<2x64xf32>
    %65 = math.exp %64 : vector<2x64xf32>
    %cst_40 = arith.constant 1.000000e+00 : f32
    %66 = vector.broadcast %cst_40 : f32 to vector<2x64xf32>
    %67 = arith.addf %66, %65 : vector<2x64xf32>
    %68 = arith.divf %66, %67 : vector<2x64xf32>
    %69 = vector.extract_strided_slice %56 {offsets = [0, 128], sizes = [2, 64], strides = [1, 1]} : vector<2x256xf32> to vector<2x64xf32>
    %70 = math.tanh %69 : vector<2x64xf32>
    %71 = vector.extract_strided_slice %56 {offsets = [0, 192], sizes = [2, 64], strides = [1, 1]} : vector<2x256xf32> to vector<2x64xf32>
    %72 = arith.negf %71 : vector<2x64xf32>
    %73 = math.exp %72 : vector<2x64xf32>
    %cst_41 = arith.constant 1.000000e+00 : f32
    %74 = vector.broadcast %cst_41 : f32 to vector<2x64xf32>
    %75 = arith.addf %74, %73 : vector<2x64xf32>
    %76 = arith.divf %74, %75 : vector<2x64xf32>
    %77 = arith.mulf %68, %15 : vector<2x64xf32>
    %78 = arith.mulf %62, %70 : vector<2x64xf32>
    %79 = arith.addf %77, %78 : vector<2x64xf32>
    %80 = math.tanh %79 : vector<2x64xf32>
    %81 = arith.mulf %76, %80 : vector<2x64xf32>
    %c0_i32_42 = arith.constant 0 : i32
    %82 = arith.cmpi sgt, %c0_i32, %c0_i32_42 : i32
    %83 = arith.extui %82 : i1 to i32
    %84 = arith.sitofp %83 : i32 to f32
    %85 = vector.broadcast %84 : f32 to vector<2x32xf32>
    %86 = arith.mulf %46, %85 : vector<2x32xf32>
    %87 = vector.broadcast %84 : f32 to vector<2x64xf32>
    %88 = arith.mulf %79, %87 : vector<2x64xf32>
    %c0_43 = arith.constant 0 : index
    %c0_44 = arith.constant 0 : index
    %89 = vector.load %arg8[%c0_43, %c0_44] : memref<32x32xf32, #tpu.memory_space<vmem>>, vector<32x32xf32>
    %cst_45 = arith.constant dense<0.000000e+00> : vector<2x32xf32>
    %90 = tpu.matmul %48, %89, %cst_45 {dimension_numbers = #tpu.dot_dimension_numbers<[1], [0], [0], [1], [0, 0, 1, 1], [], []>} : vector<2x32xf32>, vector<32x32xf32>, vector<2x32xf32> -> vector<2x32xf32>
    %c0_46 = arith.constant 0 : index
    %c0_47 = arith.constant 0 : index
    %91 = vector.load %arg9[%c0_46, %c0_47] : memref<1x32xf32, #tpu.memory_space<vmem>>, vector<1x32xf32>
    %92 = vector.broadcast %91 : vector<1x32xf32> to vector<2x32xf32>
    %93 = arith.addf %90, %92 : vector<2x32xf32>
    %c0_48 = arith.constant 0 : index
    %c0_49 = arith.constant 0 : index
    %94 = vector.load %arg10[%c0_48, %c0_49] : memref<64x64xf32, #tpu.memory_space<vmem>>, vector<64x64xf32>
    %cst_50 = arith.constant dense<0.000000e+00> : vector<2x64xf32>
    %95 = tpu.matmul %81, %94, %cst_50 {dimension_numbers = #tpu.dot_dimension_numbers<[1], [0], [0], [1], [0, 0, 1, 1], [], []>} : vector<2x64xf32>, vector<64x64xf32>, vector<2x64xf32> -> vector<2x64xf32>
    %c0_51 = arith.constant 0 : index
    %c0_52 = arith.constant 0 : index
    %96 = vector.load %arg11[%c0_51, %c0_52] : memref<1x64xf32, #tpu.memory_space<vmem>>, vector<1x64xf32>
    %97 = vector.broadcast %96 : vector<1x64xf32> to vector<2x64xf32>
    %98 = arith.addf %95, %97 : vector<2x64xf32>
    %c0_53 = arith.constant 0 : index
    %c0_54 = arith.constant 0 : index
    %99 = vector.load %arg12[%c0_53, %c0_54] : memref<64x64xf32, #tpu.memory_space<vmem>>, vector<64x64xf32>
    %cst_55 = arith.constant dense<0.000000e+00> : vector<2x64xf32>
    %100 = tpu.matmul %81, %99, %cst_55 {dimension_numbers = #tpu.dot_dimension_numbers<[1], [0], [0], [1], [0, 0, 1, 1], [], []>} : vector<2x64xf32>, vector<64x64xf32>, vector<2x64xf32> -> vector<2x64xf32>
    %c0_56 = arith.constant 0 : index
    %c0_57 = arith.constant 0 : index
    %101 = vector.load %arg13[%c0_56, %c0_57] : memref<1x64xf32, #tpu.memory_space<vmem>>, vector<1x64xf32>
    %102 = vector.broadcast %101 : vector<1x64xf32> to vector<2x64xf32>
    %103 = arith.addf %100, %102 : vector<2x64xf32>
    %104 = vector.extract_strided_slice %98 {offsets = [0, 0], sizes = [2, 32], strides = [1, 1]} : vector<2x64xf32> to vector<2x32xf32>
    %105 = arith.mulf %93, %104 : vector<2x32xf32>
    %cst_58 = arith.constant dense<0.000000e+00> : vector<2xf32>
    %106 = vector.multi_reduction <add>, %105, %cst_58 [1] : vector<2x32xf32> to vector<2xf32>
    %107 = vector.shape_cast %106 : vector<2xf32> to vector<2x1xf32>
    %cst_59 = arith.constant 0.176776692 : f32
    %108 = vector.broadcast %cst_59 : f32 to vector<2x1xf32>
    %109 = arith.mulf %107, %108 : vector<2x1xf32>
    %110 = vector.extract_strided_slice %98 {offsets = [0, 32], sizes = [2, 32], strides = [1, 1]} : vector<2x64xf32> to vector<2x32xf32>
    %111 = arith.mulf %93, %110 : vector<2x32xf32>
    %cst_60 = arith.constant dense<0.000000e+00> : vector<2xf32>
    %112 = vector.multi_reduction <add>, %111, %cst_60 [1] : vector<2x32xf32> to vector<2xf32>
    %113 = vector.shape_cast %112 : vector<2xf32> to vector<2x1xf32>
    %cst_61 = arith.constant 0.176776692 : f32
    %114 = vector.broadcast %cst_61 : f32 to vector<2x1xf32>
    %115 = arith.mulf %113, %114 : vector<2x1xf32>
    %116 = arith.maximumf %109, %115 : vector<2x1xf32>
    %117 = arith.subf %109, %116 : vector<2x1xf32>
    %118 = math.exp %117 : vector<2x1xf32>
    %119 = arith.subf %115, %116 : vector<2x1xf32>
    %120 = math.exp %119 : vector<2x1xf32>
    %121 = arith.addf %118, %120 : vector<2x1xf32>
    %122 = vector.extract_strided_slice %103 {offsets = [0, 0], sizes = [2, 32], strides = [1, 1]} : vector<2x64xf32> to vector<2x32xf32>
    %123 = vector.broadcast %118 : vector<2x1xf32> to vector<2x32xf32>
    %124 = arith.mulf %123, %122 : vector<2x32xf32>
    %125 = vector.extract_strided_slice %103 {offsets = [0, 32], sizes = [2, 32], strides = [1, 1]} : vector<2x64xf32> to vector<2x32xf32>
    %126 = vector.broadcast %120 : vector<2x1xf32> to vector<2x32xf32>
    %127 = arith.mulf %126, %125 : vector<2x32xf32>
    %128 = arith.addf %124, %127 : vector<2x32xf32>
    %129 = vector.broadcast %121 : vector<2x1xf32> to vector<2x32xf32>
    %130 = arith.divf %128, %129 : vector<2x32xf32>
    %c0_62 = arith.constant 0 : index
    %c0_63 = arith.constant 0 : index
    %131 = vector.load %arg14[%c0_62, %c0_63] : memref<32x32xf32, #tpu.memory_space<vmem>>, vector<32x32xf32>
    %cst_64 = arith.constant dense<0.000000e+00> : vector<2x32xf32>
    %132 = tpu.matmul %130, %131, %cst_64 {dimension_numbers = #tpu.dot_dimension_numbers<[1], [0], [0], [1], [0, 0, 1, 1], [], []>} : vector<2x32xf32>, vector<32x32xf32>, vector<2x32xf32> -> vector<2x32xf32>
    %c0_65 = arith.constant 0 : index
    %c0_66 = arith.constant 0 : index
    %133 = vector.load %arg15[%c0_65, %c0_66] : memref<32x32xf32, #tpu.memory_space<vmem>>, vector<32x32xf32>
    %cst_67 = arith.constant dense<0.000000e+00> : vector<2x32xf32>
    %134 = tpu.matmul %48, %133, %cst_67 {dimension_numbers = #tpu.dot_dimension_numbers<[1], [0], [0], [1], [0, 0, 1, 1], [], []>} : vector<2x32xf32>, vector<32x32xf32>, vector<2x32xf32> -> vector<2x32xf32>
    %135 = arith.addf %132, %134 : vector<2x32xf32>
    %c0_68 = arith.constant 0 : index
    %c0_69 = arith.constant 0 : index
    %136 = vector.load %arg16[%c0_68, %c0_69] : memref<1x32xf32, #tpu.memory_space<vmem>>, vector<1x32xf32>
    %137 = vector.broadcast %136 : vector<1x32xf32> to vector<2x32xf32>
    %138 = arith.addf %135, %137 : vector<2x32xf32>
    %cst_70 = arith.constant 0.000000e+00 : f32
    %139 = vector.broadcast %cst_70 : f32 to vector<2x32xf32>
    %140 = arith.maximumf %138, %139 : vector<2x32xf32>
    %c0_71 = arith.constant 0 : index
    %c0_72 = arith.constant 0 : index
    %141 = vector.load %arg17[%c0_71, %c0_72] : memref<64x64xf32, #tpu.memory_space<vmem>>, vector<64x64xf32>
    %cst_73 = arith.constant dense<0.000000e+00> : vector<2x64xf32>
    %142 = tpu.matmul %81, %141, %cst_73 {dimension_numbers = #tpu.dot_dimension_numbers<[1], [0], [0], [1], [0, 0, 1, 1], [], []>} : vector<2x64xf32>, vector<64x64xf32>, vector<2x64xf32> -> vector<2x64xf32>
    %c0_74 = arith.constant 0 : index
    %c0_75 = arith.constant 0 : index
    %143 = vector.load %arg18[%c0_74, %c0_75] : memref<32x64xf32, #tpu.memory_space<vmem>>, vector<32x64xf32>
    %cst_76 = arith.constant dense<0.000000e+00> : vector<2x64xf32>
    %144 = tpu.matmul %48, %143, %cst_76 {dimension_numbers = #tpu.dot_dimension_numbers<[1], [0], [0], [1], [0, 0, 1, 1], [], []>} : vector<2x32xf32>, vector<32x64xf32>, vector<2x64xf32> -> vector<2x64xf32>
    %145 = arith.addf %142, %144 : vector<2x64xf32>
    %c0_77 = arith.constant 0 : index
    %c0_78 = arith.constant 0 : index
    %146 = vector.load %arg19[%c0_77, %c0_78] : memref<1x64xf32, #tpu.memory_space<vmem>>, vector<1x64xf32>
    %147 = vector.broadcast %146 : vector<1x64xf32> to vector<2x64xf32>
    %148 = arith.addf %145, %147 : vector<2x64xf32>
    %cst_79 = arith.constant 0.000000e+00 : f32
    %149 = vector.broadcast %cst_79 : f32 to vector<2x64xf32>
    %150 = arith.maximumf %148, %149 : vector<2x64xf32>
    %c1_i32 = arith.constant 1 : i32
    %151 = arith.index_cast %c1_i32 : i32 to index
    %c0_80 = arith.constant 0 : index
    %c0_81 = arith.constant 0 : index
    %152 = vector.load %arg25[%151, %c0_80, %c0_81] : memref<4x2x128xf32, #tpu.memory_space<vmem>>, vector<1x2x128xf32>
    %153 = vector.shape_cast %152 : vector<1x2x128xf32> to vector<2x128xf32>
    %154 = arith.index_cast %c1_i32 : i32 to index
    %c0_82 = arith.constant 0 : index
    %c0_83 = arith.constant 0 : index
    %155 = vector.load %arg6[%154, %c0_82, %c0_83] : memref<4x32x128xf32, #tpu.memory_space<vmem>>, vector<1x32x128xf32>
    %156 = vector.shape_cast %155 : vector<1x32x128xf32> to vector<32x128xf32>
    %cst_84 = arith.constant dense<0.000000e+00> : vector<2x128xf32>
    %157 = tpu.matmul %140, %156, %cst_84 {dimension_numbers = #tpu.dot_dimension_numbers<[1], [0], [0], [1], [0, 0, 1, 1], [], []>} : vector<2x32xf32>, vector<32x128xf32>, vector<2x128xf32> -> vector<2x128xf32>
    %158 = arith.addf %153, %157 : vector<2x128xf32>
    %159 = vector.extract_strided_slice %158 {offsets = [0, 0], sizes = [2, 32], strides = [1, 1]} : vector<2x128xf32> to vector<2x32xf32>
    %160 = arith.negf %159 : vector<2x32xf32>
    %161 = math.exp %160 : vector<2x32xf32>
    %cst_85 = arith.constant 1.000000e+00 : f32
    %162 = vector.broadcast %cst_85 : f32 to vector<2x32xf32>
    %163 = arith.addf %162, %161 : vector<2x32xf32>
    %164 = arith.divf %162, %163 : vector<2x32xf32>
    %165 = vector.extract_strided_slice %158 {offsets = [0, 32], sizes = [2, 32], strides = [1, 1]} : vector<2x128xf32> to vector<2x32xf32>
    %166 = arith.negf %165 : vector<2x32xf32>
    %167 = math.exp %166 : vector<2x32xf32>
    %cst_86 = arith.constant 1.000000e+00 : f32
    %168 = vector.broadcast %cst_86 : f32 to vector<2x32xf32>
    %169 = arith.addf %168, %167 : vector<2x32xf32>
    %170 = arith.divf %168, %169 : vector<2x32xf32>
    %171 = vector.extract_strided_slice %158 {offsets = [0, 64], sizes = [2, 32], strides = [1, 1]} : vector<2x128xf32> to vector<2x32xf32>
    %172 = math.tanh %171 : vector<2x32xf32>
    %173 = vector.extract_strided_slice %158 {offsets = [0, 96], sizes = [2, 32], strides = [1, 1]} : vector<2x128xf32> to vector<2x32xf32>
    %174 = arith.negf %173 : vector<2x32xf32>
    %175 = math.exp %174 : vector<2x32xf32>
    %cst_87 = arith.constant 1.000000e+00 : f32
    %176 = vector.broadcast %cst_87 : f32 to vector<2x32xf32>
    %177 = arith.addf %176, %175 : vector<2x32xf32>
    %178 = arith.divf %176, %177 : vector<2x32xf32>
    %179 = arith.mulf %170, %86 : vector<2x32xf32>
    %180 = arith.mulf %164, %172 : vector<2x32xf32>
    %181 = arith.addf %179, %180 : vector<2x32xf32>
    %182 = math.tanh %181 : vector<2x32xf32>
    %183 = arith.mulf %178, %182 : vector<2x32xf32>
    %184 = arith.index_cast %c1_i32 : i32 to index
    %c0_88 = arith.constant 0 : index
    %c0_89 = arith.constant 0 : index
    %185 = vector.load %arg26[%184, %c0_88, %c0_89] : memref<4x2x256xf32, #tpu.memory_space<vmem>>, vector<1x2x256xf32>
    %186 = vector.shape_cast %185 : vector<1x2x256xf32> to vector<2x256xf32>
    %187 = arith.index_cast %c1_i32 : i32 to index
    %c0_90 = arith.constant 0 : index
    %c0_91 = arith.constant 0 : index
    %188 = vector.load %arg7[%187, %c0_90, %c0_91] : memref<4x64x256xf32, #tpu.memory_space<vmem>>, vector<1x64x256xf32>
    %189 = vector.shape_cast %188 : vector<1x64x256xf32> to vector<64x256xf32>
    %cst_92 = arith.constant dense<0.000000e+00> : vector<2x256xf32>
    %190 = tpu.matmul %150, %189, %cst_92 {dimension_numbers = #tpu.dot_dimension_numbers<[1], [0], [0], [1], [0, 0, 1, 1], [], []>} : vector<2x64xf32>, vector<64x256xf32>, vector<2x256xf32> -> vector<2x256xf32>
    %191 = arith.addf %186, %190 : vector<2x256xf32>
    %192 = vector.extract_strided_slice %191 {offsets = [0, 0], sizes = [2, 64], strides = [1, 1]} : vector<2x256xf32> to vector<2x64xf32>
    %193 = arith.negf %192 : vector<2x64xf32>
    %194 = math.exp %193 : vector<2x64xf32>
    %cst_93 = arith.constant 1.000000e+00 : f32
    %195 = vector.broadcast %cst_93 : f32 to vector<2x64xf32>
    %196 = arith.addf %195, %194 : vector<2x64xf32>
    %197 = arith.divf %195, %196 : vector<2x64xf32>
    %198 = vector.extract_strided_slice %191 {offsets = [0, 64], sizes = [2, 64], strides = [1, 1]} : vector<2x256xf32> to vector<2x64xf32>
    %199 = arith.negf %198 : vector<2x64xf32>
    %200 = math.exp %199 : vector<2x64xf32>
    %cst_94 = arith.constant 1.000000e+00 : f32
    %201 = vector.broadcast %cst_94 : f32 to vector<2x64xf32>
    %202 = arith.addf %201, %200 : vector<2x64xf32>
    %203 = arith.divf %201, %202 : vector<2x64xf32>
    %204 = vector.extract_strided_slice %191 {offsets = [0, 128], sizes = [2, 64], strides = [1, 1]} : vector<2x256xf32> to vector<2x64xf32>
    %205 = math.tanh %204 : vector<2x64xf32>
    %206 = vector.extract_strided_slice %191 {offsets = [0, 192], sizes = [2, 64], strides = [1, 1]} : vector<2x256xf32> to vector<2x64xf32>
    %207 = arith.negf %206 : vector<2x64xf32>
    %208 = math.exp %207 : vector<2x64xf32>
    %cst_95 = arith.constant 1.000000e+00 : f32
    %209 = vector.broadcast %cst_95 : f32 to vector<2x64xf32>
    %210 = arith.addf %209, %208 : vector<2x64xf32>
    %211 = arith.divf %209, %210 : vector<2x64xf32>
    %212 = arith.mulf %203, %88 : vector<2x64xf32>
    %213 = arith.mulf %197, %205 : vector<2x64xf32>
    %214 = arith.addf %212, %213 : vector<2x64xf32>
    %215 = math.tanh %214 : vector<2x64xf32>
    %216 = arith.mulf %211, %215 : vector<2x64xf32>
    %c0_i32_96 = arith.constant 0 : i32
    %217 = arith.cmpi sgt, %c1_i32, %c0_i32_96 : i32
    %218 = arith.extui %217 : i1 to i32
    %219 = arith.sitofp %218 : i32 to f32
    %220 = vector.broadcast %219 : f32 to vector<2x32xf32>
    %221 = arith.mulf %181, %220 : vector<2x32xf32>
    %222 = vector.broadcast %219 : f32 to vector<2x64xf32>
    %223 = arith.mulf %214, %222 : vector<2x64xf32>
    %c0_97 = arith.constant 0 : index
    %c0_98 = arith.constant 0 : index
    %224 = vector.load %arg8[%c0_97, %c0_98] : memref<32x32xf32, #tpu.memory_space<vmem>>, vector<32x32xf32>
    %cst_99 = arith.constant dense<0.000000e+00> : vector<2x32xf32>
    %225 = tpu.matmul %183, %224, %cst_99 {dimension_numbers = #tpu.dot_dimension_numbers<[1], [0], [0], [1], [0, 0, 1, 1], [], []>} : vector<2x32xf32>, vector<32x32xf32>, vector<2x32xf32> -> vector<2x32xf32>
    %c0_100 = arith.constant 0 : index
    %c0_101 = arith.constant 0 : index
    %226 = vector.load %arg9[%c0_100, %c0_101] : memref<1x32xf32, #tpu.memory_space<vmem>>, vector<1x32xf32>
    %227 = vector.broadcast %226 : vector<1x32xf32> to vector<2x32xf32>
    %228 = arith.addf %225, %227 : vector<2x32xf32>
    %c0_102 = arith.constant 0 : index
    %c0_103 = arith.constant 0 : index
    %229 = vector.load %arg10[%c0_102, %c0_103] : memref<64x64xf32, #tpu.memory_space<vmem>>, vector<64x64xf32>
    %cst_104 = arith.constant dense<0.000000e+00> : vector<2x64xf32>
    %230 = tpu.matmul %216, %229, %cst_104 {dimension_numbers = #tpu.dot_dimension_numbers<[1], [0], [0], [1], [0, 0, 1, 1], [], []>} : vector<2x64xf32>, vector<64x64xf32>, vector<2x64xf32> -> vector<2x64xf32>
    %c0_105 = arith.constant 0 : index
    %c0_106 = arith.constant 0 : index
    %231 = vector.load %arg11[%c0_105, %c0_106] : memref<1x64xf32, #tpu.memory_space<vmem>>, vector<1x64xf32>
    %232 = vector.broadcast %231 : vector<1x64xf32> to vector<2x64xf32>
    %233 = arith.addf %230, %232 : vector<2x64xf32>
    %c0_107 = arith.constant 0 : index
    %c0_108 = arith.constant 0 : index
    %234 = vector.load %arg12[%c0_107, %c0_108] : memref<64x64xf32, #tpu.memory_space<vmem>>, vector<64x64xf32>
    %cst_109 = arith.constant dense<0.000000e+00> : vector<2x64xf32>
    %235 = tpu.matmul %216, %234, %cst_109 {dimension_numbers = #tpu.dot_dimension_numbers<[1], [0], [0], [1], [0, 0, 1, 1], [], []>} : vector<2x64xf32>, vector<64x64xf32>, vector<2x64xf32> -> vector<2x64xf32>
    %c0_110 = arith.constant 0 : index
    %c0_111 = arith.constant 0 : index
    %236 = vector.load %arg13[%c0_110, %c0_111] : memref<1x64xf32, #tpu.memory_space<vmem>>, vector<1x64xf32>
    %237 = vector.broadcast %236 : vector<1x64xf32> to vector<2x64xf32>
    %238 = arith.addf %235, %237 : vector<2x64xf32>
    %239 = vector.extract_strided_slice %233 {offsets = [0, 0], sizes = [2, 32], strides = [1, 1]} : vector<2x64xf32> to vector<2x32xf32>
    %240 = arith.mulf %228, %239 : vector<2x32xf32>
    %cst_112 = arith.constant dense<0.000000e+00> : vector<2xf32>
    %241 = vector.multi_reduction <add>, %240, %cst_112 [1] : vector<2x32xf32> to vector<2xf32>
    %242 = vector.shape_cast %241 : vector<2xf32> to vector<2x1xf32>
    %cst_113 = arith.constant 0.176776692 : f32
    %243 = vector.broadcast %cst_113 : f32 to vector<2x1xf32>
    %244 = arith.mulf %242, %243 : vector<2x1xf32>
    %245 = vector.extract_strided_slice %233 {offsets = [0, 32], sizes = [2, 32], strides = [1, 1]} : vector<2x64xf32> to vector<2x32xf32>
    %246 = arith.mulf %228, %245 : vector<2x32xf32>
    %cst_114 = arith.constant dense<0.000000e+00> : vector<2xf32>
    %247 = vector.multi_reduction <add>, %246, %cst_114 [1] : vector<2x32xf32> to vector<2xf32>
    %248 = vector.shape_cast %247 : vector<2xf32> to vector<2x1xf32>
    %cst_115 = arith.constant 0.176776692 : f32
    %249 = vector.broadcast %cst_115 : f32 to vector<2x1xf32>
    %250 = arith.mulf %248, %249 : vector<2x1xf32>
    %251 = arith.maximumf %244, %250 : vector<2x1xf32>
    %252 = arith.subf %244, %251 : vector<2x1xf32>
    %253 = math.exp %252 : vector<2x1xf32>
    %254 = arith.subf %250, %251 : vector<2x1xf32>
    %255 = math.exp %254 : vector<2x1xf32>
    %256 = arith.addf %253, %255 : vector<2x1xf32>
    %257 = vector.extract_strided_slice %238 {offsets = [0, 0], sizes = [2, 32], strides = [1, 1]} : vector<2x64xf32> to vector<2x32xf32>
    %258 = vector.broadcast %253 : vector<2x1xf32> to vector<2x32xf32>
    %259 = arith.mulf %258, %257 : vector<2x32xf32>
    %260 = vector.extract_strided_slice %238 {offsets = [0, 32], sizes = [2, 32], strides = [1, 1]} : vector<2x64xf32> to vector<2x32xf32>
    %261 = vector.broadcast %255 : vector<2x1xf32> to vector<2x32xf32>
    %262 = arith.mulf %261, %260 : vector<2x32xf32>
    %263 = arith.addf %259, %262 : vector<2x32xf32>
    %264 = vector.broadcast %256 : vector<2x1xf32> to vector<2x32xf32>
    %265 = arith.divf %263, %264 : vector<2x32xf32>
    %c0_116 = arith.constant 0 : index
    %c0_117 = arith.constant 0 : index
    %266 = vector.load %arg14[%c0_116, %c0_117] : memref<32x32xf32, #tpu.memory_space<vmem>>, vector<32x32xf32>
    %cst_118 = arith.constant dense<0.000000e+00> : vector<2x32xf32>
    %267 = tpu.matmul %265, %266, %cst_118 {dimension_numbers = #tpu.dot_dimension_numbers<[1], [0], [0], [1], [0, 0, 1, 1], [], []>} : vector<2x32xf32>, vector<32x32xf32>, vector<2x32xf32> -> vector<2x32xf32>
    %c0_119 = arith.constant 0 : index
    %c0_120 = arith.constant 0 : index
    %268 = vector.load %arg15[%c0_119, %c0_120] : memref<32x32xf32, #tpu.memory_space<vmem>>, vector<32x32xf32>
    %cst_121 = arith.constant dense<0.000000e+00> : vector<2x32xf32>
    %269 = tpu.matmul %183, %268, %cst_121 {dimension_numbers = #tpu.dot_dimension_numbers<[1], [0], [0], [1], [0, 0, 1, 1], [], []>} : vector<2x32xf32>, vector<32x32xf32>, vector<2x32xf32> -> vector<2x32xf32>
    %270 = arith.addf %267, %269 : vector<2x32xf32>
    %c0_122 = arith.constant 0 : index
    %c0_123 = arith.constant 0 : index
    %271 = vector.load %arg16[%c0_122, %c0_123] : memref<1x32xf32, #tpu.memory_space<vmem>>, vector<1x32xf32>
    %272 = vector.broadcast %271 : vector<1x32xf32> to vector<2x32xf32>
    %273 = arith.addf %270, %272 : vector<2x32xf32>
    %cst_124 = arith.constant 0.000000e+00 : f32
    %274 = vector.broadcast %cst_124 : f32 to vector<2x32xf32>
    %275 = arith.maximumf %273, %274 : vector<2x32xf32>
    %c0_125 = arith.constant 0 : index
    %c0_126 = arith.constant 0 : index
    %276 = vector.load %arg17[%c0_125, %c0_126] : memref<64x64xf32, #tpu.memory_space<vmem>>, vector<64x64xf32>
    %cst_127 = arith.constant dense<0.000000e+00> : vector<2x64xf32>
    %277 = tpu.matmul %216, %276, %cst_127 {dimension_numbers = #tpu.dot_dimension_numbers<[1], [0], [0], [1], [0, 0, 1, 1], [], []>} : vector<2x64xf32>, vector<64x64xf32>, vector<2x64xf32> -> vector<2x64xf32>
    %c0_128 = arith.constant 0 : index
    %c0_129 = arith.constant 0 : index
    %278 = vector.load %arg18[%c0_128, %c0_129] : memref<32x64xf32, #tpu.memory_space<vmem>>, vector<32x64xf32>
    %cst_130 = arith.constant dense<0.000000e+00> : vector<2x64xf32>
    %279 = tpu.matmul %183, %278, %cst_130 {dimension_numbers = #tpu.dot_dimension_numbers<[1], [0], [0], [1], [0, 0, 1, 1], [], []>} : vector<2x32xf32>, vector<32x64xf32>, vector<2x64xf32> -> vector<2x64xf32>
    %280 = arith.addf %277, %279 : vector<2x64xf32>
    %c0_131 = arith.constant 0 : index
    %c0_132 = arith.constant 0 : index
    %281 = vector.load %arg19[%c0_131, %c0_132] : memref<1x64xf32, #tpu.memory_space<vmem>>, vector<1x64xf32>
    %282 = vector.broadcast %281 : vector<1x64xf32> to vector<2x64xf32>
    %283 = arith.addf %280, %282 : vector<2x64xf32>
    %cst_133 = arith.constant 0.000000e+00 : f32
    %284 = vector.broadcast %cst_133 : f32 to vector<2x64xf32>
    %285 = arith.maximumf %283, %284 : vector<2x64xf32>
    %c2_i32 = arith.constant 2 : i32
    %286 = arith.index_cast %c2_i32 : i32 to index
    %c0_134 = arith.constant 0 : index
    %c0_135 = arith.constant 0 : index
    %287 = vector.load %arg25[%286, %c0_134, %c0_135] : memref<4x2x128xf32, #tpu.memory_space<vmem>>, vector<1x2x128xf32>
    %288 = vector.shape_cast %287 : vector<1x2x128xf32> to vector<2x128xf32>
    %289 = arith.index_cast %c2_i32 : i32 to index
    %c0_136 = arith.constant 0 : index
    %c0_137 = arith.constant 0 : index
    %290 = vector.load %arg6[%289, %c0_136, %c0_137] : memref<4x32x128xf32, #tpu.memory_space<vmem>>, vector<1x32x128xf32>
    %291 = vector.shape_cast %290 : vector<1x32x128xf32> to vector<32x128xf32>
    %cst_138 = arith.constant dense<0.000000e+00> : vector<2x128xf32>
    %292 = tpu.matmul %275, %291, %cst_138 {dimension_numbers = #tpu.dot_dimension_numbers<[1], [0], [0], [1], [0, 0, 1, 1], [], []>} : vector<2x32xf32>, vector<32x128xf32>, vector<2x128xf32> -> vector<2x128xf32>
    %293 = arith.addf %288, %292 : vector<2x128xf32>
    %294 = vector.extract_strided_slice %293 {offsets = [0, 0], sizes = [2, 32], strides = [1, 1]} : vector<2x128xf32> to vector<2x32xf32>
    %295 = arith.negf %294 : vector<2x32xf32>
    %296 = math.exp %295 : vector<2x32xf32>
    %cst_139 = arith.constant 1.000000e+00 : f32
    %297 = vector.broadcast %cst_139 : f32 to vector<2x32xf32>
    %298 = arith.addf %297, %296 : vector<2x32xf32>
    %299 = arith.divf %297, %298 : vector<2x32xf32>
    %300 = vector.extract_strided_slice %293 {offsets = [0, 32], sizes = [2, 32], strides = [1, 1]} : vector<2x128xf32> to vector<2x32xf32>
    %301 = arith.negf %300 : vector<2x32xf32>
    %302 = math.exp %301 : vector<2x32xf32>
    %cst_140 = arith.constant 1.000000e+00 : f32
    %303 = vector.broadcast %cst_140 : f32 to vector<2x32xf32>
    %304 = arith.addf %303, %302 : vector<2x32xf32>
    %305 = arith.divf %303, %304 : vector<2x32xf32>
    %306 = vector.extract_strided_slice %293 {offsets = [0, 64], sizes = [2, 32], strides = [1, 1]} : vector<2x128xf32> to vector<2x32xf32>
    %307 = math.tanh %306 : vector<2x32xf32>
    %308 = vector.extract_strided_slice %293 {offsets = [0, 96], sizes = [2, 32], strides = [1, 1]} : vector<2x128xf32> to vector<2x32xf32>
    %309 = arith.negf %308 : vector<2x32xf32>
    %310 = math.exp %309 : vector<2x32xf32>
    %cst_141 = arith.constant 1.000000e+00 : f32
    %311 = vector.broadcast %cst_141 : f32 to vector<2x32xf32>
    %312 = arith.addf %311, %310 : vector<2x32xf32>
    %313 = arith.divf %311, %312 : vector<2x32xf32>
    %314 = arith.mulf %305, %221 : vector<2x32xf32>
    %315 = arith.mulf %299, %307 : vector<2x32xf32>
    %316 = arith.addf %314, %315 : vector<2x32xf32>
    %317 = math.tanh %316 : vector<2x32xf32>
    %318 = arith.mulf %313, %317 : vector<2x32xf32>
    %319 = arith.index_cast %c2_i32 : i32 to index
    %c0_142 = arith.constant 0 : index
    %c0_143 = arith.constant 0 : index
    %320 = vector.load %arg26[%319, %c0_142, %c0_143] : memref<4x2x256xf32, #tpu.memory_space<vmem>>, vector<1x2x256xf32>
    %321 = vector.shape_cast %320 : vector<1x2x256xf32> to vector<2x256xf32>
    %322 = arith.index_cast %c2_i32 : i32 to index
    %c0_144 = arith.constant 0 : index
    %c0_145 = arith.constant 0 : index
    %323 = vector.load %arg7[%322, %c0_144, %c0_145] : memref<4x64x256xf32, #tpu.memory_space<vmem>>, vector<1x64x256xf32>
    %324 = vector.shape_cast %323 : vector<1x64x256xf32> to vector<64x256xf32>
    %cst_146 = arith.constant dense<0.000000e+00> : vector<2x256xf32>
    %325 = tpu.matmul %285, %324, %cst_146 {dimension_numbers = #tpu.dot_dimension_numbers<[1], [0], [0], [1], [0, 0, 1, 1], [], []>} : vector<2x64xf32>, vector<64x256xf32>, vector<2x256xf32> -> vector<2x256xf32>
    %326 = arith.addf %321, %325 : vector<2x256xf32>
    %327 = vector.extract_strided_slice %326 {offsets = [0, 0], sizes = [2, 64], strides = [1, 1]} : vector<2x256xf32> to vector<2x64xf32>
    %328 = arith.negf %327 : vector<2x64xf32>
    %329 = math.exp %328 : vector<2x64xf32>
    %cst_147 = arith.constant 1.000000e+00 : f32
    %330 = vector.broadcast %cst_147 : f32 to vector<2x64xf32>
    %331 = arith.addf %330, %329 : vector<2x64xf32>
    %332 = arith.divf %330, %331 : vector<2x64xf32>
    %333 = vector.extract_strided_slice %326 {offsets = [0, 64], sizes = [2, 64], strides = [1, 1]} : vector<2x256xf32> to vector<2x64xf32>
    %334 = arith.negf %333 : vector<2x64xf32>
    %335 = math.exp %334 : vector<2x64xf32>
    %cst_148 = arith.constant 1.000000e+00 : f32
    %336 = vector.broadcast %cst_148 : f32 to vector<2x64xf32>
    %337 = arith.addf %336, %335 : vector<2x64xf32>
    %338 = arith.divf %336, %337 : vector<2x64xf32>
    %339 = vector.extract_strided_slice %326 {offsets = [0, 128], sizes = [2, 64], strides = [1, 1]} : vector<2x256xf32> to vector<2x64xf32>
    %340 = math.tanh %339 : vector<2x64xf32>
    %341 = vector.extract_strided_slice %326 {offsets = [0, 192], sizes = [2, 64], strides = [1, 1]} : vector<2x256xf32> to vector<2x64xf32>
    %342 = arith.negf %341 : vector<2x64xf32>
    %343 = math.exp %342 : vector<2x64xf32>
    %cst_149 = arith.constant 1.000000e+00 : f32
    %344 = vector.broadcast %cst_149 : f32 to vector<2x64xf32>
    %345 = arith.addf %344, %343 : vector<2x64xf32>
    %346 = arith.divf %344, %345 : vector<2x64xf32>
    %347 = arith.mulf %338, %223 : vector<2x64xf32>
    %348 = arith.mulf %332, %340 : vector<2x64xf32>
    %349 = arith.addf %347, %348 : vector<2x64xf32>
    %350 = math.tanh %349 : vector<2x64xf32>
    %351 = arith.mulf %346, %350 : vector<2x64xf32>
    %c0_i32_150 = arith.constant 0 : i32
    %352 = arith.cmpi sgt, %c2_i32, %c0_i32_150 : i32
    %353 = arith.extui %352 : i1 to i32
    %354 = arith.sitofp %353 : i32 to f32
    %355 = vector.broadcast %354 : f32 to vector<2x32xf32>
    %356 = arith.mulf %316, %355 : vector<2x32xf32>
    %357 = vector.broadcast %354 : f32 to vector<2x64xf32>
    %358 = arith.mulf %349, %357 : vector<2x64xf32>
    %c0_151 = arith.constant 0 : index
    %c0_152 = arith.constant 0 : index
    %359 = vector.load %arg8[%c0_151, %c0_152] : memref<32x32xf32, #tpu.memory_space<vmem>>, vector<32x32xf32>
    %cst_153 = arith.constant dense<0.000000e+00> : vector<2x32xf32>
    %360 = tpu.matmul %318, %359, %cst_153 {dimension_numbers = #tpu.dot_dimension_numbers<[1], [0], [0], [1], [0, 0, 1, 1], [], []>} : vector<2x32xf32>, vector<32x32xf32>, vector<2x32xf32> -> vector<2x32xf32>
    %c0_154 = arith.constant 0 : index
    %c0_155 = arith.constant 0 : index
    %361 = vector.load %arg9[%c0_154, %c0_155] : memref<1x32xf32, #tpu.memory_space<vmem>>, vector<1x32xf32>
    %362 = vector.broadcast %361 : vector<1x32xf32> to vector<2x32xf32>
    %363 = arith.addf %360, %362 : vector<2x32xf32>
    %c0_156 = arith.constant 0 : index
    %c0_157 = arith.constant 0 : index
    %364 = vector.load %arg10[%c0_156, %c0_157] : memref<64x64xf32, #tpu.memory_space<vmem>>, vector<64x64xf32>
    %cst_158 = arith.constant dense<0.000000e+00> : vector<2x64xf32>
    %365 = tpu.matmul %351, %364, %cst_158 {dimension_numbers = #tpu.dot_dimension_numbers<[1], [0], [0], [1], [0, 0, 1, 1], [], []>} : vector<2x64xf32>, vector<64x64xf32>, vector<2x64xf32> -> vector<2x64xf32>
    %c0_159 = arith.constant 0 : index
    %c0_160 = arith.constant 0 : index
    %366 = vector.load %arg11[%c0_159, %c0_160] : memref<1x64xf32, #tpu.memory_space<vmem>>, vector<1x64xf32>
    %367 = vector.broadcast %366 : vector<1x64xf32> to vector<2x64xf32>
    %368 = arith.addf %365, %367 : vector<2x64xf32>
    %c0_161 = arith.constant 0 : index
    %c0_162 = arith.constant 0 : index
    %369 = vector.load %arg12[%c0_161, %c0_162] : memref<64x64xf32, #tpu.memory_space<vmem>>, vector<64x64xf32>
    %cst_163 = arith.constant dense<0.000000e+00> : vector<2x64xf32>
    %370 = tpu.matmul %351, %369, %cst_163 {dimension_numbers = #tpu.dot_dimension_numbers<[1], [0], [0], [1], [0, 0, 1, 1], [], []>} : vector<2x64xf32>, vector<64x64xf32>, vector<2x64xf32> -> vector<2x64xf32>
    %c0_164 = arith.constant 0 : index
    %c0_165 = arith.constant 0 : index
    %371 = vector.load %arg13[%c0_164, %c0_165] : memref<1x64xf32, #tpu.memory_space<vmem>>, vector<1x64xf32>
    %372 = vector.broadcast %371 : vector<1x64xf32> to vector<2x64xf32>
    %373 = arith.addf %370, %372 : vector<2x64xf32>
    %374 = vector.extract_strided_slice %368 {offsets = [0, 0], sizes = [2, 32], strides = [1, 1]} : vector<2x64xf32> to vector<2x32xf32>
    %375 = arith.mulf %363, %374 : vector<2x32xf32>
    %cst_166 = arith.constant dense<0.000000e+00> : vector<2xf32>
    %376 = vector.multi_reduction <add>, %375, %cst_166 [1] : vector<2x32xf32> to vector<2xf32>
    %377 = vector.shape_cast %376 : vector<2xf32> to vector<2x1xf32>
    %cst_167 = arith.constant 0.176776692 : f32
    %378 = vector.broadcast %cst_167 : f32 to vector<2x1xf32>
    %379 = arith.mulf %377, %378 : vector<2x1xf32>
    %380 = vector.extract_strided_slice %368 {offsets = [0, 32], sizes = [2, 32], strides = [1, 1]} : vector<2x64xf32> to vector<2x32xf32>
    %381 = arith.mulf %363, %380 : vector<2x32xf32>
    %cst_168 = arith.constant dense<0.000000e+00> : vector<2xf32>
    %382 = vector.multi_reduction <add>, %381, %cst_168 [1] : vector<2x32xf32> to vector<2xf32>
    %383 = vector.shape_cast %382 : vector<2xf32> to vector<2x1xf32>
    %cst_169 = arith.constant 0.176776692 : f32
    %384 = vector.broadcast %cst_169 : f32 to vector<2x1xf32>
    %385 = arith.mulf %383, %384 : vector<2x1xf32>
    %386 = arith.maximumf %379, %385 : vector<2x1xf32>
    %387 = arith.subf %379, %386 : vector<2x1xf32>
    %388 = math.exp %387 : vector<2x1xf32>
    %389 = arith.subf %385, %386 : vector<2x1xf32>
    %390 = math.exp %389 : vector<2x1xf32>
    %391 = arith.addf %388, %390 : vector<2x1xf32>
    %392 = vector.extract_strided_slice %373 {offsets = [0, 0], sizes = [2, 32], strides = [1, 1]} : vector<2x64xf32> to vector<2x32xf32>
    %393 = vector.broadcast %388 : vector<2x1xf32> to vector<2x32xf32>
    %394 = arith.mulf %393, %392 : vector<2x32xf32>
    %395 = vector.extract_strided_slice %373 {offsets = [0, 32], sizes = [2, 32], strides = [1, 1]} : vector<2x64xf32> to vector<2x32xf32>
    %396 = vector.broadcast %390 : vector<2x1xf32> to vector<2x32xf32>
    %397 = arith.mulf %396, %395 : vector<2x32xf32>
    %398 = arith.addf %394, %397 : vector<2x32xf32>
    %399 = vector.broadcast %391 : vector<2x1xf32> to vector<2x32xf32>
    %400 = arith.divf %398, %399 : vector<2x32xf32>
    %c0_170 = arith.constant 0 : index
    %c0_171 = arith.constant 0 : index
    %401 = vector.load %arg14[%c0_170, %c0_171] : memref<32x32xf32, #tpu.memory_space<vmem>>, vector<32x32xf32>
    %cst_172 = arith.constant dense<0.000000e+00> : vector<2x32xf32>
    %402 = tpu.matmul %400, %401, %cst_172 {dimension_numbers = #tpu.dot_dimension_numbers<[1], [0], [0], [1], [0, 0, 1, 1], [], []>} : vector<2x32xf32>, vector<32x32xf32>, vector<2x32xf32> -> vector<2x32xf32>
    %c0_173 = arith.constant 0 : index
    %c0_174 = arith.constant 0 : index
    %403 = vector.load %arg15[%c0_173, %c0_174] : memref<32x32xf32, #tpu.memory_space<vmem>>, vector<32x32xf32>
    %cst_175 = arith.constant dense<0.000000e+00> : vector<2x32xf32>
    %404 = tpu.matmul %318, %403, %cst_175 {dimension_numbers = #tpu.dot_dimension_numbers<[1], [0], [0], [1], [0, 0, 1, 1], [], []>} : vector<2x32xf32>, vector<32x32xf32>, vector<2x32xf32> -> vector<2x32xf32>
    %405 = arith.addf %402, %404 : vector<2x32xf32>
    %c0_176 = arith.constant 0 : index
    %c0_177 = arith.constant 0 : index
    %406 = vector.load %arg16[%c0_176, %c0_177] : memref<1x32xf32, #tpu.memory_space<vmem>>, vector<1x32xf32>
    %407 = vector.broadcast %406 : vector<1x32xf32> to vector<2x32xf32>
    %408 = arith.addf %405, %407 : vector<2x32xf32>
    %cst_178 = arith.constant 0.000000e+00 : f32
    %409 = vector.broadcast %cst_178 : f32 to vector<2x32xf32>
    %410 = arith.maximumf %408, %409 : vector<2x32xf32>
    %c0_179 = arith.constant 0 : index
    %c0_180 = arith.constant 0 : index
    %411 = vector.load %arg17[%c0_179, %c0_180] : memref<64x64xf32, #tpu.memory_space<vmem>>, vector<64x64xf32>
    %cst_181 = arith.constant dense<0.000000e+00> : vector<2x64xf32>
    %412 = tpu.matmul %351, %411, %cst_181 {dimension_numbers = #tpu.dot_dimension_numbers<[1], [0], [0], [1], [0, 0, 1, 1], [], []>} : vector<2x64xf32>, vector<64x64xf32>, vector<2x64xf32> -> vector<2x64xf32>
    %c0_182 = arith.constant 0 : index
    %c0_183 = arith.constant 0 : index
    %413 = vector.load %arg18[%c0_182, %c0_183] : memref<32x64xf32, #tpu.memory_space<vmem>>, vector<32x64xf32>
    %cst_184 = arith.constant dense<0.000000e+00> : vector<2x64xf32>
    %414 = tpu.matmul %318, %413, %cst_184 {dimension_numbers = #tpu.dot_dimension_numbers<[1], [0], [0], [1], [0, 0, 1, 1], [], []>} : vector<2x32xf32>, vector<32x64xf32>, vector<2x64xf32> -> vector<2x64xf32>
    %415 = arith.addf %412, %414 : vector<2x64xf32>
    %c0_185 = arith.constant 0 : index
    %c0_186 = arith.constant 0 : index
    %416 = vector.load %arg19[%c0_185, %c0_186] : memref<1x64xf32, #tpu.memory_space<vmem>>, vector<1x64xf32>
    %417 = vector.broadcast %416 : vector<1x64xf32> to vector<2x64xf32>
    %418 = arith.addf %415, %417 : vector<2x64xf32>
    %cst_187 = arith.constant 0.000000e+00 : f32
    %419 = vector.broadcast %cst_187 : f32 to vector<2x64xf32>
    %420 = arith.maximumf %418, %419 : vector<2x64xf32>
    %c3_i32 = arith.constant 3 : i32
    %421 = arith.index_cast %c3_i32 : i32 to index
    %c0_188 = arith.constant 0 : index
    %c0_189 = arith.constant 0 : index
    %422 = vector.load %arg25[%421, %c0_188, %c0_189] : memref<4x2x128xf32, #tpu.memory_space<vmem>>, vector<1x2x128xf32>
    %423 = vector.shape_cast %422 : vector<1x2x128xf32> to vector<2x128xf32>
    %424 = arith.index_cast %c3_i32 : i32 to index
    %c0_190 = arith.constant 0 : index
    %c0_191 = arith.constant 0 : index
    %425 = vector.load %arg6[%424, %c0_190, %c0_191] : memref<4x32x128xf32, #tpu.memory_space<vmem>>, vector<1x32x128xf32>
    %426 = vector.shape_cast %425 : vector<1x32x128xf32> to vector<32x128xf32>
    %cst_192 = arith.constant dense<0.000000e+00> : vector<2x128xf32>
    %427 = tpu.matmul %410, %426, %cst_192 {dimension_numbers = #tpu.dot_dimension_numbers<[1], [0], [0], [1], [0, 0, 1, 1], [], []>} : vector<2x32xf32>, vector<32x128xf32>, vector<2x128xf32> -> vector<2x128xf32>
    %428 = arith.addf %423, %427 : vector<2x128xf32>
    %429 = vector.extract_strided_slice %428 {offsets = [0, 0], sizes = [2, 32], strides = [1, 1]} : vector<2x128xf32> to vector<2x32xf32>
    %430 = arith.negf %429 : vector<2x32xf32>
    %431 = math.exp %430 : vector<2x32xf32>
    %cst_193 = arith.constant 1.000000e+00 : f32
    %432 = vector.broadcast %cst_193 : f32 to vector<2x32xf32>
    %433 = arith.addf %432, %431 : vector<2x32xf32>
    %434 = arith.divf %432, %433 : vector<2x32xf32>
    %435 = vector.extract_strided_slice %428 {offsets = [0, 32], sizes = [2, 32], strides = [1, 1]} : vector<2x128xf32> to vector<2x32xf32>
    %436 = arith.negf %435 : vector<2x32xf32>
    %437 = math.exp %436 : vector<2x32xf32>
    %cst_194 = arith.constant 1.000000e+00 : f32
    %438 = vector.broadcast %cst_194 : f32 to vector<2x32xf32>
    %439 = arith.addf %438, %437 : vector<2x32xf32>
    %440 = arith.divf %438, %439 : vector<2x32xf32>
    %441 = vector.extract_strided_slice %428 {offsets = [0, 64], sizes = [2, 32], strides = [1, 1]} : vector<2x128xf32> to vector<2x32xf32>
    %442 = math.tanh %441 : vector<2x32xf32>
    %443 = vector.extract_strided_slice %428 {offsets = [0, 96], sizes = [2, 32], strides = [1, 1]} : vector<2x128xf32> to vector<2x32xf32>
    %444 = arith.negf %443 : vector<2x32xf32>
    %445 = math.exp %444 : vector<2x32xf32>
    %cst_195 = arith.constant 1.000000e+00 : f32
    %446 = vector.broadcast %cst_195 : f32 to vector<2x32xf32>
    %447 = arith.addf %446, %445 : vector<2x32xf32>
    %448 = arith.divf %446, %447 : vector<2x32xf32>
    %449 = arith.mulf %440, %356 : vector<2x32xf32>
    %450 = arith.mulf %434, %442 : vector<2x32xf32>
    %451 = arith.addf %449, %450 : vector<2x32xf32>
    %452 = math.tanh %451 : vector<2x32xf32>
    %453 = arith.mulf %448, %452 : vector<2x32xf32>
    %454 = arith.index_cast %c3_i32 : i32 to index
    %c0_196 = arith.constant 0 : index
    %c0_197 = arith.constant 0 : index
    %455 = vector.load %arg26[%454, %c0_196, %c0_197] : memref<4x2x256xf32, #tpu.memory_space<vmem>>, vector<1x2x256xf32>
    %456 = vector.shape_cast %455 : vector<1x2x256xf32> to vector<2x256xf32>
    %457 = arith.index_cast %c3_i32 : i32 to index
    %c0_198 = arith.constant 0 : index
    %c0_199 = arith.constant 0 : index
    %458 = vector.load %arg7[%457, %c0_198, %c0_199] : memref<4x64x256xf32, #tpu.memory_space<vmem>>, vector<1x64x256xf32>
    %459 = vector.shape_cast %458 : vector<1x64x256xf32> to vector<64x256xf32>
    %cst_200 = arith.constant dense<0.000000e+00> : vector<2x256xf32>
    %460 = tpu.matmul %420, %459, %cst_200 {dimension_numbers = #tpu.dot_dimension_numbers<[1], [0], [0], [1], [0, 0, 1, 1], [], []>} : vector<2x64xf32>, vector<64x256xf32>, vector<2x256xf32> -> vector<2x256xf32>
    %461 = arith.addf %456, %460 : vector<2x256xf32>
    %462 = vector.extract_strided_slice %461 {offsets = [0, 0], sizes = [2, 64], strides = [1, 1]} : vector<2x256xf32> to vector<2x64xf32>
    %463 = arith.negf %462 : vector<2x64xf32>
    %464 = math.exp %463 : vector<2x64xf32>
    %cst_201 = arith.constant 1.000000e+00 : f32
    %465 = vector.broadcast %cst_201 : f32 to vector<2x64xf32>
    %466 = arith.addf %465, %464 : vector<2x64xf32>
    %467 = arith.divf %465, %466 : vector<2x64xf32>
    %468 = vector.extract_strided_slice %461 {offsets = [0, 64], sizes = [2, 64], strides = [1, 1]} : vector<2x256xf32> to vector<2x64xf32>
    %469 = arith.negf %468 : vector<2x64xf32>
    %470 = math.exp %469 : vector<2x64xf32>
    %cst_202 = arith.constant 1.000000e+00 : f32
    %471 = vector.broadcast %cst_202 : f32 to vector<2x64xf32>
    %472 = arith.addf %471, %470 : vector<2x64xf32>
    %473 = arith.divf %471, %472 : vector<2x64xf32>
    %474 = vector.extract_strided_slice %461 {offsets = [0, 128], sizes = [2, 64], strides = [1, 1]} : vector<2x256xf32> to vector<2x64xf32>
    %475 = math.tanh %474 : vector<2x64xf32>
    %476 = vector.extract_strided_slice %461 {offsets = [0, 192], sizes = [2, 64], strides = [1, 1]} : vector<2x256xf32> to vector<2x64xf32>
    %477 = arith.negf %476 : vector<2x64xf32>
    %478 = math.exp %477 : vector<2x64xf32>
    %cst_203 = arith.constant 1.000000e+00 : f32
    %479 = vector.broadcast %cst_203 : f32 to vector<2x64xf32>
    %480 = arith.addf %479, %478 : vector<2x64xf32>
    %481 = arith.divf %479, %480 : vector<2x64xf32>
    %482 = arith.mulf %473, %358 : vector<2x64xf32>
    %483 = arith.mulf %467, %475 : vector<2x64xf32>
    %484 = arith.addf %482, %483 : vector<2x64xf32>
    %485 = math.tanh %484 : vector<2x64xf32>
    %486 = arith.mulf %481, %485 : vector<2x64xf32>
    %c0_i32_204 = arith.constant 0 : i32
    %487 = arith.cmpi sgt, %c3_i32, %c0_i32_204 : i32
    %488 = arith.extui %487 : i1 to i32
    %489 = arith.sitofp %488 : i32 to f32
    %490 = vector.broadcast %489 : f32 to vector<2x32xf32>
    %491 = arith.mulf %451, %490 : vector<2x32xf32>
    %492 = vector.broadcast %489 : f32 to vector<2x64xf32>
    %493 = arith.mulf %484, %492 : vector<2x64xf32>
    %c0_205 = arith.constant 0 : index
    %c0_206 = arith.constant 0 : index
    %494 = vector.load %arg8[%c0_205, %c0_206] : memref<32x32xf32, #tpu.memory_space<vmem>>, vector<32x32xf32>
    %cst_207 = arith.constant dense<0.000000e+00> : vector<2x32xf32>
    %495 = tpu.matmul %453, %494, %cst_207 {dimension_numbers = #tpu.dot_dimension_numbers<[1], [0], [0], [1], [0, 0, 1, 1], [], []>} : vector<2x32xf32>, vector<32x32xf32>, vector<2x32xf32> -> vector<2x32xf32>
    %c0_208 = arith.constant 0 : index
    %c0_209 = arith.constant 0 : index
    %496 = vector.load %arg9[%c0_208, %c0_209] : memref<1x32xf32, #tpu.memory_space<vmem>>, vector<1x32xf32>
    %497 = vector.broadcast %496 : vector<1x32xf32> to vector<2x32xf32>
    %498 = arith.addf %495, %497 : vector<2x32xf32>
    %c0_210 = arith.constant 0 : index
    %c0_211 = arith.constant 0 : index
    %499 = vector.load %arg10[%c0_210, %c0_211] : memref<64x64xf32, #tpu.memory_space<vmem>>, vector<64x64xf32>
    %cst_212 = arith.constant dense<0.000000e+00> : vector<2x64xf32>
    %500 = tpu.matmul %486, %499, %cst_212 {dimension_numbers = #tpu.dot_dimension_numbers<[1], [0], [0], [1], [0, 0, 1, 1], [], []>} : vector<2x64xf32>, vector<64x64xf32>, vector<2x64xf32> -> vector<2x64xf32>
    %c0_213 = arith.constant 0 : index
    %c0_214 = arith.constant 0 : index
    %501 = vector.load %arg11[%c0_213, %c0_214] : memref<1x64xf32, #tpu.memory_space<vmem>>, vector<1x64xf32>
    %502 = vector.broadcast %501 : vector<1x64xf32> to vector<2x64xf32>
    %503 = arith.addf %500, %502 : vector<2x64xf32>
    %c0_215 = arith.constant 0 : index
    %c0_216 = arith.constant 0 : index
    %504 = vector.load %arg12[%c0_215, %c0_216] : memref<64x64xf32, #tpu.memory_space<vmem>>, vector<64x64xf32>
    %cst_217 = arith.constant dense<0.000000e+00> : vector<2x64xf32>
    %505 = tpu.matmul %486, %504, %cst_217 {dimension_numbers = #tpu.dot_dimension_numbers<[1], [0], [0], [1], [0, 0, 1, 1], [], []>} : vector<2x64xf32>, vector<64x64xf32>, vector<2x64xf32> -> vector<2x64xf32>
    %c0_218 = arith.constant 0 : index
    %c0_219 = arith.constant 0 : index
    %506 = vector.load %arg13[%c0_218, %c0_219] : memref<1x64xf32, #tpu.memory_space<vmem>>, vector<1x64xf32>
    %507 = vector.broadcast %506 : vector<1x64xf32> to vector<2x64xf32>
    %508 = arith.addf %505, %507 : vector<2x64xf32>
    %509 = vector.extract_strided_slice %503 {offsets = [0, 0], sizes = [2, 32], strides = [1, 1]} : vector<2x64xf32> to vector<2x32xf32>
    %510 = arith.mulf %498, %509 : vector<2x32xf32>
    %cst_220 = arith.constant dense<0.000000e+00> : vector<2xf32>
    %511 = vector.multi_reduction <add>, %510, %cst_220 [1] : vector<2x32xf32> to vector<2xf32>
    %512 = vector.shape_cast %511 : vector<2xf32> to vector<2x1xf32>
    %cst_221 = arith.constant 0.176776692 : f32
    %513 = vector.broadcast %cst_221 : f32 to vector<2x1xf32>
    %514 = arith.mulf %512, %513 : vector<2x1xf32>
    %515 = vector.extract_strided_slice %503 {offsets = [0, 32], sizes = [2, 32], strides = [1, 1]} : vector<2x64xf32> to vector<2x32xf32>
    %516 = arith.mulf %498, %515 : vector<2x32xf32>
    %cst_222 = arith.constant dense<0.000000e+00> : vector<2xf32>
    %517 = vector.multi_reduction <add>, %516, %cst_222 [1] : vector<2x32xf32> to vector<2xf32>
    %518 = vector.shape_cast %517 : vector<2xf32> to vector<2x1xf32>
    %cst_223 = arith.constant 0.176776692 : f32
    %519 = vector.broadcast %cst_223 : f32 to vector<2x1xf32>
    %520 = arith.mulf %518, %519 : vector<2x1xf32>
    %521 = arith.maximumf %514, %520 : vector<2x1xf32>
    %522 = arith.subf %514, %521 : vector<2x1xf32>
    %523 = math.exp %522 : vector<2x1xf32>
    %524 = arith.subf %520, %521 : vector<2x1xf32>
    %525 = math.exp %524 : vector<2x1xf32>
    %526 = arith.addf %523, %525 : vector<2x1xf32>
    %527 = vector.extract_strided_slice %508 {offsets = [0, 0], sizes = [2, 32], strides = [1, 1]} : vector<2x64xf32> to vector<2x32xf32>
    %528 = vector.broadcast %523 : vector<2x1xf32> to vector<2x32xf32>
    %529 = arith.mulf %528, %527 : vector<2x32xf32>
    %530 = vector.extract_strided_slice %508 {offsets = [0, 32], sizes = [2, 32], strides = [1, 1]} : vector<2x64xf32> to vector<2x32xf32>
    %531 = vector.broadcast %525 : vector<2x1xf32> to vector<2x32xf32>
    %532 = arith.mulf %531, %530 : vector<2x32xf32>
    %533 = arith.addf %529, %532 : vector<2x32xf32>
    %534 = vector.broadcast %526 : vector<2x1xf32> to vector<2x32xf32>
    %535 = arith.divf %533, %534 : vector<2x32xf32>
    %c0_224 = arith.constant 0 : index
    %c0_225 = arith.constant 0 : index
    %536 = vector.load %arg14[%c0_224, %c0_225] : memref<32x32xf32, #tpu.memory_space<vmem>>, vector<32x32xf32>
    %cst_226 = arith.constant dense<0.000000e+00> : vector<2x32xf32>
    %537 = tpu.matmul %535, %536, %cst_226 {dimension_numbers = #tpu.dot_dimension_numbers<[1], [0], [0], [1], [0, 0, 1, 1], [], []>} : vector<2x32xf32>, vector<32x32xf32>, vector<2x32xf32> -> vector<2x32xf32>
    %c0_227 = arith.constant 0 : index
    %c0_228 = arith.constant 0 : index
    %538 = vector.load %arg15[%c0_227, %c0_228] : memref<32x32xf32, #tpu.memory_space<vmem>>, vector<32x32xf32>
    %cst_229 = arith.constant dense<0.000000e+00> : vector<2x32xf32>
    %539 = tpu.matmul %453, %538, %cst_229 {dimension_numbers = #tpu.dot_dimension_numbers<[1], [0], [0], [1], [0, 0, 1, 1], [], []>} : vector<2x32xf32>, vector<32x32xf32>, vector<2x32xf32> -> vector<2x32xf32>
    %540 = arith.addf %537, %539 : vector<2x32xf32>
    %c0_230 = arith.constant 0 : index
    %c0_231 = arith.constant 0 : index
    %541 = vector.load %arg16[%c0_230, %c0_231] : memref<1x32xf32, #tpu.memory_space<vmem>>, vector<1x32xf32>
    %542 = vector.broadcast %541 : vector<1x32xf32> to vector<2x32xf32>
    %543 = arith.addf %540, %542 : vector<2x32xf32>
    %cst_232 = arith.constant 0.000000e+00 : f32
    %544 = vector.broadcast %cst_232 : f32 to vector<2x32xf32>
    %545 = arith.maximumf %543, %544 : vector<2x32xf32>
    %c0_233 = arith.constant 0 : index
    %c0_234 = arith.constant 0 : index
    %546 = vector.load %arg17[%c0_233, %c0_234] : memref<64x64xf32, #tpu.memory_space<vmem>>, vector<64x64xf32>
    %cst_235 = arith.constant dense<0.000000e+00> : vector<2x64xf32>
    %547 = tpu.matmul %486, %546, %cst_235 {dimension_numbers = #tpu.dot_dimension_numbers<[1], [0], [0], [1], [0, 0, 1, 1], [], []>} : vector<2x64xf32>, vector<64x64xf32>, vector<2x64xf32> -> vector<2x64xf32>
    %c0_236 = arith.constant 0 : index
    %c0_237 = arith.constant 0 : index
    %548 = vector.load %arg18[%c0_236, %c0_237] : memref<32x64xf32, #tpu.memory_space<vmem>>, vector<32x64xf32>
    %cst_238 = arith.constant dense<0.000000e+00> : vector<2x64xf32>
    %549 = tpu.matmul %453, %548, %cst_238 {dimension_numbers = #tpu.dot_dimension_numbers<[1], [0], [0], [1], [0, 0, 1, 1], [], []>} : vector<2x32xf32>, vector<32x64xf32>, vector<2x64xf32> -> vector<2x64xf32>
    %550 = arith.addf %547, %549 : vector<2x64xf32>
    %c0_239 = arith.constant 0 : index
    %c0_240 = arith.constant 0 : index
    %551 = vector.load %arg19[%c0_239, %c0_240] : memref<1x64xf32, #tpu.memory_space<vmem>>, vector<1x64xf32>
    %552 = vector.broadcast %551 : vector<1x64xf32> to vector<2x64xf32>
    %553 = arith.addf %550, %552 : vector<2x64xf32>
    %cst_241 = arith.constant 0.000000e+00 : f32
    %554 = vector.broadcast %cst_241 : f32 to vector<2x64xf32>
    %555 = arith.maximumf %553, %554 : vector<2x64xf32>
    %c4_i32 = arith.constant 4 : i32
    %c0_242 = arith.constant 0 : index
    %c0_243 = arith.constant 0 : index
    %556 = vector.load %arg20[%c0_242, %c0_243] : memref<32x16xf32, #tpu.memory_space<vmem>>, vector<32x16xf32>
    %cst_244 = arith.constant dense<0.000000e+00> : vector<2x16xf32>
    %557 = tpu.matmul %545, %556, %cst_244 {dimension_numbers = #tpu.dot_dimension_numbers<[1], [0], [0], [1], [0, 0, 1, 1], [], []>} : vector<2x32xf32>, vector<32x16xf32>, vector<2x16xf32> -> vector<2x16xf32>
    %c0_245 = arith.constant 0 : index
    %c0_246 = arith.constant 0 : index
    %558 = vector.load %arg21[%c0_245, %c0_246] : memref<1x16xf32, #tpu.memory_space<vmem>>, vector<1x16xf32>
    %559 = vector.broadcast %558 : vector<1x16xf32> to vector<2x16xf32>
    %560 = arith.addf %557, %559 : vector<2x16xf32>
    %cst_247 = arith.constant 0.000000e+00 : f32
    %561 = vector.broadcast %cst_247 : f32 to vector<2x16xf32>
    %562 = arith.maximumf %560, %561 : vector<2x16xf32>
    %c0_248 = arith.constant 0 : index
    %c0_249 = arith.constant 0 : index
    %563 = vector.load %arg22[%c0_248, %c0_249] : memref<1x16xf32, #tpu.memory_space<vmem>>, vector<1x16xf32>
    %564 = vector.broadcast %563 : vector<1x16xf32> to vector<2x16xf32>
    %565 = arith.mulf %562, %564 : vector<2x16xf32>
    %cst_250 = arith.constant dense<0.000000e+00> : vector<2xf32>
    %566 = vector.multi_reduction <add>, %565, %cst_250 [1] : vector<2x16xf32> to vector<2xf32>
    %567 = vector.shape_cast %566 : vector<2xf32> to vector<2x1xf32>
    %c0_251 = arith.constant 0 : index
    %c0_252 = arith.constant 0 : index
    %568 = vector.load %arg23[%c0_251, %c0_252] : memref<1x1xf32, #tpu.memory_space<vmem>>, vector<1x1xf32>
    %569 = vector.broadcast %568 : vector<1x1xf32> to vector<2x1xf32>
    %570 = arith.addf %567, %569 : vector<2x1xf32>
    %c0_253 = arith.constant 0 : index
    %c0_254 = arith.constant 0 : index
    %571 = vector.load %arg24[%c0_253, %c0_254] : memref<2x1xf32, #tpu.memory_space<vmem>>, vector<2x1xf32>
    tpu.vector_store %arg24[%c0_253, %c0_254], %570 {strides = array<i32>} : memref<2x1xf32, #tpu.memory_space<vmem>>, vector<2x1xf32>,
    return
  }
}

</mosaic_0001>

<llo_original>
// kernel: tile.39
$region0: #{tile.39}
  %s0 = inlined_call_operand.vmem [shape: f32[32,2,32], index: 0, kind: input, shape index: {}]
  %s1 = inlined_call_operand.vmem [shape: f32[32,64], index: 1, kind: output, shape index: {}]
  $region1: #{tile.39} parent=0
    #allocation0 [shape = 'u8[131072]{0}', space=vmem, size = 0x20000, scoped, tag = 'scoped mem for input reshape']
    %s3 = sshll.u32 1, 2
    %s4 = ssub.s32 %s3, 1
    %s5 = smul.addr 2, 31
    %s6 = scalar_lea.vmem %s0, %s5
    %v7 = vld [vmem:[%s6] sm:%s4]
    %s8 = scalar_lea.vmem [#allocation0], 248
    %9 = vst [vmem:[%s8] sm:%s4] %v7
    %s10 = smul.addr 2, 30
    %s11 = scalar_lea.vmem %s0, %s10
    %v12 = vld [vmem:[%s11] sm:%s4]
    %s13 = scalar_lea.vmem [#allocation0], 240
    %14 = vst [vmem:[%s13] sm:%s4] %v12
    %s15 = smul.addr 2, 29
    %s16 = scalar_lea.vmem %s0, %s15
    %v17 = vld [vmem:[%s16] sm:%s4]
    %s18 = scalar_lea.vmem [#allocation0], 232
    %19 = vst [vmem:[%s18] sm:%s4] %v17
    %s20 = smul.addr 2, 28
    %s21 = scalar_lea.vmem %s0, %s20
    %v22 = vld [vmem:[%s21] sm:%s4]
    %s23 = scalar_lea.vmem [#allocation0], 224
    %24 = vst [vmem:[%s23] sm:%s4] %v22
    %s25 = smul.addr 2, 27
    %s26 = scalar_lea.vmem %s0, %s25
    %v27 = vld [vmem:[%s26] sm:%s4]
    %s28 = scalar_lea.vmem [#allocation0], 216
    %29 = vst [vmem:[%s28] sm:%s4] %v27
    %s30 = smul.addr 2, 26
    %s31 = scalar_lea.vmem %s0, %s30
    %v32 = vld [vmem:[%s31] sm:%s4]
    %s33 = scalar_lea.vmem [#allocation0], 208
    %34 = vst [vmem:[%s33] sm:%s4] %v32
    %s35 = smul.addr 2, 25
    %s36 = scalar_lea.vmem %s0, %s35
    %v37 = vld [vmem:[%s36] sm:%s4]
    %s38 = scalar_lea.vmem [#allocation0], 200
    %39 = vst [vmem:[%s38] sm:%s4] %v37
    %s40 = smul.addr 2, 24
    %s41 = scalar_lea.vmem %s0, %s40
    %v42 = vld [vmem:[%s41] sm:%s4]
    %s43 = scalar_lea.vmem [#allocation0], 192
    %44 = vst [vmem:[%s43] sm:%s4] %v42
    %s45 = smul.addr 2, 23
    %s46 = scalar_lea.vmem %s0, %s45
    %v47 = vld [vmem:[%s46] sm:%s4]
    %s48 = scalar_lea.vmem [#allocation0], 184
    %49 = vst [vmem:[%s48] sm:%s4] %v47
    %s50 = smul.addr 2, 22
    %s51 = scalar_lea.vmem %s0, %s50
    %v52 = vld [vmem:[%s51] sm:%s4]
    %s53 = scalar_lea.vmem [#allocation0], 176
    %54 = vst [vmem:[%s53] sm:%s4] %v52
    %s55 = smul.addr 2, 21
    %s56 = scalar_lea.vmem %s0, %s55
    %v57 = vld [vmem:[%s56] sm:%s4]
    %s58 = scalar_lea.vmem [#allocation0], 168
    %59 = vst [vmem:[%s58] sm:%s4] %v57
    %s60 = smul.addr 2, 20
    %s61 = scalar_lea.vmem %s0, %s60
    %v62 = vld [vmem:[%s61] sm:%s4]
    %s63 = scalar_lea.vmem [#allocation0], 160
    %64 = vst [vmem:[%s63] sm:%s4] %v62
    %s65 = smul.addr 2, 19
    %s66 = scalar_lea.vmem %s0, %s65
    %v67 = vld [vmem:[%s66] sm:%s4]
    %s68 = scalar_lea.vmem [#allocation0], 152
    %69 = vst [vmem:[%s68] sm:%s4] %v67
    %s70 = smul.addr 2, 18
    %s71 = scalar_lea.vmem %s0, %s70
    %v72 = vld [vmem:[%s71] sm:%s4]
    %s73 = scalar_lea.vmem [#allocation0], 144
    %74 = vst [vmem:[%s73] sm:%s4] %v72
    %s75 = smul.addr 2, 17
    %s76 = scalar_lea.vmem %s0, %s75
    %v77 = vld [vmem:[%s76] sm:%s4]
    %s78 = scalar_lea.vmem [#allocation0], 136
    %79 = vst [vmem:[%s78] sm:%s4] %v77
    %s80 = smul.addr 2, 16
    %s81 = scalar_lea.vmem %s0, %s80
    %v82 = vld [vmem:[%s81] sm:%s4]
    %s83 = scalar_lea.vmem [#allocation0], 128
    %84 = vst [vmem:[%s83] sm:%s4] %v82
    %s85 = smul.addr 2, 15
    %s86 = scalar_lea.vmem %s0, %s85
    %v87 = vld [vmem:[%s86] sm:%s4]
    %s88 = scalar_lea.vmem [#allocation0], 120
    %89 = vst [vmem:[%s88] sm:%s4] %v87
    %s90 = smul.addr 2, 14
    %s91 = scalar_lea.vmem %s0, %s90
    %v92 = vld [vmem:[%s91] sm:%s4]
    %s93 = scalar_lea.vmem [#allocation0], 112
    %94 = vst [vmem:[%s93] sm:%s4] %v92
    %s95 = smul.addr 2, 13
    %s96 = scalar_lea.vmem %s0, %s95
    %v97 = vld [vmem:[%s96] sm:%s4]
    %s98 = scalar_lea.vmem [#allocation0], 104
    %99 = vst [vmem:[%s98] sm:%s4] %v97
    %s100 = smul.addr 2, 12
    %s101 = scalar_lea.vmem %s0, %s100
    %v102 = vld [vmem:[%s101] sm:%s4]
    %s103 = scalar_lea.vmem [#allocation0], 96
    %104 = vst [vmem:[%s103] sm:%s4] %v102
    %s105 = smul.addr 2, 11
    %s106 = scalar_lea.vmem %s0, %s105
    %v107 = vld [vmem:[%s106] sm:%s4]
    %s108 = scalar_lea.vmem [#allocation0], 88
    %109 = vst [vmem:[%s108] sm:%s4] %v107
    %s110 = smul.addr 2, 10
    %s111 = scalar_lea.vmem %s0, %s110
    %v112 = vld [vmem:[%s111] sm:%s4]
    %s113 = scalar_lea.vmem [#allocation0], 80
    %114 = vst [vmem:[%s113] sm:%s4] %v112
    %s115 = smul.addr 2, 9
    %s116 = scalar_lea.vmem %s0, %s115
    %v117 = vld [vmem:[%s116] sm:%s4]
    %s118 = scalar_lea.vmem [#allocation0], 72
    %119 = vst [vmem:[%s118] sm:%s4] %v117
    %s120 = smul.addr 2, 8
    %s121 = scalar_lea.vmem %s0, %s120
    %v122 = vld [vmem:[%s121] sm:%s4]
    %s123 = scalar_lea.vmem [#allocation0], 64
    %124 = vst [vmem:[%s123] sm:%s4] %v122
    %s125 = smul.addr 2, 7
    %s126 = scalar_lea.vmem %s0, %s125
    %v127 = vld [vmem:[%s126] sm:%s4]
    %s128 = scalar_lea.vmem [#allocation0], 56
    %129 = vst [vmem:[%s128] sm:%s4] %v127
    %s130 = smul.addr 2, 6
    %s131 = scalar_lea.vmem %s0, %s130
    %v132 = vld [vmem:[%s131] sm:%s4]
    %s133 = scalar_lea.vmem [#allocation0], 48
    %134 = vst [vmem:[%s133] sm:%s4] %v132
    %s135 = smul.addr 2, 5
    %s136 = scalar_lea.vmem %s0, %s135
    %v137 = vld [vmem:[%s136] sm:%s4]
    %s138 = scalar_lea.vmem [#allocation0], 40
    %139 = vst [vmem:[%s138] sm:%s4] %v137
    %s140 = smul.addr 2, 4
    %s141 = scalar_lea.vmem %s0, %s140
    %v142 = vld [vmem:[%s141] sm:%s4]
    %s143 = scalar_lea.vmem [#allocation0], 32
    %144 = vst [vmem:[%s143] sm:%s4] %v142
    %s145 = smul.addr 2, 3
    %s146 = scalar_lea.vmem %s0, %s145
    %v147 = vld [vmem:[%s146] sm:%s4]
    %s148 = scalar_lea.vmem [#allocation0], 24
    %149 = vst [vmem:[%s148] sm:%s4] %v147
    %s150 = smul.addr 2, 2
    %s151 = scalar_lea.vmem %s0, %s150
    %v152 = vld [vmem:[%s151] sm:%s4]
    %s153 = scalar_lea.vmem [#allocation0], 16
    %154 = vst [vmem:[%s153] sm:%s4] %v152
    %s155 = scalar_lea.vmem %s0, 2
    %v156 = vld [vmem:[%s155] sm:%s4]
    %s157 = scalar_lea.vmem [#allocation0], 8
    %158 = vst [vmem:[%s157] sm:%s4] %v156
    %v159 = vld [vmem:[%s0] sm:%s4]
    %160 = vst [vmem:[#allocation0] sm:%s4] %v159
    %v161 = vld [vmem:[#allocation0] ss:$8 sm:$0xf]
    %v162 = vld [vmem:[#allocation0] ss:$8 sm:$0xf0]
    %vm163 = vcmask 1047556
    %v164 = vsel %vm163, %v162, %v161
    %vm165 = vcmask 261120
    %166 = vst.msk [vmem:[%s1] sm:$0xff] %vm165, %v164
    %s167 = scalar_lea.vmem [#allocation0], 64
    %v168 = vld [vmem:[%s167] ss:$8 sm:$0xf]
    %s169 = scalar_lea.vmem [#allocation0], 64
    %v170 = vld [vmem:[%s169] ss:$8 sm:$0xf0]
    %vm171 = vcmask 1047556
    %v172 = vsel %vm171, %v170, %v168
    %vm173 = vcmask 261120
    %s174 = scalar_lea.vmem %s1, 8
    %175 = vst.msk [vmem:[%s174] sm:$0xff] %vm173, %v172
    %s176 = scalar_lea.vmem [#allocation0], 128
    %v177 = vld [vmem:[%s176] ss:$8 sm:$0xf]
    %s178 = scalar_lea.vmem [#allocation0], 128
    %v179 = vld [vmem:[%s178] ss:$8 sm:$0xf0]
    %vm180 = vcmask 1047556
    %v181 = vsel %vm180, %v179, %v177
    %vm182 = vcmask 261120
    %s183 = scalar_lea.vmem %s1, 16
    %184 = vst.msk [vmem:[%s183] sm:$0xff] %vm182, %v181
    %s185 = scalar_lea.vmem [#allocation0], 192
    %v186 = vld [vmem:[%s185] ss:$8 sm:$0xf]
    %s187 = scalar_lea.vmem [#allocation0], 192
    %v188 = vld [vmem:[%s187] ss:$8 sm:$0xf0]
    %vm189 = vcmask 1047556
    %v190 = vsel %vm189, %v188, %v186
    %vm191 = vcmask 261120
    %s192 = scalar_lea.vmem %s1, 24
    %193 = vst.msk [vmem:[%s192] sm:$0xff] %vm191, %v190
    %s194 = scalar_lea.vmem [#allocation0], 1
    %v195 = vld [vmem:[%s194] ss:$8 sm:$0xf]
    %s196 = scalar_lea.vmem [#allocation0], 1
    %v197 = vld [vmem:[%s196] ss:$8 sm:$0xf0]
    %vm198 = vcmask 1047556
    %v199 = vsel %vm198, %v197, %v195
    %200 = vrot.lane.b32.xlu0 %v199, 32
    %v201 = vpop.permute.xlu0 %200
    %vm202 = vcmask 523520
    %203 = vst.msk [vmem:[%s1] sm:$0xff] %vm202, %v201
    %s204 = scalar_lea.vmem [#allocation0], 65
    %v205 = vld [vmem:[%s204] ss:$8 sm:$0xf]
    %s206 = scalar_lea.vmem [#allocation0], 65
    %v207 = vld [vmem:[%s206] ss:$8 sm:$0xf0]
    %vm208 = vcmask 1047556
    %v209 = vsel %vm208, %v207, %v205
    %210 = vrot.lane.b32.xlu0 %v209, 32
    %v211 = vpop.permute.xlu0 %210
    %vm212 = vcmask 523520
    %s213 = scalar_lea.vmem %s1, 8
    %214 = vst.msk [vmem:[%s213] sm:$0xff] %vm212, %v211
    %s215 = scalar_lea.vmem [#allocation0], 129
    %v216 = vld [vmem:[%s215] ss:$8 sm:$0xf]
    %s217 = scalar_lea.vmem [#allocation0], 129
    %v218 = vld [vmem:[%s217] ss:$8 sm:$0xf0]
    %vm219 = vcmask 1047556
    %v220 = vsel %vm219, %v218, %v216
    %221 = vrot.lane.b32.xlu0 %v220, 32
    %v222 = vpop.permute.xlu0 %221
    %vm223 = vcmask 523520
    %s224 = scalar_lea.vmem %s1, 16
    %225 = vst.msk [vmem:[%s224] sm:$0xff] %vm223, %v222
    %s226 = scalar_lea.vmem [#allocation0], 193
    %v227 = vld [vmem:[%s226] ss:$8 sm:$0xf]
    %s228 = scalar_lea.vmem [#allocation0], 193
    %v229 = vld [vmem:[%s228] ss:$8 sm:$0xf0]
    %vm230 = vcmask 1047556
    %v231 = vsel %vm230, %v229, %v227
    %232 = vrot.lane.b32.xlu0 %v231, 32
    %v233 = vpop.permute.xlu0 %232
    %vm234 = vcmask 523520
    %s235 = scalar_lea.vmem %s1, 24
    %236 = vst.msk [vmem:[%s235] sm:$0xff] %vm234, %v233

// kernel: forward.1
$region0: #{forward.1}
  #allocation0 [shape = 'u32[]', space=smem, size = 0x4, offset = 0x4, fixed_abs, tag = 'smem constant byte address 0x4 - core index']
  #allocation1 [shape = 'u32[144,128]{1,0:T(1,128)}', space=vmem, size = 0x12000, scoped, tag = 'internal scratch']
  #allocation2 [shape = 'f32[4,2,128]{2,1,0:T(2,128)}', space=vmem, size = 0x1000, scoped, tag = 'scratch operand']
  #allocation3 [shape = 'f32[4,2,256]{2,1,0:T(2,128)}', space=vmem, size = 0x2000, scoped, tag = 'scratch operand']
  #allocation4 [shape = 'f32[1,1]{1,0:T(1,128)S(1)}', space=vmem, size = 0x200, scoped, tag = 'scoped memory for forward.1']
  %s0 = inlined_call_operand.vmem [shape: f32[4,2,8], index: 0, kind: input, shape index: {}]
  %s1 = inlined_call_operand.vmem [shape: f32[4,2,16], index: 1, kind: input, shape index: {}]
  %s2 = inlined_call_operand.vmem [shape: f32[4,8,128], index: 2, kind: input, shape index: {}]
  %s3 = inlined_call_operand.vmem [shape: f32[4,1,128], index: 3, kind: input, shape index: {}]
  %s4 = inlined_call_operand.vmem [shape: f32[4,16,256], index: 4, kind: input, shape index: {}]
  %s5 = inlined_call_operand.vmem [shape: f32[4,1,256], index: 5, kind: input, shape index: {}]
  %s6 = inlined_call_operand.vmem [shape: f32[4,32,128], index: 6, kind: input, shape index: {}]
  %s7 = inlined_call_operand.vmem [shape: f32[4,64,256], index: 7, kind: input, shape index: {}]
  %s8 = inlined_call_operand.vmem [shape: f32[32,32], index: 8, kind: input, shape index: {}]
  %s9 = inlined_call_operand.vmem [shape: f32[1,32], index: 9, kind: input, shape index: {}]
  %s10 = inlined_call_operand.vmem [shape: f32[64,64], index: 10, kind: input, shape index: {}]
  %s11 = inlined_call_operand.vmem [shape: f32[1,64], index: 11, kind: input, shape index: {}]
  %s12 = inlined_call_operand.vmem [shape: f32[64,64], index: 12, kind: input, shape index: {}]
  %s13 = inlined_call_operand.vmem [shape: f32[1,64], index: 13, kind: input, shape index: {}]
  %s14 = inlined_call_operand.vmem [shape: f32[32,32], index: 14, kind: input, shape index: {}]
  %s15 = inlined_call_operand.vmem [shape: f32[32,32], index: 15, kind: input, shape index: {}]
  %s16 = inlined_call_operand.vmem [shape: f32[1,32], index: 16, kind: input, shape index: {}]
  %s17 = inlined_call_operand.vmem [shape: f32[64,64], index: 17, kind: input, shape index: {}]
  %s18 = inlined_call_operand.vmem [shape: f32[32,64], index: 18, kind: input, shape index: {}]
  %s19 = inlined_call_operand.vmem [shape: f32[1,64], index: 19, kind: input, shape index: {}]
  %s20 = inlined_call_operand.vmem [shape: f32[32,16], index: 20, kind: input, shape index: {}]
  %s21 = inlined_call_operand.vmem [shape: f32[1,16], index: 21, kind: input, shape index: {}]
  %s22 = inlined_call_operand.vmem [shape: f32[1,16], index: 22, kind: input, shape index: {}]
  %s23 = inlined_call_operand.<no memory space> [shape: f32[1,1], index: 23, kind: input, shape index: {}]
  %s24 = inlined_call_operand.vmem [shape: f32[2,1], index: 24, kind: output, shape index: {}]
  %s25 = sld [smem:[#allocation0]]
  $region106: #{forward.1} parent=0
    _
  %s27 = ssub.s32 1, %s25
  %s28 = scalar_select 0, %s27, %s25
  %v29 = vstv %s23
  %30 = vst [vmem:[#allocation4] sm:$0x1] %v29
  // Predicated region
  $region2: #{forward.1} parent=0 // pred_check
    _
  $region3: #{forward.1} parent=0 // pred_check_branch
    %32 = sbr.rel (0) target = $region5
  $region4: #{forward.1} parent=0 // pred_region
    _
  $region5: #{forward.1} parent=0 // pred_fallthru
    _
  // Predicated region
  $region6: #{forward.1} parent=0 // pred_check
    _
  $region7: #{forward.1} parent=0 // pred_check_branch
    %34 = sbr.rel (0) target = $region9
  $region8: #{forward.1} parent=0 // pred_region
    _
  $region9: #{forward.1} parent=0 // pred_fallthru
    _
  // Predicated region
  $region10: #{forward.1} parent=0 // pred_check
    _
  $region11: #{forward.1} parent=0 // pred_check_branch
    %36 = sbr.rel (0) target = $region13
  $region12: #{forward.1} parent=0 // pred_region
    _
  $region13: #{forward.1} parent=0 // pred_fallthru
    _
  // Predicated region
  $region14: #{forward.1} parent=0 // pred_check
    _
  $region15: #{forward.1} parent=0 // pred_check_branch
    %38 = sbr.rel (0) target = $region17
  $region16: #{forward.1} parent=0 // pred_region
    _
  $region17: #{forward.1} parent=0 // pred_fallthru
    _
  // Predicated region
  $region18: #{forward.1} parent=0 // pred_check
    _
  $region19: #{forward.1} parent=0 // pred_check_branch
    %40 = sbr.rel (0) target = $region21
  $region20: #{forward.1} parent=0 // pred_region
    _
  $region21: #{forward.1} parent=0 // pred_fallthru
    _
  // Predicated region
  $region22: #{forward.1} parent=0 // pred_check
    _
  $region23: #{forward.1} parent=0 // pred_check_branch
    %42 = sbr.rel (0) target = $region25
  $region24: #{forward.1} parent=0 // pred_region
    _
  $region25: #{forward.1} parent=0 // pred_fallthru
    _
  // Predicated region
  $region26: #{forward.1} parent=0 // pred_check
    _
  $region27: #{forward.1} parent=0 // pred_check_branch
    %44 = sbr.rel (0) target = $region29
  $region28: #{forward.1} parent=0 // pred_region
    _
  $region29: #{forward.1} parent=0 // pred_fallthru
    _
  // Predicated region
  $region30: #{forward.1} parent=0 // pred_check
    _
  $region31: #{forward.1} parent=0 // pred_check_branch
    %46 = sbr.rel (0) target = $region33
  $region32: #{forward.1} parent=0 // pred_region
    _
  $region33: #{forward.1} parent=0 // pred_fallthru
    _
  // Predicated region
  $region34: #{forward.1} parent=0 // pred_check
    _
  $region35: #{forward.1} parent=0 // pred_check_branch
    %48 = sbr.rel (0) target = $region37
  $region36: #{forward.1} parent=0 // pred_region
    _
  $region37: #{forward.1} parent=0 // pred_fallthru
    _
  // Predicated region
  $region38: #{forward.1} parent=0 // pred_check
    _
  $region39: #{forward.1} parent=0 // pred_check_branch
    %50 = sbr.rel (0) target = $region41
  $region40: #{forward.1} parent=0 // pred_region
    _
  $region41: #{forward.1} parent=0 // pred_fallthru
    _
  // Predicated region
  $region42: #{forward.1} parent=0 // pred_check
    _
  $region43: #{forward.1} parent=0 // pred_check_branch
    %52 = sbr.rel (0) target = $region45
  $region44: #{forward.1} parent=0 // pred_region
    _
  $region45: #{forward.1} parent=0 // pred_fallthru
    _
  // Predicated region
  $region46: #{forward.1} parent=0 // pred_check
    _
  $region47: #{forward.1} parent=0 // pred_check_branch
    %54 = sbr.rel (0) target = $region49
  $region48: #{forward.1} parent=0 // pred_region
    _
  $region49: #{forward.1} parent=0 // pred_fallthru
    _
  // Predicated region
  $region50: #{forward.1} parent=0 // pred_check
    _
  $region51: #{forward.1} parent=0 // pred_check_branch
    %56 = sbr.rel (0) target = $region53
  $region52: #{forward.1} parent=0 // pred_region
    _
  $region53: #{forward.1} parent=0 // pred_fallthru
    _
  // Predicated region
  $region54: #{forward.1} parent=0 // pred_check
    _
  $region55: #{forward.1} parent=0 // pred_check_branch
    %58 = sbr.rel (0) target = $region57
  $region56: #{forward.1} parent=0 // pred_region
    _
  $region57: #{forward.1} parent=0 // pred_fallthru
    _
  // Predicated region
  $region58: #{forward.1} parent=0 // pred_check
    _
  $region59: #{forward.1} parent=0 // pred_check_branch
    %60 = sbr.rel (0) target = $region61
  $region60: #{forward.1} parent=0 // pred_region
    _
  $region61: #{forward.1} parent=0 // pred_fallthru
    _
  // Predicated region
  $region62: #{forward.1} parent=0 // pred_check
    _
  $region63: #{forward.1} parent=0 // pred_check_branch
    %62 = sbr.rel (0) target = $region65
  $region64: #{forward.1} parent=0 // pred_region
    _
  $region65: #{forward.1} parent=0 // pred_fallthru
    _
  // Predicated region
  $region66: #{forward.1} parent=0 // pred_check
    _
  $region67: #{forward.1} parent=0 // pred_check_branch
    %64 = sbr.rel (0) target = $region69
  $region68: #{forward.1} parent=0 // pred_region
    _
  $region69: #{forward.1} parent=0 // pred_fallthru
    _
  // Predicated region
  $region70: #{forward.1} parent=0 // pred_check
    _
  $region71: #{forward.1} parent=0 // pred_check_branch
    %66 = sbr.rel (0) target = $region73
  $region72: #{forward.1} parent=0 // pred_region
    _
  $region73: #{forward.1} parent=0 // pred_fallthru
    _
  // Predicated region
  $region74: #{forward.1} parent=0 // pred_check
    _
  $region75: #{forward.1} parent=0 // pred_check_branch
    %68 = sbr.rel (0) target = $region77
  $region76: #{forward.1} parent=0 // pred_region
    _
  $region77: #{forward.1} parent=0 // pred_fallthru
    _
  // Predicated region
  $region78: #{forward.1} parent=0 // pred_check
    _
  $region79: #{forward.1} parent=0 // pred_check_branch
    %70 = sbr.rel (0) target = $region81
  $region80: #{forward.1} parent=0 // pred_region
    _
  $region81: #{forward.1} parent=0 // pred_fallthru
    _
  // Predicated region
  $region82: #{forward.1} parent=0 // pred_check
    _
  $region83: #{forward.1} parent=0 // pred_check_branch
    %72 = sbr.rel (0) target = $region85
  $region84: #{forward.1} parent=0 // pred_region
    _
  $region85: #{forward.1} parent=0 // pred_fallthru
    _
  // Predicated region
  $region86: #{forward.1} parent=0 // pred_check
    _
  $region87: #{forward.1} parent=0 // pred_check_branch
    %74 = sbr.rel (0) target = $region89
  $region88: #{forward.1} parent=0 // pred_region
    _
  $region89: #{forward.1} parent=0 // pred_fallthru
    _
  // Predicated region
  $region90: #{forward.1} parent=0 // pred_check
    _
  $region91: #{forward.1} parent=0 // pred_check_branch
    %76 = sbr.rel (0) target = $region93
  $region92: #{forward.1} parent=0 // pred_region
    _
  $region93: #{forward.1} parent=0 // pred_fallthru
    _
  // Predicated region
  $region94: #{forward.1} parent=0 // pred_check
    _
  $region95: #{forward.1} parent=0 // pred_check_branch
    %78 = sbr.rel (0) target = $region97
  $region96: #{forward.1} parent=0 // pred_region
    _
  $region97: #{forward.1} parent=0 // pred_fallthru
    _
  %v79 = vld [vmem:[%s0] sm:$0x3]
  %v80 = vld [vmem:[%s0 + $0x2] sm:$0x3]
  %v81 = vld [vmem:[%s0 + $0x4] sm:$0x3]
  %v82 = vld [vmem:[%s0 + $0x6] sm:$0x3]
  %v83 = vld [vmem:[%s2] sm:$0xff]
  %v84 = vld [vmem:[%s2 + $0x8] sm:$0xff]
  %v85 = vld [vmem:[%s2 + $0x10] sm:$0xff]
  %v86 = vld [vmem:[%s2 + $0x18] sm:$0xff]
  %v87 = vld [vmem:[%s3] sm:$0x1]
  %v88 = vld [vmem:[%s3 + $0x1] sm:$0x1]
  %v89 = vld [vmem:[%s3 + $0x2] sm:$0x1]
  %v90 = vld [vmem:[%s3 + $0x3] sm:$0x1]
  %v95 = vlaneseq
  %v96 = vshrl.u32 %v95, 7
  %v97 = vsub.s32 0, %v96
  %v98 = vrot.slane %v87, %v97
  %v99 = vlaneseq
  %v100 = vshrl.u32 %v99, 7
  %v101 = vsub.s32 0, %v100
  %v102 = vrot.slane %v88, %v101
  %v103 = vlaneseq
  %v104 = vshrl.u32 %v103, 7
  %v105 = vsub.s32 0, %v104
  %v106 = vrot.slane %v89, %v105
  %v107 = vlaneseq
  %v108 = vshrl.u32 %v107, 7
  %v109 = vsub.s32 0, %v108
  %v110 = vrot.slane %v90, %v109
  %vm115 = vcmask 64512
  %v117 = vsel %vm115, %v79, 0
  %119 = vmatprep.subr.mxu0 0.0
  %120 = vmatpush1.msra.mxu0 0.0
  %121 = vmatprep.subr.mxu0 0.0
  %122 = vmatpush1.msra.mxu0 0.0
  %123 = vmatprep.subr.mxu0 0.0
  %124 = vmatpush1.msra.mxu0 0.0
  %125 = vmatprep.subr.mxu0 0.0
  %126 = vmatpush1.msra.mxu0 0.0
  %127 = vmatprep.subr.mxu0 0.0
  %128 = vmatpush1.msra.mxu0 0.0
  %129 = vmatprep.subr.mxu0 0.0
  %130 = vmatpush1.msra.mxu0 0.0
  %131 = vmatprep.subr.mxu0 0.0
  %132 = vmatpush1.msra.mxu0 0.0
  %133 = vmatprep.subr.mxu0 0.0
  %134 = vmatpush1.msra.mxu0 0.0
  %135 = vmatprep.subr.mxu0 0.0
  %136 = vmatpush1.msra.mxu0 0.0
  %137 = vmatprep.subr.mxu0 0.0
  %138 = vmatpush1.msra.mxu0 0.0
  %139 = vmatprep.subr.mxu0 0.0
  %140 = vmatpush1.msra.mxu0 0.0
  %141 = vmatprep.subr.mxu0 0.0
  %142 = vmatpush1.msra.mxu0 0.0
  %143 = vmatprep.subr.mxu0 0.0
  %144 = vmatpush1.msra.mxu0 0.0
  %145 = vmatprep.subr.mxu0 0.0
  %146 = vmatpush1.msra.mxu0 0.0
  %147 = vmatprep.subr.mxu0 0.0
  %148 = vmatpush1.msra.mxu0 0.0
  %149 = vmatprep.subr.mxu0 0.0
  %150 = vmatpush1.msra.mxu0 %v83
  %151 = vmatprep.subr.mxu0 0.0
  %152 = vmatpush2.msra.mxu0 0.0
  %153 = vmatprep.subr.mxu0 0.0
  %154 = vmatpush2.msra.mxu0 0.0
  %155 = vmatprep.subr.mxu0 0.0
  %156 = vmatpush2.msra.mxu0 0.0
  %157 = vmatprep.subr.mxu0 0.0
  %158 = vmatpush2.msra.mxu0 0.0
  %159 = vmatprep.subr.mxu0 0.0
  %160 = vmatpush2.msra.mxu0 0.0
  %161 = vmatprep.subr.mxu0 0.0
  %162 = vmatpush2.msra.mxu0 0.0
  %163 = vmatprep.subr.mxu0 0.0
  %164 = vmatpush2.msra.mxu0 0.0
  %165 = vmatprep.subr.mxu0 0.0
  %166 = vmatpush2.msra.mxu0 0.0
  %167 = vmatprep.subr.mxu0 0.0
  %168 = vmatpush2.msra.mxu0 0.0
  %169 = vmatprep.subr.mxu0 0.0
  %170 = vmatpush2.msra.mxu0 0.0
  %171 = vmatprep.subr.mxu0 0.0
  %172 = vmatpush2.msra.mxu0 0.0
  %173 = vmatprep.subr.mxu0 0.0
  %174 = vmatpush2.msra.mxu0 0.0
  %175 = vmatprep.subr.mxu0 0.0
  %176 = vmatpush2.msra.mxu0 0.0
  %177 = vmatprep.subr.mxu0 0.0
  %178 = vmatpush2.msra.mxu0 0.0
  %179 = vmatprep.subr.mxu0 0.0
  %180 = vmatpush2.msra.mxu0 0.0
  %181 = vmatprep.subr.mxu0 0.0
  %182 = vmatpush2.msra.mxu0 0.0
  %183 = vmatprep.mubr.f32.mxu0 0.0
  %184 = vmatmul.mubr.f32.gmra.mxu0 %v117
  %v185 = vpop.f32.mrf.mxu0
  %v186 = vadd.f32 %v98, %v185
  %v187 = vpop.f32.mrf.mxu0
  %188 = vdwg.mxu0
  %v190 = vsel %vm115, %v80, 0
  %192 = vmatprep.subr.mxu0 0.0
  %193 = vmatpush1.msra.mxu0 0.0
  %194 = vmatprep.subr.mxu0 0.0
  %195 = vmatpush1.msra.mxu0 0.0
  %196 = vmatprep.subr.mxu0 0.0
  %197 = vmatpush1.msra.mxu0 0.0
  %198 = vmatprep.subr.mxu0 0.0
  %199 = vmatpush1.msra.mxu0 0.0
  %200 = vmatprep.subr.mxu0 0.0
  %201 = vmatpush1.msra.mxu0 0.0
  %202 = vmatprep.subr.mxu0 0.0
  %203 = vmatpush1.msra.mxu0 0.0
  %204 = vmatprep.subr.mxu0 0.0
  %205 = vmatpush1.msra.mxu0 0.0
  %206 = vmatprep.subr.mxu0 0.0
  %207 = vmatpush1.msra.mxu0 0.0
  %208 = vmatprep.subr.mxu0 0.0
  %209 = vmatpush1.msra.mxu0 0.0
  %210 = vmatprep.subr.mxu0 0.0
  %211 = vmatpush1.msra.mxu0 0.0
  %212 = vmatprep.subr.mxu0 0.0
  %213 = vmatpush1.msra.mxu0 0.0
  %214 = vmatprep.subr.mxu0 0.0
  %215 = vmatpush1.msra.mxu0 0.0
  %216 = vmatprep.subr.mxu0 0.0
  %217 = vmatpush1.msra.mxu0 0.0
  %218 = vmatprep.subr.mxu0 0.0
  %219 = vmatpush1.msra.mxu0 0.0
  %220 = vmatprep.subr.mxu0 0.0
  %221 = vmatpush1.msra.mxu0 0.0
  %222 = vmatprep.subr.mxu0 0.0
  %223 = vmatpush1.msra.mxu0 %v84
  %224 = vmatprep.subr.mxu0 0.0
  %225 = vmatpush2.msra.mxu0 0.0
  %226 = vmatprep.subr.mxu0 0.0
  %227 = vmatpush2.msra.mxu0 0.0
  %228 = vmatprep.subr.mxu0 0.0
  %229 = vmatpush2.msra.mxu0 0.0
  %230 = vmatprep.subr.mxu0 0.0
  %231 = vmatpush2.msra.mxu0 0.0
  %232 = vmatprep.subr.mxu0 0.0
  %233 = vmatpush2.msra.mxu0 0.0
  %234 = vmatprep.subr.mxu0 0.0
  %235 = vmatpush2.msra.mxu0 0.0
  %236 = vmatprep.subr.mxu0 0.0
  %237 = vmatpush2.msra.mxu0 0.0
  %238 = vmatprep.subr.mxu0 0.0
  %239 = vmatpush2.msra.mxu0 0.0
  %240 = vmatprep.subr.mxu0 0.0
  %241 = vmatpush2.msra.mxu0 0.0
  %242 = vmatprep.subr.mxu0 0.0
  %243 = vmatpush2.msra.mxu0 0.0
  %244 = vmatprep.subr.mxu0 0.0
  %245 = vmatpush2.msra.mxu0 0.0
  %246 = vmatprep.subr.mxu0 0.0
  %247 = vmatpush2.msra.mxu0 0.0
  %248 = vmatprep.subr.mxu0 0.0
  %249 = vmatpush2.msra.mxu0 0.0
  %250 = vmatprep.subr.mxu0 0.0
  %251 = vmatpush2.msra.mxu0 0.0
  %252 = vmatprep.subr.mxu0 0.0
  %253 = vmatpush2.msra.mxu0 0.0
  %254 = vmatprep.subr.mxu0 0.0
  %255 = vmatpush2.msra.mxu0 0.0
  %256 = vmatprep.mubr.f32.mxu0 0.0
  %257 = vmatmul.mubr.f32.gmra.mxu0 %v190
  %v258 = vpop.f32.mrf.mxu0
  %v259 = vadd.f32 %v102, %v258
  %v260 = vpop.f32.mrf.mxu0
  %261 = vdwg.mxu0
  %v263 = vsel %vm115, %v81, 0
  %265 = vmatprep.subr.mxu0 0.0
  %266 = vmatpush1.msra.mxu0 0.0
  %267 = vmatprep.subr.mxu0 0.0
  %268 = vmatpush1.msra.mxu0 0.0
  %269 = vmatprep.subr.mxu0 0.0
  %270 = vmatpush1.msra.mxu0 0.0
  %271 = vmatprep.subr.mxu0 0.0
  %272 = vmatpush1.msra.mxu0 0.0
  %273 = vmatprep.subr.mxu0 0.0
  %274 = vmatpush1.msra.mxu0 0.0
  %275 = vmatprep.subr.mxu0 0.0
  %276 = vmatpush1.msra.mxu0 0.0
  %277 = vmatprep.subr.mxu0 0.0
  %278 = vmatpush1.msra.mxu0 0.0
  %279 = vmatprep.subr.mxu0 0.0
  %280 = vmatpush1.msra.mxu0 0.0
  %281 = vmatprep.subr.mxu0 0.0
  %282 = vmatpush1.msra.mxu0 0.0
  %283 = vmatprep.subr.mxu0 0.0
  %284 = vmatpush1.msra.mxu0 0.0
  %285 = vmatprep.subr.mxu0 0.0
  %286 = vmatpush1.msra.mxu0 0.0
  %287 = vmatprep.subr.mxu0 0.0
  %288 = vmatpush1.msra.mxu0 0.0
  %289 = vmatprep.subr.mxu0 0.0
  %290 = vmatpush1.msra.mxu0 0.0
  %291 = vmatprep.subr.mxu0 0.0
  %292 = vmatpush1.msra.mxu0 0.0
  %293 = vmatprep.subr.mxu0 0.0
  %294 = vmatpush1.msra.mxu0 0.0
  %295 = vmatprep.subr.mxu0 0.0
  %296 = vmatpush1.msra.mxu0 %v85
  %297 = vmatprep.subr.mxu0 0.0
  %298 = vmatpush2.msra.mxu0 0.0
  %299 = vmatprep.subr.mxu0 0.0
  %300 = vmatpush2.msra.mxu0 0.0
  %301 = vmatprep.subr.mxu0 0.0
  %302 = vmatpush2.msra.mxu0 0.0
  %303 = vmatprep.subr.mxu0 0.0
  %304 = vmatpush2.msra.mxu0 0.0
  %305 = vmatprep.subr.mxu0 0.0
  %306 = vmatpush2.msra.mxu0 0.0
  %307 = vmatprep.subr.mxu0 0.0
  %308 = vmatpush2.msra.mxu0 0.0
  %309 = vmatprep.subr.mxu0 0.0
  %310 = vmatpush2.msra.mxu0 0.0
  %311 = vmatprep.subr.mxu0 0.0
  %312 = vmatpush2.msra.mxu0 0.0
  %313 = vmatprep.subr.mxu0 0.0
  %314 = vmatpush2.msra.mxu0 0.0
  %315 = vmatprep.subr.mxu0 0.0
  %316 = vmatpush2.msra.mxu0 0.0
  %317 = vmatprep.subr.mxu0 0.0
  %318 = vmatpush2.msra.mxu0 0.0
  %319 = vmatprep.subr.mxu0 0.0
  %320 = vmatpush2.msra.mxu0 0.0
  %321 = vmatprep.subr.mxu0 0.0
  %322 = vmatpush2.msra.mxu0 0.0
  %323 = vmatprep.subr.mxu0 0.0
  %324 = vmatpush2.msra.mxu0 0.0
  %325 = vmatprep.subr.mxu0 0.0
  %326 = vmatpush2.msra.mxu0 0.0
  %327 = vmatprep.subr.mxu0 0.0
  %328 = vmatpush2.msra.mxu0 0.0
  %329 = vmatprep.mubr.f32.mxu0 0.0
  %330 = vmatmul.mubr.f32.gmra.mxu0 %v263
  %v331 = vpop.f32.mrf.mxu0
  %v332 = vadd.f32 %v106, %v331
  %v333 = vpop.f32.mrf.mxu0
  %334 = vdwg.mxu0
  %v336 = vsel %vm115, %v82, 0
  %338 = vmatprep.subr.mxu0 0.0
  %339 = vmatpush1.msra.mxu0 0.0
  %340 = vmatprep.subr.mxu0 0.0
  %341 = vmatpush1.msra.mxu0 0.0
  %342 = vmatprep.subr.mxu0 0.0
  %343 = vmatpush1.msra.mxu0 0.0
  %344 = vmatprep.subr.mxu0 0.0
  %345 = vmatpush1.msra.mxu0 0.0
  %346 = vmatprep.subr.mxu0 0.0
  %347 = vmatpush1.msra.mxu0 0.0
  %348 = vmatprep.subr.mxu0 0.0
  %349 = vmatpush1.msra.mxu0 0.0
  %350 = vmatprep.subr.mxu0 0.0
  %351 = vmatpush1.msra.mxu0 0.0
  %352 = vmatprep.subr.mxu0 0.0
  %353 = vmatpush1.msra.mxu0 0.0
  %354 = vmatprep.subr.mxu0 0.0
  %355 = vmatpush1.msra.mxu0 0.0
  %356 = vmatprep.subr.mxu0 0.0
  %357 = vmatpush1.msra.mxu0 0.0
  %358 = vmatprep.subr.mxu0 0.0
  %359 = vmatpush1.msra.mxu0 0.0
  %360 = vmatprep.subr.mxu0 0.0
  %361 = vmatpush1.msra.mxu0 0.0
  %362 = vmatprep.subr.mxu0 0.0
  %363 = vmatpush1.msra.mxu0 0.0
  %364 = vmatprep.subr.mxu0 0.0
  %365 = vmatpush1.msra.mxu0 0.0
  %366 = vmatprep.subr.mxu0 0.0
  %367 = vmatpush1.msra.mxu0 0.0
  %368 = vmatprep.subr.mxu0 0.0
  %369 = vmatpush1.msra.mxu0 %v86
  %370 = vmatprep.subr.mxu0 0.0
  %371 = vmatpush2.msra.mxu0 0.0
  %372 = vmatprep.subr.mxu0 0.0
  %373 = vmatpush2.msra.mxu0 0.0
  %374 = vmatprep.subr.mxu0 0.0
  %375 = vmatpush2.msra.mxu0 0.0
  %376 = vmatprep.subr.mxu0 0.0
  %377 = vmatpush2.msra.mxu0 0.0
  %378 = vmatprep.subr.mxu0 0.0
  %379 = vmatpush2.msra.mxu0 0.0
  %380 = vmatprep.subr.mxu0 0.0
  %381 = vmatpush2.msra.mxu0 0.0
  %382 = vmatprep.subr.mxu0 0.0
  %383 = vmatpush2.msra.mxu0 0.0
  %384 = vmatprep.subr.mxu0 0.0
  %385 = vmatpush2.msra.mxu0 0.0
  %386 = vmatprep.subr.mxu0 0.0
  %387 = vmatpush2.msra.mxu0 0.0
  %388 = vmatprep.subr.mxu0 0.0
  %389 = vmatpush2.msra.mxu0 0.0
  %390 = vmatprep.subr.mxu0 0.0
  %391 = vmatpush2.msra.mxu0 0.0
  %392 = vmatprep.subr.mxu0 0.0
  %393 = vmatpush2.msra.mxu0 0.0
  %394 = vmatprep.subr.mxu0 0.0
  %395 = vmatpush2.msra.mxu0 0.0
  %396 = vmatprep.subr.mxu0 0.0
  %397 = vmatpush2.msra.mxu0 0.0
  %398 = vmatprep.subr.mxu0 0.0
  %399 = vmatpush2.msra.mxu0 0.0
  %400 = vmatprep.subr.mxu0 0.0
  %401 = vmatpush2.msra.mxu0 0.0
  %402 = vmatprep.mubr.f32.mxu0 0.0
  %403 = vmatmul.mubr.f32.gmra.mxu0 %v336
  %v404 = vpop.f32.mrf.mxu0
  %v405 = vadd.f32 %v110, %v404
  %v406 = vpop.f32.mrf.mxu0
  %407 = vdwg.mxu0
  %408 = vst [vmem:[#allocation2] sm:$0x3] %v186
  %409 = vst [vmem:[#allocation2 + $0x2] sm:$0x3] %v259
  %410 = vst [vmem:[#allocation2 + $0x4] sm:$0x3] %v332
  %411 = vst [vmem:[#allocation2 + $0x6] sm:$0x3] %v405
  %v412 = vld [vmem:[%s1] sm:$0x3]
  %v413 = vld [vmem:[%s1 + $0x2] sm:$0x3]
  %v414 = vld [vmem:[%s1 + $0x4] sm:$0x3]
  %v415 = vld [vmem:[%s1 + $0x6] sm:$0x3]
  %v416 = vld [vmem:[%s4] sm:$0xff]
  %v417 = vld [vmem:[%s4 + $0x8] sm:$0xff]
  %v418 = vld [vmem:[%s4 + $0x10] sm:$0xff]
  %v419 = vld [vmem:[%s4 + $0x18] sm:$0xff]
  %v420 = vld [vmem:[%s4 + $0x20] sm:$0xff]
  %v421 = vld [vmem:[%s4 + $0x28] sm:$0xff]
  %v422 = vld [vmem:[%s4 + $0x30] sm:$0xff]
  %v423 = vld [vmem:[%s4 + $0x38] sm:$0xff]
  %v424 = vld [vmem:[%s4 + $0x40] sm:$0xff]
  %v425 = vld [vmem:[%s4 + $0x48] sm:$0xff]
  %v426 = vld [vmem:[%s4 + $0x50] sm:$0xff]
  %v427 = vld [vmem:[%s4 + $0x58] sm:$0xff]
  %v428 = vld [vmem:[%s4 + $0x60] sm:$0xff]
  %v429 = vld [vmem:[%s4 + $0x68] sm:$0xff]
  %v430 = vld [vmem:[%s4 + $0x70] sm:$0xff]
  %v431 = vld [vmem:[%s4 + $0x78] sm:$0xff]
  %v432 = vld [vmem:[%s5] sm:$0x3]
  %v433 = vld [vmem:[%s5 + $0x2] sm:$0x3]
  %v434 = vld [vmem:[%s5 + $0x4] sm:$0x3]
  %v435 = vld [vmem:[%s5 + $0x6] sm:$0x3]
  %v440 = vlaneseq
  %v441 = vshrl.u32 %v440, 7
  %v442 = vsub.s32 0, %v441
  %v443 = vrot.slane %v432, %v442
  %v444 = vlaneseq
  %v445 = vshrl.u32 %v444, 7
  %v446 = vsub.s32 1, %v445
  %v447 = vrot.slane %v432, %v446
  %v448 = vlaneseq
  %v449 = vshrl.u32 %v448, 7
  %v450 = vsub.s32 0, %v449
  %v451 = vrot.slane %v433, %v450
  %v452 = vlaneseq
  %v453 = vshrl.u32 %v452, 7
  %v454 = vsub.s32 1, %v453
  %v455 = vrot.slane %v433, %v454
  %v456 = vlaneseq
  %v457 = vshrl.u32 %v456, 7
  %v458 = vsub.s32 0, %v457
  %v459 = vrot.slane %v434, %v458
  %v460 = vlaneseq
  %v461 = vshrl.u32 %v460, 7
  %v462 = vsub.s32 1, %v461
  %v463 = vrot.slane %v434, %v462
  %v464 = vlaneseq
  %v465 = vshrl.u32 %v464, 7
  %v466 = vsub.s32 0, %v465
  %v467 = vrot.slane %v435, %v466
  %v468 = vlaneseq
  %v469 = vshrl.u32 %v468, 7
  %v470 = vsub.s32 1, %v469
  %v471 = vrot.slane %v435, %v470
  %vm480 = vcmask 130048
  %v482 = vsel %vm480, %v412, 0
  %484 = vmatprep.subr.mxu0 0.0
  %485 = vmatpush1.msra.mxu0 0.0
  %486 = vmatprep.subr.mxu0 0.0
  %487 = vmatpush1.msra.mxu0 0.0
  %488 = vmatprep.subr.mxu0 0.0
  %489 = vmatpush1.msra.mxu0 0.0
  %490 = vmatprep.subr.mxu0 0.0
  %491 = vmatpush1.msra.mxu0 0.0
  %492 = vmatprep.subr.mxu0 0.0
  %493 = vmatpush1.msra.mxu0 0.0
  %494 = vmatprep.subr.mxu0 0.0
  %495 = vmatpush1.msra.mxu0 0.0
  %496 = vmatprep.subr.mxu0 0.0
  %497 = vmatpush1.msra.mxu0 0.0
  %498 = vmatprep.subr.mxu0 0.0
  %499 = vmatpush1.msra.mxu0 0.0
  %500 = vmatprep.subr.mxu0 0.0
  %501 = vmatpush1.msra.mxu0 0.0
  %502 = vmatprep.subr.mxu0 0.0
  %503 = vmatpush1.msra.mxu0 0.0
  %504 = vmatprep.subr.mxu0 0.0
  %505 = vmatpush1.msra.mxu0 0.0
  %506 = vmatprep.subr.mxu0 0.0
  %507 = vmatpush1.msra.mxu0 0.0
  %508 = vmatprep.subr.mxu0 0.0
  %509 = vmatpush1.msra.mxu0 0.0
  %510 = vmatprep.subr.mxu0 0.0
  %511 = vmatpush1.msra.mxu0 0.0
  %512 = vmatprep.subr.mxu0 %v419
  %513 = vmatpush1.msra.mxu0 %v418
  %514 = vmatprep.subr.mxu0 %v417
  %515 = vmatpush1.msra.mxu0 %v416
  %516 = vmatprep.subr.mxu0 0.0
  %517 = vmatpush2.msra.mxu0 0.0
  %518 = vmatprep.subr.mxu0 0.0
  %519 = vmatpush2.msra.mxu0 0.0
  %520 = vmatprep.subr.mxu0 0.0
  %521 = vmatpush2.msra.mxu0 0.0
  %522 = vmatprep.subr.mxu0 0.0
  %523 = vmatpush2.msra.mxu0 0.0
  %524 = vmatprep.subr.mxu0 0.0
  %525 = vmatpush2.msra.mxu0 0.0
  %526 = vmatprep.subr.mxu0 0.0
  %527 = vmatpush2.msra.mxu0 0.0
  %528 = vmatprep.subr.mxu0 0.0
  %529 = vmatpush2.msra.mxu0 0.0
  %530 = vmatprep.subr.mxu0 0.0
  %531 = vmatpush2.msra.mxu0 0.0
  %532 = vmatprep.subr.mxu0 0.0
  %533 = vmatpush2.msra.mxu0 0.0
  %534 = vmatprep.subr.mxu0 0.0
  %535 = vmatpush2.msra.mxu0 0.0
  %536 = vmatprep.subr.mxu0 0.0
  %537 = vmatpush2.msra.mxu0 0.0
  %538 = vmatprep.subr.mxu0 0.0
  %539 = vmatpush2.msra.mxu0 0.0
  %540 = vmatprep.subr.mxu0 0.0
  %541 = vmatpush2.msra.mxu0 0.0
  %542 = vmatprep.subr.mxu0 0.0
  %543 = vmatpush2.msra.mxu0 0.0
  %544 = vmatprep.subr.mxu0 0.0
  %545 = vmatpush2.msra.mxu0 0.0
  %546 = vmatprep.subr.mxu0 0.0
  %547 = vmatpush2.msra.mxu0 0.0
  %548 = vmatprep.mubr.f32.mxu0 0.0
  %549 = vmatmul.mubr.f32.gmra.mxu0 %v482
  %v550 = vpop.f32.mrf.mxu0
  %v551 = vadd.f32 %v443, %v550
  %v552 = vpop.f32.mrf.mxu0
  %v553 = vadd.f32 %v447, %v552
  %554 = vdwg.mxu0
  %v556 = vsel %vm480, %v413, 0
  %558 = vmatprep.subr.mxu0 0.0
  %559 = vmatpush1.msra.mxu0 0.0
  %560 = vmatprep.subr.mxu0 0.0
  %561 = vmatpush1.msra.mxu0 0.0
  %562 = vmatprep.subr.mxu0 0.0
  %563 = vmatpush1.msra.mxu0 0.0
  %564 = vmatprep.subr.mxu0 0.0
  %565 = vmatpush1.msra.mxu0 0.0
  %566 = vmatprep.subr.mxu0 0.0
  %567 = vmatpush1.msra.mxu0 0.0
  %568 = vmatprep.subr.mxu0 0.0
  %569 = vmatpush1.msra.mxu0 0.0
  %570 = vmatprep.subr.mxu0 0.0
  %571 = vmatpush1.msra.mxu0 0.0
  %572 = vmatprep.subr.mxu0 0.0
  %573 = vmatpush1.msra.mxu0 0.0
  %574 = vmatprep.subr.mxu0 0.0
  %575 = vmatpush1.msra.mxu0 0.0
  %576 = vmatprep.subr.mxu0 0.0
  %577 = vmatpush1.msra.mxu0 0.0
  %578 = vmatprep.subr.mxu0 0.0
  %579 = vmatpush1.msra.mxu0 0.0
  %580 = vmatprep.subr.mxu0 0.0
  %581 = vmatpush1.msra.mxu0 0.0
  %582 = vmatprep.subr.mxu0 0.0
  %583 = vmatpush1.msra.mxu0 0.0
  %584 = vmatprep.subr.mxu0 0.0
  %585 = vmatpush1.msra.mxu0 0.0
  %586 = vmatprep.subr.mxu0 %v423
  %587 = vmatpush1.msra.mxu0 %v422
  %588 = vmatprep.subr.mxu0 %v421
  %589 = vmatpush1.msra.mxu0 %v420
  %590 = vmatprep.subr.mxu0 0.0
  %591 = vmatpush2.msra.mxu0 0.0
  %592 = vmatprep.subr.mxu0 0.0
  %593 = vmatpush2.msra.mxu0 0.0
  %594 = vmatprep.subr.mxu0 0.0
  %595 = vmatpush2.msra.mxu0 0.0
  %596 = vmatprep.subr.mxu0 0.0
  %597 = vmatpush2.msra.mxu0 0.0
  %598 = vmatprep.subr.mxu0 0.0
  %599 = vmatpush2.msra.mxu0 0.0
  %600 = vmatprep.subr.mxu0 0.0
  %601 = vmatpush2.msra.mxu0 0.0
  %602 = vmatprep.subr.mxu0 0.0
  %603 = vmatpush2.msra.mxu0 0.0
  %604 = vmatprep.subr.mxu0 0.0
  %605 = vmatpush2.msra.mxu0 0.0
  %606 = vmatprep.subr.mxu0 0.0
  %607 = vmatpush2.msra.mxu0 0.0
  %608 = vmatprep.subr.mxu0 0.0
  %609 = vmatpush2.msra.mxu0 0.0
  %610 = vmatprep.subr.mxu0 0.0
  %611 = vmatpush2.msra.mxu0 0.0
  %612 = vmatprep.subr.mxu0 0.0
  %613 = vmatpush2.msra.mxu0 0.0
  %614 = vmatprep.subr.mxu0 0.0
  %615 = vmatpush2.msra.mxu0 0.0
  %616 = vmatprep.subr.mxu0 0.0
  %617 = vmatpush2.msra.mxu0 0.0
  %618 = vmatprep.subr.mxu0 0.0
  %619 = vmatpush2.msra.mxu0 0.0
  %620 = vmatprep.subr.mxu0 0.0
  %621 = vmatpush2.msra.mxu0 0.0
  %622 = vmatprep.mubr.f32.mxu0 0.0
  %623 = vmatmul.mubr.f32.gmra.mxu0 %v556
  %v624 = vpop.f32.mrf.mxu0
  %v625 = vadd.f32 %v451, %v624
  %v626 = vpop.f32.mrf.mxu0
  %v627 = vadd.f32 %v455, %v626
  %628 = vdwg.mxu0
  %v630 = vsel %vm480, %v414, 0
  %632 = vmatprep.subr.mxu0 0.0
  %633 = vmatpush1.msra.mxu0 0.0
  %634 = vmatprep.subr.mxu0 0.0
  %635 = vmatpush1.msra.mxu0 0.0
  %636 = vmatprep.subr.mxu0 0.0
  %637 = vmatpush1.msra.mxu0 0.0
  %638 = vmatprep.subr.mxu0 0.0
  %639 = vmatpush1.msra.mxu0 0.0
  %640 = vmatprep.subr.mxu0 0.0
  %641 = vmatpush1.msra.mxu0 0.0
  %642 = vmatprep.subr.mxu0 0.0
  %643 = vmatpush1.msra.mxu0 0.0
  %644 = vmatprep.subr.mxu0 0.0
  %645 = vmatpush1.msra.mxu0 0.0
  %646 = vmatprep.subr.mxu0 0.0
  %647 = vmatpush1.msra.mxu0 0.0
  %648 = vmatprep.subr.mxu0 0.0
  %649 = vmatpush1.msra.mxu0 0.0
  %650 = vmatprep.subr.mxu0 0.0
  %651 = vmatpush1.msra.mxu0 0.0
  %652 = vmatprep.subr.mxu0 0.0
  %653 = vmatpush1.msra.mxu0 0.0
  %654 = vmatprep.subr.mxu0 0.0
  %655 = vmatpush1.msra.mxu0 0.0
  %656 = vmatprep.subr.mxu0 0.0
  %657 = vmatpush1.msra.mxu0 0.0
  %658 = vmatprep.subr.mxu0 0.0
  %659 = vmatpush1.msra.mxu0 0.0
  %660 = vmatprep.subr.mxu0 %v427
  %661 = vmatpush1.msra.mxu0 %v426
  %662 = vmatprep.subr.mxu0 %v425
  %663 = vmatpush1.msra.mxu0 %v424
  %664 = vmatprep.subr.mxu0 0.0
  %665 = vmatpush2.msra.mxu0 0.0
  %666 = vmatprep.subr.mxu0 0.0
  %667 = vmatpush2.msra.mxu0 0.0
  %668 = vmatprep.subr.mxu0 0.0
  %669 = vmatpush2.msra.mxu0 0.0
  %670 = vmatprep.subr.mxu0 0.0
  %671 = vmatpush2.msra.mxu0 0.0
  %672 = vmatprep.subr.mxu0 0.0
  %673 = vmatpush2.msra.mxu0 0.0
  %674 = vmatprep.subr.mxu0 0.0
  %675 = vmatpush2.msra.mxu0 0.0
  %676 = vmatprep.subr.mxu0 0.0
  %677 = vmatpush2.msra.mxu0 0.0
  %678 = vmatprep.subr.mxu0 0.0
  %679 = vmatpush2.msra.mxu0 0.0
  %680 = vmatprep.subr.mxu0 0.0
  %681 = vmatpush2.msra.mxu0 0.0
  %682 = vmatprep.subr.mxu0 0.0
  %683 = vmatpush2.msra.mxu0 0.0
  %684 = vmatprep.subr.mxu0 0.0
  %685 = vmatpush2.msra.mxu0 0.0
  %686 = vmatprep.subr.mxu0 0.0
  %687 = vmatpush2.msra.mxu0 0.0
  %688 = vmatprep.subr.mxu0 0.0
  %689 = vmatpush2.msra.mxu0 0.0
  %690 = vmatprep.subr.mxu0 0.0
  %691 = vmatpush2.msra.mxu0 0.0
  %692 = vmatprep.subr.mxu0 0.0
  %693 = vmatpush2.msra.mxu0 0.0
  %694 = vmatprep.subr.mxu0 0.0
  %695 = vmatpush2.msra.mxu0 0.0
  %696 = vmatprep.mubr.f32.mxu0 0.0
  %697 = vmatmul.mubr.f32.gmra.mxu0 %v630
  %v698 = vpop.f32.mrf.mxu0
  %v699 = vadd.f32 %v459, %v698
  %v700 = vpop.f32.mrf.mxu0
  %v701 = vadd.f32 %v463, %v700
  %702 = vdwg.mxu0
  %v704 = vsel %vm480, %v415, 0
  %706 = vmatprep.subr.mxu0 0.0
  %707 = vmatpush1.msra.mxu0 0.0
  %708 = vmatprep.subr.mxu0 0.0
  %709 = vmatpush1.msra.mxu0 0.0
  %710 = vmatprep.subr.mxu0 0.0
  %711 = vmatpush1.msra.mxu0 0.0
  %712 = vmatprep.subr.mxu0 0.0
  %713 = vmatpush1.msra.mxu0 0.0
  %714 = vmatprep.subr.mxu0 0.0
  %715 = vmatpush1.msra.mxu0 0.0
  %716 = vmatprep.subr.mxu0 0.0
  %717 = vmatpush1.msra.mxu0 0.0
  %718 = vmatprep.subr.mxu0 0.0
  %719 = vmatpush1.msra.mxu0 0.0
  %720 = vmatprep.subr.mxu0 0.0
  %721 = vmatpush1.msra.mxu0 0.0
  %722 = vmatprep.subr.mxu0 0.0
  %723 = vmatpush1.msra.mxu0 0.0
  %724 = vmatprep.subr.mxu0 0.0
  %725 = vmatpush1.msra.mxu0 0.0
  %726 = vmatprep.subr.mxu0 0.0
  %727 = vmatpush1.msra.mxu0 0.0
  %728 = vmatprep.subr.mxu0 0.0
  %729 = vmatpush1.msra.mxu0 0.0
  %730 = vmatprep.subr.mxu0 0.0
  %731 = vmatpush1.msra.mxu0 0.0
  %732 = vmatprep.subr.mxu0 0.0
  %733 = vmatpush1.msra.mxu0 0.0
  %734 = vmatprep.subr.mxu0 %v431
  %735 = vmatpush1.msra.mxu0 %v430
  %736 = vmatprep.subr.mxu0 %v429
  %737 = vmatpush1.msra.mxu0 %v428
  %738 = vmatprep.subr.mxu0 0.0
  %739 = vmatpush2.msra.mxu0 0.0
  %740 = vmatprep.subr.mxu0 0.0
  %741 = vmatpush2.msra.mxu0 0.0
  %742 = vmatprep.subr.mxu0 0.0
  %743 = vmatpush2.msra.mxu0 0.0
  %744 = vmatprep.subr.mxu0 0.0
  %745 = vmatpush2.msra.mxu0 0.0
  %746 = vmatprep.subr.mxu0 0.0
  %747 = vmatpush2.msra.mxu0 0.0
  %748 = vmatprep.subr.mxu0 0.0
  %749 = vmatpush2.msra.mxu0 0.0
  %750 = vmatprep.subr.mxu0 0.0
  %751 = vmatpush2.msra.mxu0 0.0
  %752 = vmatprep.subr.mxu0 0.0
  %753 = vmatpush2.msra.mxu0 0.0
  %754 = vmatprep.subr.mxu0 0.0
  %755 = vmatpush2.msra.mxu0 0.0
  %756 = vmatprep.subr.mxu0 0.0
  %757 = vmatpush2.msra.mxu0 0.0
  %758 = vmatprep.subr.mxu0 0.0
  %759 = vmatpush2.msra.mxu0 0.0
  %760 = vmatprep.subr.mxu0 0.0
  %761 = vmatpush2.msra.mxu0 0.0
  %762 = vmatprep.subr.mxu0 0.0
  %763 = vmatpush2.msra.mxu0 0.0
  %764 = vmatprep.subr.mxu0 0.0
  %765 = vmatpush2.msra.mxu0 0.0
  %766 = vmatprep.subr.mxu0 0.0
  %767 = vmatpush2.msra.mxu0 0.0
  %768 = vmatprep.subr.mxu0 0.0
  %769 = vmatpush2.msra.mxu0 0.0
  %770 = vmatprep.mubr.f32.mxu0 0.0
  %771 = vmatmul.mubr.f32.gmra.mxu0 %v704
  %v772 = vpop.f32.mrf.mxu0
  %v773 = vadd.f32 %v467, %v772
  %v774 = vpop.f32.mrf.mxu0
  %v775 = vadd.f32 %v471, %v774
  %776 = vdwg.mxu0
  %v785 = vcombine.low %v551, %v553
  %v787 = vunpack.c.l.s4 1983009808
  %v788 = vunpack.c.0.s8 %v787
  %v789 = vlaneseq
  %v790 = vshrl.u32 %v789, 7
  %v791 = vsub.s32 %v788, %v790
  %v792 = vrot.slane %v785, %v791
  %v793 = vcombine.low %v625, %v627
  %v795 = vunpack.c.l.s4 1983009808
  %v796 = vunpack.c.0.s8 %v795
  %v797 = vlaneseq
  %v798 = vshrl.u32 %v797, 7
  %v799 = vsub.s32 %v796, %v798
  %v800 = vrot.slane %v793, %v799
  %v801 = vcombine.low %v699, %v701
  %v803 = vunpack.c.l.s4 1983009808
  %v804 = vunpack.c.0.s8 %v803
  %v805 = vlaneseq
  %v806 = vshrl.u32 %v805, 7
  %v807 = vsub.s32 %v804, %v806
  %v808 = vrot.slane %v801, %v807
  %v809 = vcombine.low %v773, %v775
  %v811 = vunpack.c.l.s4 1983009808
  %v812 = vunpack.c.0.s8 %v811
  %v813 = vlaneseq
  %v814 = vshrl.u32 %v813, 7
  %v815 = vsub.s32 %v812, %v814
  %v816 = vrot.slane %v809, %v815
  %821 = vst [vmem:[#allocation3] sm:$0xf] %v792
  %822 = vst [vmem:[#allocation3 + $0x4] sm:$0xf] %v800
  %823 = vst [vmem:[#allocation3 + $0x8] sm:$0xf] %v808
  %824 = vst [vmem:[#allocation3 + $0xc] sm:$0xf] %v816
  %v825 = vld [vmem:[#allocation2] sm:$0x3]
  %v826 = vld [vmem:[%s6] sm:$0xff]
  %v827 = vld [vmem:[%s6 + $0x8] sm:$0xff]
  %v828 = vld [vmem:[%s6 + $0x10] sm:$0xff]
  %v829 = vld [vmem:[%s6 + $0x18] sm:$0xff]
  %vm830 = vcmask 261120
  %v832 = vsel %vm830, 0.0, 0
  %834 = vmatprep.subr.mxu0 0.0
  %835 = vmatpush1.msra.mxu0 0.0
  %836 = vmatprep.subr.mxu0 0.0
  %837 = vmatpush1.msra.mxu0 0.0
  %838 = vmatprep.subr.mxu0 0.0
  %839 = vmatpush1.msra.mxu0 0.0
  %840 = vmatprep.subr.mxu0 0.0
  %841 = vmatpush1.msra.mxu0 0.0
  %842 = vmatprep.subr.mxu0 0.0
  %843 = vmatpush1.msra.mxu0 0.0
  %844 = vmatprep.subr.mxu0 0.0
  %845 = vmatpush1.msra.mxu0 0.0
  %846 = vmatprep.subr.mxu0 0.0
  %847 = vmatpush1.msra.mxu0 0.0
  %848 = vmatprep.subr.mxu0 0.0
  %849 = vmatpush1.msra.mxu0 0.0
  %850 = vmatprep.subr.mxu0 0.0
  %851 = vmatpush1.msra.mxu0 0.0
  %852 = vmatprep.subr.mxu0 0.0
  %853 = vmatpush1.msra.mxu0 0.0
  %854 = vmatprep.subr.mxu0 0.0
  %855 = vmatpush1.msra.mxu0 0.0
  %856 = vmatprep.subr.mxu0 0.0
  %857 = vmatpush1.msra.mxu0 0.0
  %858 = vmatprep.subr.mxu0 0.0
  %859 = vmatpush1.msra.mxu0 %v829
  %860 = vmatprep.subr.mxu0 0.0
  %861 = vmatpush1.msra.mxu0 %v828
  %862 = vmatprep.subr.mxu0 0.0
  %863 = vmatpush1.msra.mxu0 %v827
  %864 = vmatprep.subr.mxu0 0.0
  %865 = vmatpush1.msra.mxu0 %v826
  %866 = vmatprep.subr.mxu0 0.0
  %867 = vmatpush2.msra.mxu0 0.0
  %868 = vmatprep.subr.mxu0 0.0
  %869 = vmatpush2.msra.mxu0 0.0
  %870 = vmatprep.subr.mxu0 0.0
  %871 = vmatpush2.msra.mxu0 0.0
  %872 = vmatprep.subr.mxu0 0.0
  %873 = vmatpush2.msra.mxu0 0.0
  %874 = vmatprep.subr.mxu0 0.0
  %875 = vmatpush2.msra.mxu0 0.0
  %876 = vmatprep.subr.mxu0 0.0
  %877 = vmatpush2.msra.mxu0 0.0
  %878 = vmatprep.subr.mxu0 0.0
  %879 = vmatpush2.msra.mxu0 0.0
  %880 = vmatprep.subr.mxu0 0.0
  %881 = vmatpush2.msra.mxu0 0.0
  %882 = vmatprep.subr.mxu0 0.0
  %883 = vmatpush2.msra.mxu0 0.0
  %884 = vmatprep.subr.mxu0 0.0
  %885 = vmatpush2.msra.mxu0 0.0
  %886 = vmatprep.subr.mxu0 0.0
  %887 = vmatpush2.msra.mxu0 0.0
  %888 = vmatprep.subr.mxu0 0.0
  %889 = vmatpush2.msra.mxu0 0.0
  %890 = vmatprep.subr.mxu0 0.0
  %891 = vmatpush2.msra.mxu0 0.0
  %892 = vmatprep.subr.mxu0 0.0
  %893 = vmatpush2.msra.mxu0 0.0
  %894 = vmatprep.subr.mxu0 0.0
  %895 = vmatpush2.msra.mxu0 0.0
  %896 = vmatprep.subr.mxu0 0.0
  %897 = vmatpush2.msra.mxu0 0.0
  %898 = vmatprep.mubr.f32.mxu0 0.0
  %899 = vmatmul.mubr.f32.gmra.mxu0 %v832
  %v900 = vpop.f32.mrf.mxu0
  %v901 = vadd.f32 0.0, %v900
  %v902 = vpop.f32.mrf.mxu0
  %903 = vdwg.mxu0
  %v904 = vadd.f32 %v825, %v901
  %v905 = vxor.u32 %v904, 2147483648
  %v906 = vmul.f32 %v905, 1.442695
  %v907 = vpow.pop %v906
  %v908 = vadd.f32 %v907, 1.0
  %v909 = vrcp.pop %v908
  %v910 = vmul.f32 1.0, %v909
  %v911 = vtanh.pop %v904
  %v912 = vmul.f32 %v910, 0.0
  %914 = vrot.lane.b32.xlu0 %v911, 64
  %v915 = vpop.permute.xlu0 %914
  %v917 = vmul.f32 %v910, %v915
  %919 = vrot.lane.b32.xlu0 %v917, 32
  %v920 = vpop.permute.xlu0 %919
  %v922 = vadd.f32 %v912, %v920
  %v923 = vtanh.pop %v922
  %925 = vrot.lane.b32.xlu0 %v923, 64
  %v926 = vpop.permute.xlu0 %925
  %v928 = vmul.f32 %v910, %v926
  %v929 = vld [vmem:[#allocation3] sm:$0xf]
  %v930 = vld [vmem:[%s7] sm:$0xff]
  %v931 = vld [vmem:[%s7 + $0x8] sm:$0xff]
  %v932 = vld [vmem:[%s7 + $0x10] sm:$0xff]
  %v933 = vld [vmem:[%s7 + $0x18] sm:$0xff]
  %v934 = vld [vmem:[%s7 + $0x20] sm:$0xff]
  %v935 = vld [vmem:[%s7 + $0x28] sm:$0xff]
  %v936 = vld [vmem:[%s7 + $0x30] sm:$0xff]
  %v937 = vld [vmem:[%s7 + $0x38] sm:$0xff]
  %v938 = vld [vmem:[%s7 + $0x40] sm:$0xff]
  %v939 = vld [vmem:[%s7 + $0x48] sm:$0xff]
  %v940 = vld [vmem:[%s7 + $0x50] sm:$0xff]
  %v941 = vld [vmem:[%s7 + $0x58] sm:$0xff]
  %v942 = vld [vmem:[%s7 + $0x60] sm:$0xff]
  %v943 = vld [vmem:[%s7 + $0x68] sm:$0xff]
  %v944 = vld [vmem:[%s7 + $0x70] sm:$0xff]
  %v945 = vld [vmem:[%s7 + $0x78] sm:$0xff]
  %vm946 = vcmask 523264
  %v947 = vsel %vm946, 0.0, 0
  %949 = vmatprep.subr.mxu0 0.0
  %950 = vmatpush1.msra.mxu0 0.0
  %951 = vmatprep.subr.mxu0 0.0
  %952 = vmatpush1.msra.mxu0 0.0
  %953 = vmatprep.subr.mxu0 0.0
  %954 = vmatpush1.msra.mxu0 0.0
  %955 = vmatprep.subr.mxu0 0.0
  %956 = vmatpush1.msra.mxu0 0.0
  %957 = vmatprep.subr.mxu0 0.0
  %958 = vmatpush1.msra.mxu0 0.0
  %959 = vmatprep.subr.mxu0 0.0
  %960 = vmatpush1.msra.mxu0 0.0
  %961 = vmatprep.subr.mxu0 0.0
  %962 = vmatpush1.msra.mxu0 0.0
  %963 = vmatprep.subr.mxu0 0.0
  %964 = vmatpush1.msra.mxu0 0.0
  %965 = vmatprep.subr.mxu0 %v945
  %966 = vmatpush1.msra.mxu0 %v944
  %967 = vmatprep.subr.mxu0 %v943
  %968 = vmatpush1.msra.mxu0 %v942
  %969 = vmatprep.subr.mxu0 %v941
  %970 = vmatpush1.msra.mxu0 %v940
  %971 = vmatprep.subr.mxu0 %v939
  %972 = vmatpush1.msra.mxu0 %v938
  %973 = vmatprep.subr.mxu0 %v937
  %974 = vmatpush1.msra.mxu0 %v936
  %975 = vmatprep.subr.mxu0 %v935
  %976 = vmatpush1.msra.mxu0 %v934
  %977 = vmatprep.subr.mxu0 %v933
  %978 = vmatpush1.msra.mxu0 %v932
  %979 = vmatprep.subr.mxu0 %v931
  %980 = vmatpush1.msra.mxu0 %v930
  %981 = vmatprep.subr.mxu0 0.0
  %982 = vmatpush2.msra.mxu0 0.0
  %983 = vmatprep.subr.mxu0 0.0
  %984 = vmatpush2.msra.mxu0 0.0
  %985 = vmatprep.subr.mxu0 0.0
  %986 = vmatpush2.msra.mxu0 0.0
  %987 = vmatprep.subr.mxu0 0.0
  %988 = vmatpush2.msra.mxu0 0.0
  %989 = vmatprep.subr.mxu0 0.0
  %990 = vmatpush2.msra.mxu0 0.0
  %991 = vmatprep.subr.mxu0 0.0
  %992 = vmatpush2.msra.mxu0 0.0
  %993 = vmatprep.subr.mxu0 0.0
  %994 = vmatpush2.msra.mxu0 0.0
  %995 = vmatprep.subr.mxu0 0.0
  %996 = vmatpush2.msra.mxu0 0.0
  %997 = vmatprep.subr.mxu0 0.0
  %998 = vmatpush2.msra.mxu0 0.0
  %999 = vmatprep.subr.mxu0 0.0
  %1000 = vmatpush2.msra.mxu0 0.0
  %1001 = vmatprep.subr.mxu0 0.0
  %1002 = vmatpush2.msra.mxu0 0.0
  %1003 = vmatprep.subr.mxu0 0.0
  %1004 = vmatpush2.msra.mxu0 0.0
  %1005 = vmatprep.subr.mxu0 0.0
  %1006 = vmatpush2.msra.mxu0 0.0
  %1007 = vmatprep.subr.mxu0 0.0
  %1008 = vmatpush2.msra.mxu0 0.0
  %1009 = vmatprep.subr.mxu0 0.0
  %1010 = vmatpush2.msra.mxu0 0.0
  %1011 = vmatprep.subr.mxu0 0.0
  %1012 = vmatpush2.msra.mxu0 0.0
  %1013 = vmatprep.mubr.f32.mxu0 0.0
  %1014 = vmatmul.mubr.f32.gmra.mxu0 %v947
  %v1015 = vpop.f32.mrf.mxu0
  %v1016 = vadd.f32 0.0, %v1015
  %v1017 = vpop.f32.mrf.mxu0
  %v1018 = vadd.f32 0.0, %v1017
  %1019 = vdwg.mxu0
  %v1022 = vcombine.low %v1016, %v1018
  %v1024 = vunpack.c.l.s4 1983009808
  %v1025 = vunpack.c.0.s8 %v1024
  %v1026 = vlaneseq
  %v1027 = vshrl.u32 %v1026, 7
  %v1028 = vsub.s32 %v1025, %v1027
  %v1029 = vrot.slane %v1022, %v1028
  %v1031 = vadd.f32 %v929, %v1029
  %v1032 = vxor.u32 %v1031, 2147483648
  %v1033 = vmul.f32 %v1032, 1.442695
  %v1034 = vpow.pop %v1033
  %v1035 = vadd.f32 %v1034, 1.0
  %v1036 = vrcp.pop %v1035
  %v1037 = vmul.f32 1.0, %v1036
  %v1039 = vrot.slane %v1031, 2
  %v1041 = vtanh.pop %v1039
  %1042 = vrot.lane.b32.xlu0 %v1031, 64
  %v1043 = vpop.permute.xlu0 %1042
  %v1044 = vrot.slane %v1043, 2
  %v1046 = vxor.u32 %v1044, 2147483648
  %v1047 = vmul.f32 %v1046, 1.442695
  %v1048 = vpow.pop %v1047
  %v1049 = vadd.f32 %v1048, 1.0
  %v1050 = vrcp.pop %v1049
  %v1051 = vmul.f32 1.0, %v1050
  %v1052 = vmul.f32 %v1037, 0.0
  %v1053 = vmul.f32 %v1037, %v1041
  %1055 = vrot.lane.b32.xlu0 %v1053, 64
  %v1056 = vpop.permute.xlu0 %1055
  %v1058 = vadd.f32 %v1052, %v1056
  %v1059 = vtanh.pop %v1058
  %1061 = vrot.lane.b32.xlu0 %v1059, 64
  %v1062 = vpop.permute.xlu0 %1061
  %v1064 = vmul.f32 %v1051, %v1062
  %v1065 = vmul.f32 %v922, 0.0
  %v1066 = vmul.f32 %v1058, 0.0
  %v1067 = vld [vmem:[%s8] sm:$0xff]
  %v1068 = vld [vmem:[%s8 + $0x8] sm:$0xff]
  %v1069 = vld [vmem:[%s8 + $0x10] sm:$0xff]
  %v1070 = vld [vmem:[%s8 + $0x18] sm:$0xff]
  %v1071 = vld [vmem:[%s9] sm:$0x1]
  %v1073 = vlaneseq
  %v1074 = vshrl.u32 %v1073, 7
  %v1075 = vsub.s32 0, %v1074
  %v1076 = vrot.slane %v1071, %v1075
  %1079 = vrot.lane.b32.xlu0 %v928, 32
  %v1080 = vpop.permute.xlu0 %1079
  %v1081 = vsel %vm830, %v1080, 0
  %1083 = vmatprep.subr.mxu0 0.0
  %1084 = vmatpush1.msra.mxu0 0.0
  %1085 = vmatprep.subr.mxu0 0.0
  %1086 = vmatpush1.msra.mxu0 0.0
  %1087 = vmatprep.subr.mxu0 0.0
  %1088 = vmatpush1.msra.mxu0 0.0
  %1089 = vmatprep.subr.mxu0 0.0
  %1090 = vmatpush1.msra.mxu0 0.0
  %1091 = vmatprep.subr.mxu0 0.0
  %1092 = vmatpush1.msra.mxu0 0.0
  %1093 = vmatprep.subr.mxu0 0.0
  %1094 = vmatpush1.msra.mxu0 0.0
  %1095 = vmatprep.subr.mxu0 0.0
  %1096 = vmatpush1.msra.mxu0 0.0
  %1097 = vmatprep.subr.mxu0 0.0
  %1098 = vmatpush1.msra.mxu0 0.0
  %1099 = vmatprep.subr.mxu0 0.0
  %1100 = vmatpush1.msra.mxu0 0.0
  %1101 = vmatprep.subr.mxu0 0.0
  %1102 = vmatpush1.msra.mxu0 0.0
  %1103 = vmatprep.subr.mxu0 0.0
  %1104 = vmatpush1.msra.mxu0 0.0
  %1105 = vmatprep.subr.mxu0 0.0
  %1106 = vmatpush1.msra.mxu0 0.0
  %1107 = vmatprep.subr.mxu0 0.0
  %1108 = vmatpush1.msra.mxu0 %v1070
  %1109 = vmatprep.subr.mxu0 0.0
  %1110 = vmatpush1.msra.mxu0 %v1069
  %1111 = vmatprep.subr.mxu0 0.0
  %1112 = vmatpush1.msra.mxu0 %v1068
  %1113 = vmatprep.subr.mxu0 0.0
  %1114 = vmatpush1.msra.mxu0 %v1067
  %1115 = vmatprep.subr.mxu0 0.0
  %1116 = vmatpush2.msra.mxu0 0.0
  %1117 = vmatprep.subr.mxu0 0.0
  %1118 = vmatpush2.msra.mxu0 0.0
  %1119 = vmatprep.subr.mxu0 0.0
  %1120 = vmatpush2.msra.mxu0 0.0
  %1121 = vmatprep.subr.mxu0 0.0
  %1122 = vmatpush2.msra.mxu0 0.0
  %1123 = vmatprep.subr.mxu0 0.0
  %1124 = vmatpush2.msra.mxu0 0.0
  %1125 = vmatprep.subr.mxu0 0.0
  %1126 = vmatpush2.msra.mxu0 0.0
  %1127 = vmatprep.subr.mxu0 0.0
  %1128 = vmatpush2.msra.mxu0 0.0
  %1129 = vmatprep.subr.mxu0 0.0
  %1130 = vmatpush2.msra.mxu0 0.0
  %1131 = vmatprep.subr.mxu0 0.0
  %1132 = vmatpush2.msra.mxu0 0.0
  %1133 = vmatprep.subr.mxu0 0.0
  %1134 = vmatpush2.msra.mxu0 0.0
  %1135 = vmatprep.subr.mxu0 0.0
  %1136 = vmatpush2.msra.mxu0 0.0
  %1137 = vmatprep.subr.mxu0 0.0
  %1138 = vmatpush2.msra.mxu0 0.0
  %1139 = vmatprep.subr.mxu0 0.0
  %1140 = vmatpush2.msra.mxu0 0.0
  %1141 = vmatprep.subr.mxu0 0.0
  %1142 = vmatpush2.msra.mxu0 0.0
  %1143 = vmatprep.subr.mxu0 0.0
  %1144 = vmatpush2.msra.mxu0 0.0
  %1145 = vmatprep.subr.mxu0 0.0
  %1146 = vmatpush2.msra.mxu0 0.0
  %1147 = vmatprep.mubr.f32.mxu0 0.0
  %1148 = vmatmul.mubr.f32.gmra.mxu0 %v1081
  %v1149 = vpop.f32.mrf.mxu0
  %v1150 = vadd.f32 %v1076, %v1149
  %v1151 = vpop.f32.mrf.mxu0
  %1152 = vdwg.mxu0
  %v1153 = vld [vmem:[%s10] sm:$0xff]
  %v1154 = vld [vmem:[%s10 + $0x8] sm:$0xff]
  %v1155 = vld [vmem:[%s10 + $0x10] sm:$0xff]
  %v1156 = vld [vmem:[%s10 + $0x18] sm:$0xff]
  %v1157 = vld [vmem:[%s10 + $0x20] sm:$0xff]
  %v1158 = vld [vmem:[%s10 + $0x28] sm:$0xff]
  %v1159 = vld [vmem:[%s10 + $0x30] sm:$0xff]
  %v1160 = vld [vmem:[%s10 + $0x38] sm:$0xff]
  %v1161 = vld [vmem:[%s11] sm:$0x1]
  %v1163 = vlaneseq
  %v1164 = vshrl.u32 %v1163, 7
  %v1165 = vsub.s32 0, %v1164
  %v1166 = vrot.slane %v1161, %v1165
  %v1169 = vsel %vm946, %v1064, 0
  %1171 = vmatprep.subr.mxu0 0.0
  %1172 = vmatpush1.msra.mxu0 0.0
  %1173 = vmatprep.subr.mxu0 0.0
  %1174 = vmatpush1.msra.mxu0 0.0
  %1175 = vmatprep.subr.mxu0 0.0
  %1176 = vmatpush1.msra.mxu0 0.0
  %1177 = vmatprep.subr.mxu0 0.0
  %1178 = vmatpush1.msra.mxu0 0.0
  %1179 = vmatprep.subr.mxu0 0.0
  %1180 = vmatpush1.msra.mxu0 0.0
  %1181 = vmatprep.subr.mxu0 0.0
  %1182 = vmatpush1.msra.mxu0 0.0
  %1183 = vmatprep.subr.mxu0 0.0
  %1184 = vmatpush1.msra.mxu0 0.0
  %1185 = vmatprep.subr.mxu0 0.0
  %1186 = vmatpush1.msra.mxu0 0.0
  %1187 = vmatprep.subr.mxu0 0.0
  %1188 = vmatpush1.msra.mxu0 %v1160
  %1189 = vmatprep.subr.mxu0 0.0
  %1190 = vmatpush1.msra.mxu0 %v1159
  %1191 = vmatprep.subr.mxu0 0.0
  %1192 = vmatpush1.msra.mxu0 %v1158
  %1193 = vmatprep.subr.mxu0 0.0
  %1194 = vmatpush1.msra.mxu0 %v1157
  %1195 = vmatprep.subr.mxu0 0.0
  %1196 = vmatpush1.msra.mxu0 %v1156
  %1197 = vmatprep.subr.mxu0 0.0
  %1198 = vmatpush1.msra.mxu0 %v1155
  %1199 = vmatprep.subr.mxu0 0.0
  %1200 = vmatpush1.msra.mxu0 %v1154
  %1201 = vmatprep.subr.mxu0 0.0
  %1202 = vmatpush1.msra.mxu0 %v1153
  %1203 = vmatprep.subr.mxu0 0.0
  %1204 = vmatpush2.msra.mxu0 0.0
  %1205 = vmatprep.subr.mxu0 0.0
  %1206 = vmatpush2.msra.mxu0 0.0
  %1207 = vmatprep.subr.mxu0 0.0
  %1208 = vmatpush2.msra.mxu0 0.0
  %1209 = vmatprep.subr.mxu0 0.0
  %1210 = vmatpush2.msra.mxu0 0.0
  %1211 = vmatprep.subr.mxu0 0.0
  %1212 = vmatpush2.msra.mxu0 0.0
  %1213 = vmatprep.subr.mxu0 0.0
  %1214 = vmatpush2.msra.mxu0 0.0
  %1215 = vmatprep.subr.mxu0 0.0
  %1216 = vmatpush2.msra.mxu0 0.0
  %1217 = vmatprep.subr.mxu0 0.0
  %1218 = vmatpush2.msra.mxu0 0.0
  %1219 = vmatprep.subr.mxu0 0.0
  %1220 = vmatpush2.msra.mxu0 0.0
  %1221 = vmatprep.subr.mxu0 0.0
  %1222 = vmatpush2.msra.mxu0 0.0
  %1223 = vmatprep.subr.mxu0 0.0
  %1224 = vmatpush2.msra.mxu0 0.0
  %1225 = vmatprep.subr.mxu0 0.0
  %1226 = vmatpush2.msra.mxu0 0.0
  %1227 = vmatprep.subr.mxu0 0.0
  %1228 = vmatpush2.msra.mxu0 0.0
  %1229 = vmatprep.subr.mxu0 0.0
  %1230 = vmatpush2.msra.mxu0 0.0
  %1231 = vmatprep.subr.mxu0 0.0
  %1232 = vmatpush2.msra.mxu0 0.0
  %1233 = vmatprep.subr.mxu0 0.0
  %1234 = vmatpush2.msra.mxu0 0.0
  %1235 = vmatprep.mubr.f32.mxu0 0.0
  %1236 = vmatmul.mubr.f32.gmra.mxu0 %v1169
  %v1237 = vpop.f32.mrf.mxu0
  %v1238 = vadd.f32 %v1166, %v1237
  %v1239 = vpop.f32.mrf.mxu0
  %1240 = vdwg.mxu0
  %v1241 = vld [vmem:[%s12] sm:$0xff]
  %v1242 = vld [vmem:[%s12 + $0x8] sm:$0xff]
  %v1243 = vld [vmem:[%s12 + $0x10] sm:$0xff]
  %v1244 = vld [vmem:[%s12 + $0x18] sm:$0xff]
  %v1245 = vld [vmem:[%s12 + $0x20] sm:$0xff]
  %v1246 = vld [vmem:[%s12 + $0x28] sm:$0xff]
  %v1247 = vld [vmem:[%s12 + $0x30] sm:$0xff]
  %v1248 = vld [vmem:[%s12 + $0x38] sm:$0xff]
  %v1249 = vld [vmem:[%s13] sm:$0x1]
  %v1251 = vlaneseq
  %v1252 = vshrl.u32 %v1251, 7
  %v1253 = vsub.s32 0, %v1252
  %v1254 = vrot.slane %v1249, %v1253
  %1256 = vmatprep.subr.mxu0 0.0
  %1257 = vmatpush1.msra.mxu0 0.0
  %1258 = vmatprep.subr.mxu0 0.0
  %1259 = vmatpush1.msra.mxu0 0.0
  %1260 = vmatprep.subr.mxu0 0.0
  %1261 = vmatpush1.msra.mxu0 0.0
  %1262 = vmatprep.subr.mxu0 0.0
  %1263 = vmatpush1.msra.mxu0 0.0
  %1264 = vmatprep.subr.mxu0 0.0
  %1265 = vmatpush1.msra.mxu0 0.0
  %1266 = vmatprep.subr.mxu0 0.0
  %1267 = vmatpush1.msra.mxu0 0.0
  %1268 = vmatprep.subr.mxu0 0.0
  %1269 = vmatpush1.msra.mxu0 0.0
  %1270 = vmatprep.subr.mxu0 0.0
  %1271 = vmatpush1.msra.mxu0 0.0
  %1272 = vmatprep.subr.mxu0 0.0
  %1273 = vmatpush1.msra.mxu0 %v1248
  %1274 = vmatprep.subr.mxu0 0.0
  %1275 = vmatpush1.msra.mxu0 %v1247
  %1276 = vmatprep.subr.mxu0 0.0
  %1277 = vmatpush1.msra.mxu0 %v1246
  %1278 = vmatprep.subr.mxu0 0.0
  %1279 = vmatpush1.msra.mxu0 %v1245
  %1280 = vmatprep.subr.mxu0 0.0
  %1281 = vmatpush1.msra.mxu0 %v1244
  %1282 = vmatprep.subr.mxu0 0.0
  %1283 = vmatpush1.msra.mxu0 %v1243
  %1284 = vmatprep.subr.mxu0 0.0
  %1285 = vmatpush1.msra.mxu0 %v1242
  %1286 = vmatprep.subr.mxu0 0.0
  %1287 = vmatpush1.msra.mxu0 %v1241
  %1288 = vmatprep.subr.mxu0 0.0
  %1289 = vmatpush2.msra.mxu0 0.0
  %1290 = vmatprep.subr.mxu0 0.0
  %1291 = vmatpush2.msra.mxu0 0.0
  %1292 = vmatprep.subr.mxu0 0.0
  %1293 = vmatpush2.msra.mxu0 0.0
  %1294 = vmatprep.subr.mxu0 0.0
  %1295 = vmatpush2.msra.mxu0 0.0
  %1296 = vmatprep.subr.mxu0 0.0
  %1297 = vmatpush2.msra.mxu0 0.0
  %1298 = vmatprep.subr.mxu0 0.0
  %1299 = vmatpush2.msra.mxu0 0.0
  %1300 = vmatprep.subr.mxu0 0.0
  %1301 = vmatpush2.msra.mxu0 0.0
  %1302 = vmatprep.subr.mxu0 0.0
  %1303 = vmatpush2.msra.mxu0 0.0
  %1304 = vmatprep.subr.mxu0 0.0
  %1305 = vmatpush2.msra.mxu0 0.0
  %1306 = vmatprep.subr.mxu0 0.0
  %1307 = vmatpush2.msra.mxu0 0.0
  %1308 = vmatprep.subr.mxu0 0.0
  %1309 = vmatpush2.msra.mxu0 0.0
  %1310 = vmatprep.subr.mxu0 0.0
  %1311 = vmatpush2.msra.mxu0 0.0
  %1312 = vmatprep.subr.mxu0 0.0
  %1313 = vmatpush2.msra.mxu0 0.0
  %1314 = vmatprep.subr.mxu0 0.0
  %1315 = vmatpush2.msra.mxu0 0.0
  %1316 = vmatprep.subr.mxu0 0.0
  %1317 = vmatpush2.msra.mxu0 0.0
  %1318 = vmatprep.subr.mxu0 0.0
  %1319 = vmatpush2.msra.mxu0 0.0
  %1320 = vmatprep.mubr.f32.mxu0 0.0
  %1321 = vmatmul.mubr.f32.gmra.mxu0 %v1169
  %v1322 = vpop.f32.mrf.mxu0
  %v1323 = vadd.f32 %v1254, %v1322
  %v1324 = vpop.f32.mrf.mxu0
  %1325 = vdwg.mxu0
  %v1326 = vmul.f32 %v1150, %v1238
  %vm1327 = vcmask 254976
  %v1328 = vsel %vm1327, %v1326, 0.0
  %1329 = vadd.xlane.f32.xlu0 %v1328
  %v1330 = vpop.xlane.xlu0 %1329
  %v1331 = vmul.f32 %v1330, 0.17677669
  %1333 = vrot.lane.b32.xlu0 %v1238, 96
  %v1334 = vpop.permute.xlu0 %1333
  %v1336 = vmul.f32 %v1150, %v1334
  %v1337 = vsel %vm1327, %v1336, 0.0
  %1338 = vadd.xlane.f32.xlu0 %v1337
  %v1339 = vpop.xlane.xlu0 %1338
  %v1340 = vmul.f32 %v1339, 0.17677669
  %v1341 = vmax.f32 %v1331, %v1340
  %v1342 = vsub.f32 %v1331, %v1341
  %v1343 = vmul.f32 %v1342, 1.442695
  %v1344 = vpow.pop %v1343
  %v1345 = vsub.f32 %v1340, %v1341
  %v1346 = vmul.f32 %v1345, 1.442695
  %v1347 = vpow.pop %v1346
  %v1348 = vadd.f32 %v1344, %v1347
  %v1349 = vmul.f32 %v1344, %v1323
  %v1350 = vmul.f32 %v1347, %v1323
  %1352 = vrot.lane.b32.xlu0 %v1350, 96
  %v1353 = vpop.permute.xlu0 %1352
  %v1355 = vadd.f32 %v1349, %v1353
  %v1356 = vrcp.pop %v1348
  %v1357 = vmul.f32 %v1355, %v1356
  %v1358 = vld [vmem:[%s14] sm:$0xff]
  %v1359 = vld [vmem:[%s14 + $0x8] sm:$0xff]
  %v1360 = vld [vmem:[%s14 + $0x10] sm:$0xff]
  %v1361 = vld [vmem:[%s14 + $0x18] sm:$0xff]
  %v1362 = vld [vmem:[%s15] sm:$0xff]
  %v1363 = vld [vmem:[%s15 + $0x8] sm:$0xff]
  %v1364 = vld [vmem:[%s15 + $0x10] sm:$0xff]
  %v1365 = vld [vmem:[%s15 + $0x18] sm:$0xff]
  %1366 = vmatprep.subr.mxu0 0.0
  %1367 = vmatpush1.msra.mxu0 0.0
  %1368 = vmatprep.subr.mxu0 0.0
  %1369 = vmatpush1.msra.mxu0 0.0
  %1370 = vmatprep.subr.mxu0 0.0
  %1371 = vmatpush1.msra.mxu0 0.0
  %1372 = vmatprep.subr.mxu0 0.0
  %1373 = vmatpush1.msra.mxu0 0.0
  %1374 = vmatprep.subr.mxu0 0.0
  %1375 = vmatpush1.msra.mxu0 0.0
  %1376 = vmatprep.subr.mxu0 0.0
  %1377 = vmatpush1.msra.mxu0 0.0
  %1378 = vmatprep.subr.mxu0 0.0
  %1379 = vmatpush1.msra.mxu0 0.0
  %1380 = vmatprep.subr.mxu0 0.0
  %1381 = vmatpush1.msra.mxu0 0.0
  %1382 = vmatprep.subr.mxu0 0.0
  %1383 = vmatpush1.msra.mxu0 0.0
  %1384 = vmatprep.subr.mxu0 0.0
  %1385 = vmatpush1.msra.mxu0 0.0
  %1386 = vmatprep.subr.mxu0 0.0
  %1387 = vmatpush1.msra.mxu0 0.0
  %1388 = vmatprep.subr.mxu0 0.0
  %1389 = vmatpush1.msra.mxu0 0.0
  %1390 = vmatprep.subr.mxu0 0.0
  %1391 = vmatpush1.msra.mxu0 %v1365
  %1392 = vmatprep.subr.mxu0 0.0
  %1393 = vmatpush1.msra.mxu0 %v1364
  %1394 = vmatprep.subr.mxu0 0.0
  %1395 = vmatpush1.msra.mxu0 %v1363
  %1396 = vmatprep.subr.mxu0 0.0
  %1397 = vmatpush1.msra.mxu0 %v1362
  %1398 = vmatprep.subr.mxu0 0.0
  %1399 = vmatpush2.msra.mxu0 0.0
  %1400 = vmatprep.subr.mxu0 0.0
  %1401 = vmatpush2.msra.mxu0 0.0
  %1402 = vmatprep.subr.mxu0 0.0
  %1403 = vmatpush2.msra.mxu0 0.0
  %1404 = vmatprep.subr.mxu0 0.0
  %1405 = vmatpush2.msra.mxu0 0.0
  %1406 = vmatprep.subr.mxu0 0.0
  %1407 = vmatpush2.msra.mxu0 0.0
  %1408 = vmatprep.subr.mxu0 0.0
  %1409 = vmatpush2.msra.mxu0 0.0
  %1410 = vmatprep.subr.mxu0 0.0
  %1411 = vmatpush2.msra.mxu0 0.0
  %1412 = vmatprep.subr.mxu0 0.0
  %1413 = vmatpush2.msra.mxu0 0.0
  %1414 = vmatprep.subr.mxu0 0.0
  %1415 = vmatpush2.msra.mxu0 0.0
  %1416 = vmatprep.subr.mxu0 0.0
  %1417 = vmatpush2.msra.mxu0 0.0
  %1418 = vmatprep.subr.mxu0 0.0
  %1419 = vmatpush2.msra.mxu0 0.0
  %1420 = vmatprep.subr.mxu0 0.0
  %1421 = vmatpush2.msra.mxu0 0.0
  %1422 = vmatprep.subr.mxu0 0.0
  %1423 = vmatpush2.msra.mxu0 0.0
  %1424 = vmatprep.subr.mxu0 0.0
  %1425 = vmatpush2.msra.mxu0 0.0
  %1426 = vmatprep.subr.mxu0 0.0
  %1427 = vmatpush2.msra.mxu0 0.0
  %1428 = vmatprep.subr.mxu0 0.0
  %1429 = vmatpush2.msra.mxu0 0.0
  %1430 = vmatprep.mubr.f32.mxu0 0.0
  %1431 = vmatmul.mubr.f32.gmra.mxu0 %v1081
  %v1432 = vpop.f32.mrf.mxu0
  %v1433 = vadd.f32 0.0, %v1432
  %v1434 = vpop.f32.mrf.mxu0
  %1435 = vdwg.mxu0
  %v1437 = vsel %vm830, %v1357, 0
  %1439 = vmatprep.subr.mxu0 0.0
  %1440 = vmatpush1.msra.mxu0 0.0
  %1441 = vmatprep.subr.mxu0 0.0
  %1442 = vmatpush1.msra.mxu0 0.0
  %1443 = vmatprep.subr.mxu0 0.0
  %1444 = vmatpush1.msra.mxu0 0.0
  %1445 = vmatprep.subr.mxu0 0.0
  %1446 = vmatpush1.msra.mxu0 0.0
  %1447 = vmatprep.subr.mxu0 0.0
  %1448 = vmatpush1.msra.mxu0 0.0
  %1449 = vmatprep.subr.mxu0 0.0
  %1450 = vmatpush1.msra.mxu0 0.0
  %1451 = vmatprep.subr.mxu0 0.0
  %1452 = vmatpush1.msra.mxu0 0.0
  %1453 = vmatprep.subr.mxu0 0.0
  %1454 = vmatpush1.msra.mxu0 0.0
  %1455 = vmatprep.subr.mxu0 0.0
  %1456 = vmatpush1.msra.mxu0 0.0
  %1457 = vmatprep.subr.mxu0 0.0
  %1458 = vmatpush1.msra.mxu0 0.0
  %1459 = vmatprep.subr.mxu0 0.0
  %1460 = vmatpush1.msra.mxu0 0.0
  %1461 = vmatprep.subr.mxu0 0.0
  %1462 = vmatpush1.msra.mxu0 0.0
  %1463 = vmatprep.subr.mxu0 0.0
  %1464 = vmatpush1.msra.mxu0 %v1361
  %1465 = vmatprep.subr.mxu0 0.0
  %1466 = vmatpush1.msra.mxu0 %v1360
  %1467 = vmatprep.subr.mxu0 0.0
  %1468 = vmatpush1.msra.mxu0 %v1359
  %1469 = vmatprep.subr.mxu0 0.0
  %1470 = vmatpush1.msra.mxu0 %v1358
  %1471 = vmatprep.subr.mxu0 0.0
  %1472 = vmatpush2.msra.mxu0 0.0
  %1473 = vmatprep.subr.mxu0 0.0
  %1474 = vmatpush2.msra.mxu0 0.0
  %1475 = vmatprep.subr.mxu0 0.0
  %1476 = vmatpush2.msra.mxu0 0.0
  %1477 = vmatprep.subr.mxu0 0.0
  %1478 = vmatpush2.msra.mxu0 0.0
  %1479 = vmatprep.subr.mxu0 0.0
  %1480 = vmatpush2.msra.mxu0 0.0
  %1481 = vmatprep.subr.mxu0 0.0
  %1482 = vmatpush2.msra.mxu0 0.0
  %1483 = vmatprep.subr.mxu0 0.0
  %1484 = vmatpush2.msra.mxu0 0.0
  %1485 = vmatprep.subr.mxu0 0.0
  %1486 = vmatpush2.msra.mxu0 0.0
  %1487 = vmatprep.subr.mxu0 0.0
  %1488 = vmatpush2.msra.mxu0 0.0
  %1489 = vmatprep.subr.mxu0 0.0
  %1490 = vmatpush2.msra.mxu0 0.0
  %1491 = vmatprep.subr.mxu0 0.0
  %1492 = vmatpush2.msra.mxu0 0.0
  %1493 = vmatprep.subr.mxu0 0.0
  %1494 = vmatpush2.msra.mxu0 0.0
  %1495 = vmatprep.subr.mxu0 0.0
  %1496 = vmatpush2.msra.mxu0 0.0
  %1497 = vmatprep.subr.mxu0 0.0
  %1498 = vmatpush2.msra.mxu0 0.0
  %1499 = vmatprep.subr.mxu0 0.0
  %1500 = vmatpush2.msra.mxu0 0.0
  %1501 = vmatprep.subr.mxu0 0.0
  %1502 = vmatpush2.msra.mxu0 0.0
  %1503 = vmatprep.mubr.f32.mxu0 0.0
  %1504 = vmatmul.mubr.f32.gmra.mxu0 %v1437
  %v1505 = vpop.f32.mrf.mxu0
  %v1506 = vadd.f32 %v1433, %v1505
  %v1507 = vpop.f32.mrf.mxu0
  %1508 = vdwg.mxu0
  %v1509 = vld [vmem:[%s16] sm:$0x1]
  %v1511 = vlaneseq
  %v1512 = vshrl.u32 %v1511, 7
  %v1513 = vsub.s32 0, %v1512
  %v1514 = vrot.slane %v1509, %v1513
  %v1516 = vadd.f32 %v1506, %v1514
  %v1517 = vmax.f32 %v1516, 0.0
  %v1518 = vld [vmem:[%s17] sm:$0xff]
  %v1519 = vld [vmem:[%s17 + $0x8] sm:$0xff]
  %v1520 = vld [vmem:[%s17 + $0x10] sm:$0xff]
  %v1521 = vld [vmem:[%s17 + $0x18] sm:$0xff]
  %v1522 = vld [vmem:[%s17 + $0x20] sm:$0xff]
  %v1523 = vld [vmem:[%s17 + $0x28] sm:$0xff]
  %v1524 = vld [vmem:[%s17 + $0x30] sm:$0xff]
  %v1525 = vld [vmem:[%s17 + $0x38] sm:$0xff]
  %v1526 = vld [vmem:[%s18] sm:$0xff]
  %v1527 = vld [vmem:[%s18 + $0x8] sm:$0xff]
  %v1528 = vld [vmem:[%s18 + $0x10] sm:$0xff]
  %v1529 = vld [vmem:[%s18 + $0x18] sm:$0xff]
  %1530 = vmatprep.subr.mxu0 0.0
  %1531 = vmatpush1.msra.mxu0 0.0
  %1532 = vmatprep.subr.mxu0 0.0
  %1533 = vmatpush1.msra.mxu0 0.0
  %1534 = vmatprep.subr.mxu0 0.0
  %1535 = vmatpush1.msra.mxu0 0.0
  %1536 = vmatprep.subr.mxu0 0.0
  %1537 = vmatpush1.msra.mxu0 0.0
  %1538 = vmatprep.subr.mxu0 0.0
  %1539 = vmatpush1.msra.mxu0 0.0
  %1540 = vmatprep.subr.mxu0 0.0
  %1541 = vmatpush1.msra.mxu0 0.0
  %1542 = vmatprep.subr.mxu0 0.0
  %1543 = vmatpush1.msra.mxu0 0.0
  %1544 = vmatprep.subr.mxu0 0.0
  %1545 = vmatpush1.msra.mxu0 0.0
  %1546 = vmatprep.subr.mxu0 0.0
  %1547 = vmatpush1.msra.mxu0 0.0
  %1548 = vmatprep.subr.mxu0 0.0
  %1549 = vmatpush1.msra.mxu0 0.0
  %1550 = vmatprep.subr.mxu0 0.0
  %1551 = vmatpush1.msra.mxu0 0.0
  %1552 = vmatprep.subr.mxu0 0.0
  %1553 = vmatpush1.msra.mxu0 0.0
  %1554 = vmatprep.subr.mxu0 0.0
  %1555 = vmatpush1.msra.mxu0 %v1529
  %1556 = vmatprep.subr.mxu0 0.0
  %1557 = vmatpush1.msra.mxu0 %v1528
  %1558 = vmatprep.subr.mxu0 0.0
  %1559 = vmatpush1.msra.mxu0 %v1527
  %1560 = vmatprep.subr.mxu0 0.0
  %1561 = vmatpush1.msra.mxu0 %v1526
  %1562 = vmatprep.subr.mxu0 0.0
  %1563 = vmatpush2.msra.mxu0 0.0
  %1564 = vmatprep.subr.mxu0 0.0
  %1565 = vmatpush2.msra.mxu0 0.0
  %1566 = vmatprep.subr.mxu0 0.0
  %1567 = vmatpush2.msra.mxu0 0.0
  %1568 = vmatprep.subr.mxu0 0.0
  %1569 = vmatpush2.msra.mxu0 0.0
  %1570 = vmatprep.subr.mxu0 0.0
  %1571 = vmatpush2.msra.mxu0 0.0
  %1572 = vmatprep.subr.mxu0 0.0
  %1573 = vmatpush2.msra.mxu0 0.0
  %1574 = vmatprep.subr.mxu0 0.0
  %1575 = vmatpush2.msra.mxu0 0.0
  %1576 = vmatprep.subr.mxu0 0.0
  %1577 = vmatpush2.msra.mxu0 0.0
  %1578 = vmatprep.subr.mxu0 0.0
  %1579 = vmatpush2.msra.mxu0 0.0
  %1580 = vmatprep.subr.mxu0 0.0
  %1581 = vmatpush2.msra.mxu0 0.0
  %1582 = vmatprep.subr.mxu0 0.0
  %1583 = vmatpush2.msra.mxu0 0.0
  %1584 = vmatprep.subr.mxu0 0.0
  %1585 = vmatpush2.msra.mxu0 0.0
  %1586 = vmatprep.subr.mxu0 0.0
  %1587 = vmatpush2.msra.mxu0 0.0
  %1588 = vmatprep.subr.mxu0 0.0
  %1589 = vmatpush2.msra.mxu0 0.0
  %1590 = vmatprep.subr.mxu0 0.0
  %1591 = vmatpush2.msra.mxu0 0.0
  %1592 = vmatprep.subr.mxu0 0.0
  %1593 = vmatpush2.msra.mxu0 0.0
  %1594 = vmatprep.mubr.f32.mxu0 0.0
  %1595 = vmatmul.mubr.f32.gmra.mxu0 %v1081
  %v1596 = vpop.f32.mrf.mxu0
  %v1597 = vadd.f32 0.0, %v1596
  %v1598 = vpop.f32.mrf.mxu0
  %1599 = vdwg.mxu0
  %1600 = vmatprep.subr.mxu0 0.0
  %1601 = vmatpush1.msra.mxu0 0.0
  %1602 = vmatprep.subr.mxu0 0.0
  %1603 = vmatpush1.msra.mxu0 0.0
  %1604 = vmatprep.subr.mxu0 0.0
  %1605 = vmatpush1.msra.mxu0 0.0
  %1606 = vmatprep.subr.mxu0 0.0
  %1607 = vmatpush1.msra.mxu0 0.0
  %1608 = vmatprep.subr.mxu0 0.0
  %1609 = vmatpush1.msra.mxu0 0.0
  %1610 = vmatprep.subr.mxu0 0.0
  %1611 = vmatpush1.msra.mxu0 0.0
  %1612 = vmatprep.subr.mxu0 0.0
  %1613 = vmatpush1.msra.mxu0 0.0
  %1614 = vmatprep.subr.mxu0 0.0
  %1615 = vmatpush1.msra.mxu0 0.0
  %1616 = vmatprep.subr.mxu0 0.0
  %1617 = vmatpush1.msra.mxu0 %v1525
  %1618 = vmatprep.subr.mxu0 0.0
  %1619 = vmatpush1.msra.mxu0 %v1524
  %1620 = vmatprep.subr.mxu0 0.0
  %1621 = vmatpush1.msra.mxu0 %v1523
  %1622 = vmatprep.subr.mxu0 0.0
  %1623 = vmatpush1.msra.mxu0 %v1522
  %1624 = vmatprep.subr.mxu0 0.0
  %1625 = vmatpush1.msra.mxu0 %v1521
  %1626 = vmatprep.subr.mxu0 0.0
  %1627 = vmatpush1.msra.mxu0 %v1520
  %1628 = vmatprep.subr.mxu0 0.0
  %1629 = vmatpush1.msra.mxu0 %v1519
  %1630 = vmatprep.subr.mxu0 0.0
  %1631 = vmatpush1.msra.mxu0 %v1518
  %1632 = vmatprep.subr.mxu0 0.0
  %1633 = vmatpush2.msra.mxu0 0.0
  %1634 = vmatprep.subr.mxu0 0.0
  %1635 = vmatpush2.msra.mxu0 0.0
  %1636 = vmatprep.subr.mxu0 0.0
  %1637 = vmatpush2.msra.mxu0 0.0
  %1638 = vmatprep.subr.mxu0 0.0
  %1639 = vmatpush2.msra.mxu0 0.0
  %1640 = vmatprep.subr.mxu0 0.0
  %1641 = vmatpush2.msra.mxu0 0.0
  %1642 = vmatprep.subr.mxu0 0.0
  %1643 = vmatpush2.msra.mxu0 0.0
  %1644 = vmatprep.subr.mxu0 0.0
  %1645 = vmatpush2.msra.mxu0 0.0
  %1646 = vmatprep.subr.mxu0 0.0
  %1647 = vmatpush2.msra.mxu0 0.0
  %1648 = vmatprep.subr.mxu0 0.0
  %1649 = vmatpush2.msra.mxu0 0.0
  %1650 = vmatprep.subr.mxu0 0.0
  %1651 = vmatpush2.msra.mxu0 0.0
  %1652 = vmatprep.subr.mxu0 0.0
  %1653 = vmatpush2.msra.mxu0 0.0
  %1654 = vmatprep.subr.mxu0 0.0
  %1655 = vmatpush2.msra.mxu0 0.0
  %1656 = vmatprep.subr.mxu0 0.0
  %1657 = vmatpush2.msra.mxu0 0.0
  %1658 = vmatprep.subr.mxu0 0.0
  %1659 = vmatpush2.msra.mxu0 0.0
  %1660 = vmatprep.subr.mxu0 0.0
  %1661 = vmatpush2.msra.mxu0 0.0
  %1662 = vmatprep.subr.mxu0 0.0
  %1663 = vmatpush2.msra.mxu0 0.0
  %1664 = vmatprep.mubr.f32.mxu0 0.0
  %1665 = vmatmul.mubr.f32.gmra.mxu0 %v1169
  %v1666 = vpop.f32.mrf.mxu0
  %v1667 = vadd.f32 %v1597, %v1666
  %v1668 = vpop.f32.mrf.mxu0
  %1669 = vdwg.mxu0
  %v1670 = vld [vmem:[%s19] sm:$0x1]
  %v1672 = vlaneseq
  %v1673 = vshrl.u32 %v1672, 7
  %v1674 = vsub.s32 0, %v1673
  %v1675 = vrot.slane %v1670, %v1674
  %v1677 = vadd.f32 %v1667, %v1675
  %v1678 = vmax.f32 %v1677, 0.0
  %s1679 = scalar_lea.vmem [#allocation2], 2
  %v1680 = vld [vmem:[%s1679] sm:$0x3]
  %s1681 = scalar_lea.vmem %s6, 32
  %v1682 = vld [vmem:[%s1681] sm:$0xff]
  %v1683 = vld [vmem:[%s1681 + $0x8] sm:$0xff]
  %v1684 = vld [vmem:[%s1681 + $0x10] sm:$0xff]
  %v1685 = vld [vmem:[%s1681 + $0x18] sm:$0xff]
  %v1687 = vsel %vm830, %v1517, 0
  %1689 = vmatprep.subr.mxu0 0.0
  %1690 = vmatpush1.msra.mxu0 0.0
  %1691 = vmatprep.subr.mxu0 0.0
  %1692 = vmatpush1.msra.mxu0 0.0
  %1693 = vmatprep.subr.mxu0 0.0
  %1694 = vmatpush1.msra.mxu0 0.0
  %1695 = vmatprep.subr.mxu0 0.0
  %1696 = vmatpush1.msra.mxu0 0.0
  %1697 = vmatprep.subr.mxu0 0.0
  %1698 = vmatpush1.msra.mxu0 0.0
  %1699 = vmatprep.subr.mxu0 0.0
  %1700 = vmatpush1.msra.mxu0 0.0
  %1701 = vmatprep.subr.mxu0 0.0
  %1702 = vmatpush1.msra.mxu0 0.0
  %1703 = vmatprep.subr.mxu0 0.0
  %1704 = vmatpush1.msra.mxu0 0.0
  %1705 = vmatprep.subr.mxu0 0.0
  %1706 = vmatpush1.msra.mxu0 0.0
  %1707 = vmatprep.subr.mxu0 0.0
  %1708 = vmatpush1.msra.mxu0 0.0
  %1709 = vmatprep.subr.mxu0 0.0
  %1710 = vmatpush1.msra.mxu0 0.0
  %1711 = vmatprep.subr.mxu0 0.0
  %1712 = vmatpush1.msra.mxu0 0.0
  %1713 = vmatprep.subr.mxu0 0.0
  %1714 = vmatpush1.msra.mxu0 %v1685
  %1715 = vmatprep.subr.mxu0 0.0
  %1716 = vmatpush1.msra.mxu0 %v1684
  %1717 = vmatprep.subr.mxu0 0.0
  %1718 = vmatpush1.msra.mxu0 %v1683
  %1719 = vmatprep.subr.mxu0 0.0
  %1720 = vmatpush1.msra.mxu0 %v1682
  %1721 = vmatprep.subr.mxu0 0.0
  %1722 = vmatpush2.msra.mxu0 0.0
  %1723 = vmatprep.subr.mxu0 0.0
  %1724 = vmatpush2.msra.mxu0 0.0
  %1725 = vmatprep.subr.mxu0 0.0
  %1726 = vmatpush2.msra.mxu0 0.0
  %1727 = vmatprep.subr.mxu0 0.0
  %1728 = vmatpush2.msra.mxu0 0.0
  %1729 = vmatprep.subr.mxu0 0.0
  %1730 = vmatpush2.msra.mxu0 0.0
  %1731 = vmatprep.subr.mxu0 0.0
  %1732 = vmatpush2.msra.mxu0 0.0
  %1733 = vmatprep.subr.mxu0 0.0
  %1734 = vmatpush2.msra.mxu0 0.0
  %1735 = vmatprep.subr.mxu0 0.0
  %1736 = vmatpush2.msra.mxu0 0.0
  %1737 = vmatprep.subr.mxu0 0.0
  %1738 = vmatpush2.msra.mxu0 0.0
  %1739 = vmatprep.subr.mxu0 0.0
  %1740 = vmatpush2.msra.mxu0 0.0
  %1741 = vmatprep.subr.mxu0 0.0
  %1742 = vmatpush2.msra.mxu0 0.0
  %1743 = vmatprep.subr.mxu0 0.0
  %1744 = vmatpush2.msra.mxu0 0.0
  %1745 = vmatprep.subr.mxu0 0.0
  %1746 = vmatpush2.msra.mxu0 0.0
  %1747 = vmatprep.subr.mxu0 0.0
  %1748 = vmatpush2.msra.mxu0 0.0
  %1749 = vmatprep.subr.mxu0 0.0
  %1750 = vmatpush2.msra.mxu0 0.0
  %1751 = vmatprep.subr.mxu0 0.0
  %1752 = vmatpush2.msra.mxu0 0.0
  %1753 = vmatprep.mubr.f32.mxu0 0.0
  %1754 = vmatmul.mubr.f32.gmra.mxu0 %v1687
  %v1755 = vpop.f32.mrf.mxu0
  %v1756 = vadd.f32 0.0, %v1755
  %v1757 = vpop.f32.mrf.mxu0
  %1758 = vdwg.mxu0
  %v1759 = vadd.f32 %v1680, %v1756
  %v1760 = vxor.u32 %v1759, 2147483648
  %v1761 = vmul.f32 %v1760, 1.442695
  %v1762 = vpow.pop %v1761
  %v1763 = vadd.f32 %v1762, 1.0
  %v1764 = vrcp.pop %v1763
  %v1765 = vmul.f32 1.0, %v1764
  %v1766 = vtanh.pop %v1759
  %v1767 = vmul.f32 %v1765, %v1065
  %1769 = vrot.lane.b32.xlu0 %v1766, 64
  %v1770 = vpop.permute.xlu0 %1769
  %v1772 = vmul.f32 %v1765, %v1770
  %1774 = vrot.lane.b32.xlu0 %v1772, 32
  %v1775 = vpop.permute.xlu0 %1774
  %v1777 = vadd.f32 %v1767, %v1775
  %v1778 = vtanh.pop %v1777
  %1780 = vrot.lane.b32.xlu0 %v1778, 64
  %v1781 = vpop.permute.xlu0 %1780
  %v1783 = vmul.f32 %v1765, %v1781
  %s1784 = scalar_lea.vmem [#allocation3], 4
  %v1785 = vld [vmem:[%s1784] sm:$0xf]
  %s1786 = scalar_lea.vmem %s7, 128
  %v1787 = vld [vmem:[%s1786] sm:$0xff]
  %v1788 = vld [vmem:[%s1786 + $0x8] sm:$0xff]
  %v1789 = vld [vmem:[%s1786 + $0x10] sm:$0xff]
  %v1790 = vld [vmem:[%s1786 + $0x18] sm:$0xff]
  %v1791 = vld [vmem:[%s1786 + $0x20] sm:$0xff]
  %v1792 = vld [vmem:[%s1786 + $0x28] sm:$0xff]
  %v1793 = vld [vmem:[%s1786 + $0x30] sm:$0xff]
  %v1794 = vld [vmem:[%s1786 + $0x38] sm:$0xff]
  %v1795 = vld [vmem:[%s1786 + $0x40] sm:$0xff]
  %v1796 = vld [vmem:[%s1786 + $0x48] sm:$0xff]
  %v1797 = vld [vmem:[%s1786 + $0x50] sm:$0xff]
  %v1798 = vld [vmem:[%s1786 + $0x58] sm:$0xff]
  %v1799 = vld [vmem:[%s1786 + $0x60] sm:$0xff]
  %v1800 = vld [vmem:[%s1786 + $0x68] sm:$0xff]
  %v1801 = vld [vmem:[%s1786 + $0x70] sm:$0xff]
  %v1802 = vld [vmem:[%s1786 + $0x78] sm:$0xff]
  %v1804 = vsel %vm946, %v1678, 0
  %1806 = vmatprep.subr.mxu0 0.0
  %1807 = vmatpush1.msra.mxu0 0.0
  %1808 = vmatprep.subr.mxu0 0.0
  %1809 = vmatpush1.msra.mxu0 0.0
  %1810 = vmatprep.subr.mxu0 0.0
  %1811 = vmatpush1.msra.mxu0 0.0
  %1812 = vmatprep.subr.mxu0 0.0
  %1813 = vmatpush1.msra.mxu0 0.0
  %1814 = vmatprep.subr.mxu0 0.0
  %1815 = vmatpush1.msra.mxu0 0.0
  %1816 = vmatprep.subr.mxu0 0.0
  %1817 = vmatpush1.msra.mxu0 0.0
  %1818 = vmatprep.subr.mxu0 0.0
  %1819 = vmatpush1.msra.mxu0 0.0
  %1820 = vmatprep.subr.mxu0 0.0
  %1821 = vmatpush1.msra.mxu0 0.0
  %1822 = vmatprep.subr.mxu0 %v1802
  %1823 = vmatpush1.msra.mxu0 %v1801
  %1824 = vmatprep.subr.mxu0 %v1800
  %1825 = vmatpush1.msra.mxu0 %v1799
  %1826 = vmatprep.subr.mxu0 %v1798
  %1827 = vmatpush1.msra.mxu0 %v1797
  %1828 = vmatprep.subr.mxu0 %v1796
  %1829 = vmatpush1.msra.mxu0 %v1795
  %1830 = vmatprep.subr.mxu0 %v1794
  %1831 = vmatpush1.msra.mxu0 %v1793
  %1832 = vmatprep.subr.mxu0 %v1792
  %1833 = vmatpush1.msra.mxu0 %v1791
  %1834 = vmatprep.subr.mxu0 %v1790
  %1835 = vmatpush1.msra.mxu0 %v1789
  %1836 = vmatprep.subr.mxu0 %v1788
  %1837 = vmatpush1.msra.mxu0 %v1787
  %1838 = vmatprep.subr.mxu0 0.0
  %1839 = vmatpush2.msra.mxu0 0.0
  %1840 = vmatprep.subr.mxu0 0.0
  %1841 = vmatpush2.msra.mxu0 0.0
  %1842 = vmatprep.subr.mxu0 0.0
  %1843 = vmatpush2.msra.mxu0 0.0
  %1844 = vmatprep.subr.mxu0 0.0
  %1845 = vmatpush2.msra.mxu0 0.0
  %1846 = vmatprep.subr.mxu0 0.0
  %1847 = vmatpush2.msra.mxu0 0.0
  %1848 = vmatprep.subr.mxu0 0.0
  %1849 = vmatpush2.msra.mxu0 0.0
  %1850 = vmatprep.subr.mxu0 0.0
  %1851 = vmatpush2.msra.mxu0 0.0
  %1852 = vmatprep.subr.mxu0 0.0
  %1853 = vmatpush2.msra.mxu0 0.0
  %1854 = vmatprep.subr.mxu0 0.0
  %1855 = vmatpush2.msra.mxu0 0.0
  %1856 = vmatprep.subr.mxu0 0.0
  %1857 = vmatpush2.msra.mxu0 0.0
  %1858 = vmatprep.subr.mxu0 0.0
  %1859 = vmatpush2.msra.mxu0 0.0
  %1860 = vmatprep.subr.mxu0 0.0
  %1861 = vmatpush2.msra.mxu0 0.0
  %1862 = vmatprep.subr.mxu0 0.0
  %1863 = vmatpush2.msra.mxu0 0.0
  %1864 = vmatprep.subr.mxu0 0.0
  %1865 = vmatpush2.msra.mxu0 0.0
  %1866 = vmatprep.subr.mxu0 0.0
  %1867 = vmatpush2.msra.mxu0 0.0
  %1868 = vmatprep.subr.mxu0 0.0
  %1869 = vmatpush2.msra.mxu0 0.0
  %1870 = vmatprep.mubr.f32.mxu0 0.0
  %1871 = vmatmul.mubr.f32.gmra.mxu0 %v1804
  %v1872 = vpop.f32.mrf.mxu0
  %v1873 = vadd.f32 0.0, %v1872
  %v1874 = vpop.f32.mrf.mxu0
  %v1875 = vadd.f32 0.0, %v1874
  %1876 = vdwg.mxu0
  %v1879 = vcombine.low %v1873, %v1875
  %v1881 = vunpack.c.l.s4 1983009808
  %v1882 = vunpack.c.0.s8 %v1881
  %v1883 = vlaneseq
  %v1884 = vshrl.u32 %v1883, 7
  %v1885 = vsub.s32 %v1882, %v1884
  %v1886 = vrot.slane %v1879, %v1885
  %v1888 = vadd.f32 %v1785, %v1886
  %v1889 = vxor.u32 %v1888, 2147483648
  %v1890 = vmul.f32 %v1889, 1.442695
  %v1891 = vpow.pop %v1890
  %v1892 = vadd.f32 %v1891, 1.0
  %v1893 = vrcp.pop %v1892
  %v1894 = vmul.f32 1.0, %v1893
  %v1896 = vrot.slane %v1888, 2
  %v1898 = vtanh.pop %v1896
  %1899 = vrot.lane.b32.xlu0 %v1888, 64
  %v1900 = vpop.permute.xlu0 %1899
  %v1901 = vrot.slane %v1900, 2
  %v1903 = vxor.u32 %v1901, 2147483648
  %v1904 = vmul.f32 %v1903, 1.442695
  %v1905 = vpow.pop %v1904
  %v1906 = vadd.f32 %v1905, 1.0
  %v1907 = vrcp.pop %v1906
  %v1908 = vmul.f32 1.0, %v1907
  %v1909 = vmul.f32 %v1894, %v1066
  %v1910 = vmul.f32 %v1894, %v1898
  %1912 = vrot.lane.b32.xlu0 %v1910, 64
  %v1913 = vpop.permute.xlu0 %1912
  %v1915 = vadd.f32 %v1909, %v1913
  %v1916 = vtanh.pop %v1915
  %1918 = vrot.lane.b32.xlu0 %v1916, 64
  %v1919 = vpop.permute.xlu0 %1918
  %v1921 = vmul.f32 %v1908, %v1919
  %1923 = vrot.lane.b32.xlu0 %v1783, 32
  %v1924 = vpop.permute.xlu0 %1923
  %v1925 = vsel %vm830, %v1924, 0
  %1927 = vmatprep.subr.mxu0 0.0
  %1928 = vmatpush1.msra.mxu0 0.0
  %1929 = vmatprep.subr.mxu0 0.0
  %1930 = vmatpush1.msra.mxu0 0.0
  %1931 = vmatprep.subr.mxu0 0.0
  %1932 = vmatpush1.msra.mxu0 0.0
  %1933 = vmatprep.subr.mxu0 0.0
  %1934 = vmatpush1.msra.mxu0 0.0
  %1935 = vmatprep.subr.mxu0 0.0
  %1936 = vmatpush1.msra.mxu0 0.0
  %1937 = vmatprep.subr.mxu0 0.0
  %1938 = vmatpush1.msra.mxu0 0.0
  %1939 = vmatprep.subr.mxu0 0.0
  %1940 = vmatpush1.msra.mxu0 0.0
  %1941 = vmatprep.subr.mxu0 0.0
  %1942 = vmatpush1.msra.mxu0 0.0
  %1943 = vmatprep.subr.mxu0 0.0
  %1944 = vmatpush1.msra.mxu0 0.0
  %1945 = vmatprep.subr.mxu0 0.0
  %1946 = vmatpush1.msra.mxu0 0.0
  %1947 = vmatprep.subr.mxu0 0.0
  %1948 = vmatpush1.msra.mxu0 0.0
  %1949 = vmatprep.subr.mxu0 0.0
  %1950 = vmatpush1.msra.mxu0 0.0
  %1951 = vmatprep.subr.mxu0 0.0
  %1952 = vmatpush1.msra.mxu0 %v1070
  %1953 = vmatprep.subr.mxu0 0.0
  %1954 = vmatpush1.msra.mxu0 %v1069
  %1955 = vmatprep.subr.mxu0 0.0
  %1956 = vmatpush1.msra.mxu0 %v1068
  %1957 = vmatprep.subr.mxu0 0.0
  %1958 = vmatpush1.msra.mxu0 %v1067
  %1959 = vmatprep.subr.mxu0 0.0
  %1960 = vmatpush2.msra.mxu0 0.0
  %1961 = vmatprep.subr.mxu0 0.0
  %1962 = vmatpush2.msra.mxu0 0.0
  %1963 = vmatprep.subr.mxu0 0.0
  %1964 = vmatpush2.msra.mxu0 0.0
  %1965 = vmatprep.subr.mxu0 0.0
  %1966 = vmatpush2.msra.mxu0 0.0
  %1967 = vmatprep.subr.mxu0 0.0
  %1968 = vmatpush2.msra.mxu0 0.0
  %1969 = vmatprep.subr.mxu0 0.0
  %1970 = vmatpush2.msra.mxu0 0.0
  %1971 = vmatprep.subr.mxu0 0.0
  %1972 = vmatpush2.msra.mxu0 0.0
  %1973 = vmatprep.subr.mxu0 0.0
  %1974 = vmatpush2.msra.mxu0 0.0
  %1975 = vmatprep.subr.mxu0 0.0
  %1976 = vmatpush2.msra.mxu0 0.0
  %1977 = vmatprep.subr.mxu0 0.0
  %1978 = vmatpush2.msra.mxu0 0.0
  %1979 = vmatprep.subr.mxu0 0.0
  %1980 = vmatpush2.msra.mxu0 0.0
  %1981 = vmatprep.subr.mxu0 0.0
  %1982 = vmatpush2.msra.mxu0 0.0
  %1983 = vmatprep.subr.mxu0 0.0
  %1984 = vmatpush2.msra.mxu0 0.0
  %1985 = vmatprep.subr.mxu0 0.0
  %1986 = vmatpush2.msra.mxu0 0.0
  %1987 = vmatprep.subr.mxu0 0.0
  %1988 = vmatpush2.msra.mxu0 0.0
  %1989 = vmatprep.subr.mxu0 0.0
  %1990 = vmatpush2.msra.mxu0 0.0
  %1991 = vmatprep.mubr.f32.mxu0 0.0
  %1992 = vmatmul.mubr.f32.gmra.mxu0 %v1925
  %v1993 = vpop.f32.mrf.mxu0
  %v1994 = vadd.f32 %v1076, %v1993
  %v1995 = vpop.f32.mrf.mxu0
  %1996 = vdwg.mxu0
  %v1998 = vsel %vm946, %v1921, 0
  %2000 = vmatprep.subr.mxu0 0.0
  %2001 = vmatpush1.msra.mxu0 0.0
  %2002 = vmatprep.subr.mxu0 0.0
  %2003 = vmatpush1.msra.mxu0 0.0
  %2004 = vmatprep.subr.mxu0 0.0
  %2005 = vmatpush1.msra.mxu0 0.0
  %2006 = vmatprep.subr.mxu0 0.0
  %2007 = vmatpush1.msra.mxu0 0.0
  %2008 = vmatprep.subr.mxu0 0.0
  %2009 = vmatpush1.msra.mxu0 0.0
  %2010 = vmatprep.subr.mxu0 0.0
  %2011 = vmatpush1.msra.mxu0 0.0
  %2012 = vmatprep.subr.mxu0 0.0
  %2013 = vmatpush1.msra.mxu0 0.0
  %2014 = vmatprep.subr.mxu0 0.0
  %2015 = vmatpush1.msra.mxu0 0.0
  %2016 = vmatprep.subr.mxu0 0.0
  %2017 = vmatpush1.msra.mxu0 %v1160
  %2018 = vmatprep.subr.mxu0 0.0
  %2019 = vmatpush1.msra.mxu0 %v1159
  %2020 = vmatprep.subr.mxu0 0.0
  %2021 = vmatpush1.msra.mxu0 %v1158
  %2022 = vmatprep.subr.mxu0 0.0
  %2023 = vmatpush1.msra.mxu0 %v1157
  %2024 = vmatprep.subr.mxu0 0.0
  %2025 = vmatpush1.msra.mxu0 %v1156
  %2026 = vmatprep.subr.mxu0 0.0
  %2027 = vmatpush1.msra.mxu0 %v1155
  %2028 = vmatprep.subr.mxu0 0.0
  %2029 = vmatpush1.msra.mxu0 %v1154
  %2030 = vmatprep.subr.mxu0 0.0
  %2031 = vmatpush1.msra.mxu0 %v1153
  %2032 = vmatprep.subr.mxu0 0.0
  %2033 = vmatpush2.msra.mxu0 0.0
  %2034 = vmatprep.subr.mxu0 0.0
  %2035 = vmatpush2.msra.mxu0 0.0
  %2036 = vmatprep.subr.mxu0 0.0
  %2037 = vmatpush2.msra.mxu0 0.0
  %2038 = vmatprep.subr.mxu0 0.0
  %2039 = vmatpush2.msra.mxu0 0.0
  %2040 = vmatprep.subr.mxu0 0.0
  %2041 = vmatpush2.msra.mxu0 0.0
  %2042 = vmatprep.subr.mxu0 0.0
  %2043 = vmatpush2.msra.mxu0 0.0
  %2044 = vmatprep.subr.mxu0 0.0
  %2045 = vmatpush2.msra.mxu0 0.0
  %2046 = vmatprep.subr.mxu0 0.0
  %2047 = vmatpush2.msra.mxu0 0.0
  %2048 = vmatprep.subr.mxu0 0.0
  %2049 = vmatpush2.msra.mxu0 0.0
  %2050 = vmatprep.subr.mxu0 0.0
  %2051 = vmatpush2.msra.mxu0 0.0
  %2052 = vmatprep.subr.mxu0 0.0
  %2053 = vmatpush2.msra.mxu0 0.0
  %2054 = vmatprep.subr.mxu0 0.0
  %2055 = vmatpush2.msra.mxu0 0.0
  %2056 = vmatprep.subr.mxu0 0.0
  %2057 = vmatpush2.msra.mxu0 0.0
  %2058 = vmatprep.subr.mxu0 0.0
  %2059 = vmatpush2.msra.mxu0 0.0
  %2060 = vmatprep.subr.mxu0 0.0
  %2061 = vmatpush2.msra.mxu0 0.0
  %2062 = vmatprep.subr.mxu0 0.0
  %2063 = vmatpush2.msra.mxu0 0.0
  %2064 = vmatprep.mubr.f32.mxu0 0.0
  %2065 = vmatmul.mubr.f32.gmra.mxu0 %v1998
  %v2066 = vpop.f32.mrf.mxu0
  %v2067 = vadd.f32 %v1166, %v2066
  %v2068 = vpop.f32.mrf.mxu0
  %2069 = vdwg.mxu0
  %2070 = vmatprep.subr.mxu0 0.0
  %2071 = vmatpush1.msra.mxu0 0.0
  %2072 = vmatprep.subr.mxu0 0.0
  %2073 = vmatpush1.msra.mxu0 0.0
  %2074 = vmatprep.subr.mxu0 0.0
  %2075 = vmatpush1.msra.mxu0 0.0
  %2076 = vmatprep.subr.mxu0 0.0
  %2077 = vmatpush1.msra.mxu0 0.0
  %2078 = vmatprep.subr.mxu0 0.0
  %2079 = vmatpush1.msra.mxu0 0.0
  %2080 = vmatprep.subr.mxu0 0.0
  %2081 = vmatpush1.msra.mxu0 0.0
  %2082 = vmatprep.subr.mxu0 0.0
  %2083 = vmatpush1.msra.mxu0 0.0
  %2084 = vmatprep.subr.mxu0 0.0
  %2085 = vmatpush1.msra.mxu0 0.0
  %2086 = vmatprep.subr.mxu0 0.0
  %2087 = vmatpush1.msra.mxu0 %v1248
  %2088 = vmatprep.subr.mxu0 0.0
  %2089 = vmatpush1.msra.mxu0 %v1247
  %2090 = vmatprep.subr.mxu0 0.0
  %2091 = vmatpush1.msra.mxu0 %v1246
  %2092 = vmatprep.subr.mxu0 0.0
  %2093 = vmatpush1.msra.mxu0 %v1245
  %2094 = vmatprep.subr.mxu0 0.0
  %2095 = vmatpush1.msra.mxu0 %v1244
  %2096 = vmatprep.subr.mxu0 0.0
  %2097 = vmatpush1.msra.mxu0 %v1243
  %2098 = vmatprep.subr.mxu0 0.0
  %2099 = vmatpush1.msra.mxu0 %v1242
  %2100 = vmatprep.subr.mxu0 0.0
  %2101 = vmatpush1.msra.mxu0 %v1241
  %2102 = vmatprep.subr.mxu0 0.0
  %2103 = vmatpush2.msra.mxu0 0.0
  %2104 = vmatprep.subr.mxu0 0.0
  %2105 = vmatpush2.msra.mxu0 0.0
  %2106 = vmatprep.subr.mxu0 0.0
  %2107 = vmatpush2.msra.mxu0 0.0
  %2108 = vmatprep.subr.mxu0 0.0
  %2109 = vmatpush2.msra.mxu0 0.0
  %2110 = vmatprep.subr.mxu0 0.0
  %2111 = vmatpush2.msra.mxu0 0.0
  %2112 = vmatprep.subr.mxu0 0.0
  %2113 = vmatpush2.msra.mxu0 0.0
  %2114 = vmatprep.subr.mxu0 0.0
  %2115 = vmatpush2.msra.mxu0 0.0
  %2116 = vmatprep.subr.mxu0 0.0
  %2117 = vmatpush2.msra.mxu0 0.0
  %2118 = vmatprep.subr.mxu0 0.0
  %2119 = vmatpush2.msra.mxu0 0.0
  %2120 = vmatprep.subr.mxu0 0.0
  %2121 = vmatpush2.msra.mxu0 0.0
  %2122 = vmatprep.subr.mxu0 0.0
  %2123 = vmatpush2.msra.mxu0 0.0
  %2124 = vmatprep.subr.mxu0 0.0
  %2125 = vmatpush2.msra.mxu0 0.0
  %2126 = vmatprep.subr.mxu0 0.0
  %2127 = vmatpush2.msra.mxu0 0.0
  %2128 = vmatprep.subr.mxu0 0.0
  %2129 = vmatpush2.msra.mxu0 0.0
  %2130 = vmatprep.subr.mxu0 0.0
  %2131 = vmatpush2.msra.mxu0 0.0
  %2132 = vmatprep.subr.mxu0 0.0
  %2133 = vmatpush2.msra.mxu0 0.0
  %2134 = vmatprep.mubr.f32.mxu0 0.0
  %2135 = vmatmul.mubr.f32.gmra.mxu0 %v1998
  %v2136 = vpop.f32.mrf.mxu0
  %v2137 = vadd.f32 %v1254, %v2136
  %v2138 = vpop.f32.mrf.mxu0
  %2139 = vdwg.mxu0
  %v2140 = vmul.f32 %v1994, %v2067
  %v2141 = vsel %vm1327, %v2140, 0.0
  %2142 = vadd.xlane.f32.xlu0 %v2141
  %v2143 = vpop.xlane.xlu0 %2142
  %v2144 = vmul.f32 %v2143, 0.17677669
  %2146 = vrot.lane.b32.xlu0 %v2067, 96
  %v2147 = vpop.permute.xlu0 %2146
  %v2149 = vmul.f32 %v1994, %v2147
  %v2150 = vsel %vm1327, %v2149, 0.0
  %2151 = vadd.xlane.f32.xlu0 %v2150
  %v2152 = vpop.xlane.xlu0 %2151
  %v2153 = vmul.f32 %v2152, 0.17677669
  %v2154 = vmax.f32 %v2144, %v2153
  %v2155 = vsub.f32 %v2144, %v2154
  %v2156 = vmul.f32 %v2155, 1.442695
  %v2157 = vpow.pop %v2156
  %v2158 = vsub.f32 %v2153, %v2154
  %v2159 = vmul.f32 %v2158, 1.442695
  %v2160 = vpow.pop %v2159
  %v2161 = vadd.f32 %v2157, %v2160
  %v2162 = vmul.f32 %v2157, %v2137
  %v2163 = vmul.f32 %v2160, %v2137
  %2165 = vrot.lane.b32.xlu0 %v2163, 96
  %v2166 = vpop.permute.xlu0 %2165
  %v2168 = vadd.f32 %v2162, %v2166
  %v2169 = vrcp.pop %v2161
  %v2170 = vmul.f32 %v2168, %v2169
  %2171 = vmatprep.subr.mxu0 0.0
  %2172 = vmatpush1.msra.mxu0 0.0
  %2173 = vmatprep.subr.mxu0 0.0
  %2174 = vmatpush1.msra.mxu0 0.0
  %2175 = vmatprep.subr.mxu0 0.0
  %2176 = vmatpush1.msra.mxu0 0.0
  %2177 = vmatprep.subr.mxu0 0.0
  %2178 = vmatpush1.msra.mxu0 0.0
  %2179 = vmatprep.subr.mxu0 0.0
  %2180 = vmatpush1.msra.mxu0 0.0
  %2181 = vmatprep.subr.mxu0 0.0
  %2182 = vmatpush1.msra.mxu0 0.0
  %2183 = vmatprep.subr.mxu0 0.0
  %2184 = vmatpush1.msra.mxu0 0.0
  %2185 = vmatprep.subr.mxu0 0.0
  %2186 = vmatpush1.msra.mxu0 0.0
  %2187 = vmatprep.subr.mxu0 0.0
  %2188 = vmatpush1.msra.mxu0 0.0
  %2189 = vmatprep.subr.mxu0 0.0
  %2190 = vmatpush1.msra.mxu0 0.0
  %2191 = vmatprep.subr.mxu0 0.0
  %2192 = vmatpush1.msra.mxu0 0.0
  %2193 = vmatprep.subr.mxu0 0.0
  %2194 = vmatpush1.msra.mxu0 0.0
  %2195 = vmatprep.subr.mxu0 0.0
  %2196 = vmatpush1.msra.mxu0 %v1365
  %2197 = vmatprep.subr.mxu0 0.0
  %2198 = vmatpush1.msra.mxu0 %v1364
  %2199 = vmatprep.subr.mxu0 0.0
  %2200 = vmatpush1.msra.mxu0 %v1363
  %2201 = vmatprep.subr.mxu0 0.0
  %2202 = vmatpush1.msra.mxu0 %v1362
  %2203 = vmatprep.subr.mxu0 0.0
  %2204 = vmatpush2.msra.mxu0 0.0
  %2205 = vmatprep.subr.mxu0 0.0
  %2206 = vmatpush2.msra.mxu0 0.0
  %2207 = vmatprep.subr.mxu0 0.0
  %2208 = vmatpush2.msra.mxu0 0.0
  %2209 = vmatprep.subr.mxu0 0.0
  %2210 = vmatpush2.msra.mxu0 0.0
  %2211 = vmatprep.subr.mxu0 0.0
  %2212 = vmatpush2.msra.mxu0 0.0
  %2213 = vmatprep.subr.mxu0 0.0
  %2214 = vmatpush2.msra.mxu0 0.0
  %2215 = vmatprep.subr.mxu0 0.0
  %2216 = vmatpush2.msra.mxu0 0.0
  %2217 = vmatprep.subr.mxu0 0.0
  %2218 = vmatpush2.msra.mxu0 0.0
  %2219 = vmatprep.subr.mxu0 0.0
  %2220 = vmatpush2.msra.mxu0 0.0
  %2221 = vmatprep.subr.mxu0 0.0
  %2222 = vmatpush2.msra.mxu0 0.0
  %2223 = vmatprep.subr.mxu0 0.0
  %2224 = vmatpush2.msra.mxu0 0.0
  %2225 = vmatprep.subr.mxu0 0.0
  %2226 = vmatpush2.msra.mxu0 0.0
  %2227 = vmatprep.subr.mxu0 0.0
  %2228 = vmatpush2.msra.mxu0 0.0
  %2229 = vmatprep.subr.mxu0 0.0
  %2230 = vmatpush2.msra.mxu0 0.0
  %2231 = vmatprep.subr.mxu0 0.0
  %2232 = vmatpush2.msra.mxu0 0.0
  %2233 = vmatprep.subr.mxu0 0.0
  %2234 = vmatpush2.msra.mxu0 0.0
  %2235 = vmatprep.mubr.f32.mxu0 0.0
  %2236 = vmatmul.mubr.f32.gmra.mxu0 %v1925
  %v2237 = vpop.f32.mrf.mxu0
  %v2238 = vadd.f32 0.0, %v2237
  %v2239 = vpop.f32.mrf.mxu0
  %2240 = vdwg.mxu0
  %v2242 = vsel %vm830, %v2170, 0
  %2244 = vmatprep.subr.mxu0 0.0
  %2245 = vmatpush1.msra.mxu0 0.0
  %2246 = vmatprep.subr.mxu0 0.0
  %2247 = vmatpush1.msra.mxu0 0.0
  %2248 = vmatprep.subr.mxu0 0.0
  %2249 = vmatpush1.msra.mxu0 0.0
  %2250 = vmatprep.subr.mxu0 0.0
  %2251 = vmatpush1.msra.mxu0 0.0
  %2252 = vmatprep.subr.mxu0 0.0
  %2253 = vmatpush1.msra.mxu0 0.0
  %2254 = vmatprep.subr.mxu0 0.0
  %2255 = vmatpush1.msra.mxu0 0.0
  %2256 = vmatprep.subr.mxu0 0.0
  %2257 = vmatpush1.msra.mxu0 0.0
  %2258 = vmatprep.subr.mxu0 0.0
  %2259 = vmatpush1.msra.mxu0 0.0
  %2260 = vmatprep.subr.mxu0 0.0
  %2261 = vmatpush1.msra.mxu0 0.0
  %2262 = vmatprep.subr.mxu0 0.0
  %2263 = vmatpush1.msra.mxu0 0.0
  %2264 = vmatprep.subr.mxu0 0.0
  %2265 = vmatpush1.msra.mxu0 0.0
  %2266 = vmatprep.subr.mxu0 0.0
  %2267 = vmatpush1.msra.mxu0 0.0
  %2268 = vmatprep.subr.mxu0 0.0
  %2269 = vmatpush1.msra.mxu0 %v1361
  %2270 = vmatprep.subr.mxu0 0.0
  %2271 = vmatpush1.msra.mxu0 %v1360
  %2272 = vmatprep.subr.mxu0 0.0
  %2273 = vmatpush1.msra.mxu0 %v1359
  %2274 = vmatprep.subr.mxu0 0.0
  %2275 = vmatpush1.msra.mxu0 %v1358
  %2276 = vmatprep.subr.mxu0 0.0
  %2277 = vmatpush2.msra.mxu0 0.0
  %2278 = vmatprep.subr.mxu0 0.0
  %2279 = vmatpush2.msra.mxu0 0.0
  %2280 = vmatprep.subr.mxu0 0.0
  %2281 = vmatpush2.msra.mxu0 0.0
  %2282 = vmatprep.subr.mxu0 0.0
  %2283 = vmatpush2.msra.mxu0 0.0
  %2284 = vmatprep.subr.mxu0 0.0
  %2285 = vmatpush2.msra.mxu0 0.0
  %2286 = vmatprep.subr.mxu0 0.0
  %2287 = vmatpush2.msra.mxu0 0.0
  %2288 = vmatprep.subr.mxu0 0.0
  %2289 = vmatpush2.msra.mxu0 0.0
  %2290 = vmatprep.subr.mxu0 0.0
  %2291 = vmatpush2.msra.mxu0 0.0
  %2292 = vmatprep.subr.mxu0 0.0
  %2293 = vmatpush2.msra.mxu0 0.0
  %2294 = vmatprep.subr.mxu0 0.0
  %2295 = vmatpush2.msra.mxu0 0.0
  %2296 = vmatprep.subr.mxu0 0.0
  %2297 = vmatpush2.msra.mxu0 0.0
  %2298 = vmatprep.subr.mxu0 0.0
  %2299 = vmatpush2.msra.mxu0 0.0
  %2300 = vmatprep.subr.mxu0 0.0
  %2301 = vmatpush2.msra.mxu0 0.0
  %2302 = vmatprep.subr.mxu0 0.0
  %2303 = vmatpush2.msra.mxu0 0.0
  %2304 = vmatprep.subr.mxu0 0.0
  %2305 = vmatpush2.msra.mxu0 0.0
  %2306 = vmatprep.subr.mxu0 0.0
  %2307 = vmatpush2.msra.mxu0 0.0
  %2308 = vmatprep.mubr.f32.mxu0 0.0
  %2309 = vmatmul.mubr.f32.gmra.mxu0 %v2242
  %v2310 = vpop.f32.mrf.mxu0
  %v2311 = vadd.f32 %v2238, %v2310
  %v2312 = vpop.f32.mrf.mxu0
  %2313 = vdwg.mxu0
  %v2314 = vadd.f32 %v2311, %v1514
  %v2315 = vmax.f32 %v2314, 0.0
  %2316 = vmatprep.subr.mxu0 0.0
  %2317 = vmatpush1.msra.mxu0 0.0
  %2318 = vmatprep.subr.mxu0 0.0
  %2319 = vmatpush1.msra.mxu0 0.0
  %2320 = vmatprep.subr.mxu0 0.0
  %2321 = vmatpush1.msra.mxu0 0.0
  %2322 = vmatprep.subr.mxu0 0.0
  %2323 = vmatpush1.msra.mxu0 0.0
  %2324 = vmatprep.subr.mxu0 0.0
  %2325 = vmatpush1.msra.mxu0 0.0
  %2326 = vmatprep.subr.mxu0 0.0
  %2327 = vmatpush1.msra.mxu0 0.0
  %2328 = vmatprep.subr.mxu0 0.0
  %2329 = vmatpush1.msra.mxu0 0.0
  %2330 = vmatprep.subr.mxu0 0.0
  %2331 = vmatpush1.msra.mxu0 0.0
  %2332 = vmatprep.subr.mxu0 0.0
  %2333 = vmatpush1.msra.mxu0 0.0
  %2334 = vmatprep.subr.mxu0 0.0
  %2335 = vmatpush1.msra.mxu0 0.0
  %2336 = vmatprep.subr.mxu0 0.0
  %2337 = vmatpush1.msra.mxu0 0.0
  %2338 = vmatprep.subr.mxu0 0.0
  %2339 = vmatpush1.msra.mxu0 0.0
  %2340 = vmatprep.subr.mxu0 0.0
  %2341 = vmatpush1.msra.mxu0 %v1529
  %2342 = vmatprep.subr.mxu0 0.0
  %2343 = vmatpush1.msra.mxu0 %v1528
  %2344 = vmatprep.subr.mxu0 0.0
  %2345 = vmatpush1.msra.mxu0 %v1527
  %2346 = vmatprep.subr.mxu0 0.0
  %2347 = vmatpush1.msra.mxu0 %v1526
  %2348 = vmatprep.subr.mxu0 0.0
  %2349 = vmatpush2.msra.mxu0 0.0
  %2350 = vmatprep.subr.mxu0 0.0
  %2351 = vmatpush2.msra.mxu0 0.0
  %2352 = vmatprep.subr.mxu0 0.0
  %2353 = vmatpush2.msra.mxu0 0.0
  %2354 = vmatprep.subr.mxu0 0.0
  %2355 = vmatpush2.msra.mxu0 0.0
  %2356 = vmatprep.subr.mxu0 0.0
  %2357 = vmatpush2.msra.mxu0 0.0
  %2358 = vmatprep.subr.mxu0 0.0
  %2359 = vmatpush2.msra.mxu0 0.0
  %2360 = vmatprep.subr.mxu0 0.0
  %2361 = vmatpush2.msra.mxu0 0.0
  %2362 = vmatprep.subr.mxu0 0.0
  %2363 = vmatpush2.msra.mxu0 0.0
  %2364 = vmatprep.subr.mxu0 0.0
  %2365 = vmatpush2.msra.mxu0 0.0
  %2366 = vmatprep.subr.mxu0 0.0
  %2367 = vmatpush2.msra.mxu0 0.0
  %2368 = vmatprep.subr.mxu0 0.0
  %2369 = vmatpush2.msra.mxu0 0.0
  %2370 = vmatprep.subr.mxu0 0.0
  %2371 = vmatpush2.msra.mxu0 0.0
  %2372 = vmatprep.subr.mxu0 0.0
  %2373 = vmatpush2.msra.mxu0 0.0
  %2374 = vmatprep.subr.mxu0 0.0
  %2375 = vmatpush2.msra.mxu0 0.0
  %2376 = vmatprep.subr.mxu0 0.0
  %2377 = vmatpush2.msra.mxu0 0.0
  %2378 = vmatprep.subr.mxu0 0.0
  %2379 = vmatpush2.msra.mxu0 0.0
  %2380 = vmatprep.mubr.f32.mxu0 0.0
  %2381 = vmatmul.mubr.f32.gmra.mxu0 %v1925
  %v2382 = vpop.f32.mrf.mxu0
  %v2383 = vadd.f32 0.0, %v2382
  %v2384 = vpop.f32.mrf.mxu0
  %2385 = vdwg.mxu0
  %2386 = vmatprep.subr.mxu0 0.0
  %2387 = vmatpush1.msra.mxu0 0.0
  %2388 = vmatprep.subr.mxu0 0.0
  %2389 = vmatpush1.msra.mxu0 0.0
  %2390 = vmatprep.subr.mxu0 0.0
  %2391 = vmatpush1.msra.mxu0 0.0
  %2392 = vmatprep.subr.mxu0 0.0
  %2393 = vmatpush1.msra.mxu0 0.0
  %2394 = vmatprep.subr.mxu0 0.0
  %2395 = vmatpush1.msra.mxu0 0.0
  %2396 = vmatprep.subr.mxu0 0.0
  %2397 = vmatpush1.msra.mxu0 0.0
  %2398 = vmatprep.subr.mxu0 0.0
  %2399 = vmatpush1.msra.mxu0 0.0
  %2400 = vmatprep.subr.mxu0 0.0
  %2401 = vmatpush1.msra.mxu0 0.0
  %2402 = vmatprep.subr.mxu0 0.0
  %2403 = vmatpush1.msra.mxu0 %v1525
  %2404 = vmatprep.subr.mxu0 0.0
  %2405 = vmatpush1.msra.mxu0 %v1524
  %2406 = vmatprep.subr.mxu0 0.0
  %2407 = vmatpush1.msra.mxu0 %v1523
  %2408 = vmatprep.subr.mxu0 0.0
  %2409 = vmatpush1.msra.mxu0 %v1522
  %2410 = vmatprep.subr.mxu0 0.0
  %2411 = vmatpush1.msra.mxu0 %v1521
  %2412 = vmatprep.subr.mxu0 0.0
  %2413 = vmatpush1.msra.mxu0 %v1520
  %2414 = vmatprep.subr.mxu0 0.0
  %2415 = vmatpush1.msra.mxu0 %v1519
  %2416 = vmatprep.subr.mxu0 0.0
  %2417 = vmatpush1.msra.mxu0 %v1518
  %2418 = vmatprep.subr.mxu0 0.0
  %2419 = vmatpush2.msra.mxu0 0.0
  %2420 = vmatprep.subr.mxu0 0.0
  %2421 = vmatpush2.msra.mxu0 0.0
  %2422 = vmatprep.subr.mxu0 0.0
  %2423 = vmatpush2.msra.mxu0 0.0
  %2424 = vmatprep.subr.mxu0 0.0
  %2425 = vmatpush2.msra.mxu0 0.0
  %2426 = vmatprep.subr.mxu0 0.0
  %2427 = vmatpush2.msra.mxu0 0.0
  %2428 = vmatprep.subr.mxu0 0.0
  %2429 = vmatpush2.msra.mxu0 0.0
  %2430 = vmatprep.subr.mxu0 0.0
  %2431 = vmatpush2.msra.mxu0 0.0
  %2432 = vmatprep.subr.mxu0 0.0
  %2433 = vmatpush2.msra.mxu0 0.0
  %2434 = vmatprep.subr.mxu0 0.0
  %2435 = vmatpush2.msra.mxu0 0.0
  %2436 = vmatprep.subr.mxu0 0.0
  %2437 = vmatpush2.msra.mxu0 0.0
  %2438 = vmatprep.subr.mxu0 0.0
  %2439 = vmatpush2.msra.mxu0 0.0
  %2440 = vmatprep.subr.mxu0 0.0
  %2441 = vmatpush2.msra.mxu0 0.0
  %2442 = vmatprep.subr.mxu0 0.0
  %2443 = vmatpush2.msra.mxu0 0.0
  %2444 = vmatprep.subr.mxu0 0.0
  %2445 = vmatpush2.msra.mxu0 0.0
  %2446 = vmatprep.subr.mxu0 0.0
  %2447 = vmatpush2.msra.mxu0 0.0
  %2448 = vmatprep.subr.mxu0 0.0
  %2449 = vmatpush2.msra.mxu0 0.0
  %2450 = vmatprep.mubr.f32.mxu0 0.0
  %2451 = vmatmul.mubr.f32.gmra.mxu0 %v1998
  %v2452 = vpop.f32.mrf.mxu0
  %v2453 = vadd.f32 %v2383, %v2452
  %v2454 = vpop.f32.mrf.mxu0
  %2455 = vdwg.mxu0
  %v2456 = vadd.f32 %v2453, %v1675
  %v2457 = vmax.f32 %v2456, 0.0
  %s2458 = scalar_lea.vmem [#allocation2], 4
  %v2459 = vld [vmem:[%s2458] sm:$0x3]
  %s2460 = scalar_lea.vmem %s6, 64
  %v2461 = vld [vmem:[%s2460] sm:$0xff]
  %v2462 = vld [vmem:[%s2460 + $0x8] sm:$0xff]
  %v2463 = vld [vmem:[%s2460 + $0x10] sm:$0xff]
  %v2464 = vld [vmem:[%s2460 + $0x18] sm:$0xff]
  %v2466 = vsel %vm830, %v2315, 0
  %2468 = vmatprep.subr.mxu0 0.0
  %2469 = vmatpush1.msra.mxu0 0.0
  %2470 = vmatprep.subr.mxu0 0.0
  %2471 = vmatpush1.msra.mxu0 0.0
  %2472 = vmatprep.subr.mxu0 0.0
  %2473 = vmatpush1.msra.mxu0 0.0
  %2474 = vmatprep.subr.mxu0 0.0
  %2475 = vmatpush1.msra.mxu0 0.0
  %2476 = vmatprep.subr.mxu0 0.0
  %2477 = vmatpush1.msra.mxu0 0.0
  %2478 = vmatprep.subr.mxu0 0.0
  %2479 = vmatpush1.msra.mxu0 0.0
  %2480 = vmatprep.subr.mxu0 0.0
  %2481 = vmatpush1.msra.mxu0 0.0
  %2482 = vmatprep.subr.mxu0 0.0
  %2483 = vmatpush1.msra.mxu0 0.0
  %2484 = vmatprep.subr.mxu0 0.0
  %2485 = vmatpush1.msra.mxu0 0.0
  %2486 = vmatprep.subr.mxu0 0.0
  %2487 = vmatpush1.msra.mxu0 0.0
  %2488 = vmatprep.subr.mxu0 0.0
  %2489 = vmatpush1.msra.mxu0 0.0
  %2490 = vmatprep.subr.mxu0 0.0
  %2491 = vmatpush1.msra.mxu0 0.0
  %2492 = vmatprep.subr.mxu0 0.0
  %2493 = vmatpush1.msra.mxu0 %v2464
  %2494 = vmatprep.subr.mxu0 0.0
  %2495 = vmatpush1.msra.mxu0 %v2463
  %2496 = vmatprep.subr.mxu0 0.0
  %2497 = vmatpush1.msra.mxu0 %v2462
  %2498 = vmatprep.subr.mxu0 0.0
  %2499 = vmatpush1.msra.mxu0 %v2461
  %2500 = vmatprep.subr.mxu0 0.0
  %2501 = vmatpush2.msra.mxu0 0.0
  %2502 = vmatprep.subr.mxu0 0.0
  %2503 = vmatpush2.msra.mxu0 0.0
  %2504 = vmatprep.subr.mxu0 0.0
  %2505 = vmatpush2.msra.mxu0 0.0
  %2506 = vmatprep.subr.mxu0 0.0
  %2507 = vmatpush2.msra.mxu0 0.0
  %2508 = vmatprep.subr.mxu0 0.0
  %2509 = vmatpush2.msra.mxu0 0.0
  %2510 = vmatprep.subr.mxu0 0.0
  %2511 = vmatpush2.msra.mxu0 0.0
  %2512 = vmatprep.subr.mxu0 0.0
  %2513 = vmatpush2.msra.mxu0 0.0
  %2514 = vmatprep.subr.mxu0 0.0
  %2515 = vmatpush2.msra.mxu0 0.0
  %2516 = vmatprep.subr.mxu0 0.0
  %2517 = vmatpush2.msra.mxu0 0.0
  %2518 = vmatprep.subr.mxu0 0.0
  %2519 = vmatpush2.msra.mxu0 0.0
  %2520 = vmatprep.subr.mxu0 0.0
  %2521 = vmatpush2.msra.mxu0 0.0
  %2522 = vmatprep.subr.mxu0 0.0
  %2523 = vmatpush2.msra.mxu0 0.0
  %2524 = vmatprep.subr.mxu0 0.0
  %2525 = vmatpush2.msra.mxu0 0.0
  %2526 = vmatprep.subr.mxu0 0.0
  %2527 = vmatpush2.msra.mxu0 0.0
  %2528 = vmatprep.subr.mxu0 0.0
  %2529 = vmatpush2.msra.mxu0 0.0
  %2530 = vmatprep.subr.mxu0 0.0
  %2531 = vmatpush2.msra.mxu0 0.0
  %2532 = vmatprep.mubr.f32.mxu0 0.0
  %2533 = vmatmul.mubr.f32.gmra.mxu0 %v2466
  %v2534 = vpop.f32.mrf.mxu0
  %v2535 = vadd.f32 0.0, %v2534
  %v2536 = vpop.f32.mrf.mxu0
  %2537 = vdwg.mxu0
  %v2538 = vadd.f32 %v2459, %v2535
  %v2539 = vxor.u32 %v2538, 2147483648
  %v2540 = vmul.f32 %v2539, 1.442695
  %v2541 = vpow.pop %v2540
  %v2542 = vadd.f32 %v2541, 1.0
  %v2543 = vrcp.pop %v2542
  %v2544 = vmul.f32 1.0, %v2543
  %v2545 = vtanh.pop %v2538
  %v2546 = vmul.f32 %v2544, %v1777
  %2548 = vrot.lane.b32.xlu0 %v2545, 64
  %v2549 = vpop.permute.xlu0 %2548
  %v2551 = vmul.f32 %v2544, %v2549
  %2553 = vrot.lane.b32.xlu0 %v2551, 32
  %v2554 = vpop.permute.xlu0 %2553
  %v2556 = vadd.f32 %v2546, %v2554
  %v2557 = vtanh.pop %v2556
  %2559 = vrot.lane.b32.xlu0 %v2557, 64
  %v2560 = vpop.permute.xlu0 %2559
  %v2562 = vmul.f32 %v2544, %v2560
  %s2563 = scalar_lea.vmem [#allocation3], 8
  %v2564 = vld [vmem:[%s2563] sm:$0xf]
  %s2565 = scalar_lea.vmem %s7, 256
  %v2566 = vld [vmem:[%s2565] sm:$0xff]
  %v2567 = vld [vmem:[%s2565 + $0x8] sm:$0xff]
  %v2568 = vld [vmem:[%s2565 + $0x10] sm:$0xff]
  %v2569 = vld [vmem:[%s2565 + $0x18] sm:$0xff]
  %v2570 = vld [vmem:[%s2565 + $0x20] sm:$0xff]
  %v2571 = vld [vmem:[%s2565 + $0x28] sm:$0xff]
  %v2572 = vld [vmem:[%s2565 + $0x30] sm:$0xff]
  %v2573 = vld [vmem:[%s2565 + $0x38] sm:$0xff]
  %v2574 = vld [vmem:[%s2565 + $0x40] sm:$0xff]
  %v2575 = vld [vmem:[%s2565 + $0x48] sm:$0xff]
  %v2576 = vld [vmem:[%s2565 + $0x50] sm:$0xff]
  %v2577 = vld [vmem:[%s2565 + $0x58] sm:$0xff]
  %v2578 = vld [vmem:[%s2565 + $0x60] sm:$0xff]
  %v2579 = vld [vmem:[%s2565 + $0x68] sm:$0xff]
  %v2580 = vld [vmem:[%s2565 + $0x70] sm:$0xff]
  %v2581 = vld [vmem:[%s2565 + $0x78] sm:$0xff]
  %v2583 = vsel %vm946, %v2457, 0
  %2585 = vmatprep.subr.mxu0 0.0
  %2586 = vmatpush1.msra.mxu0 0.0
  %2587 = vmatprep.subr.mxu0 0.0
  %2588 = vmatpush1.msra.mxu0 0.0
  %2589 = vmatprep.subr.mxu0 0.0
  %2590 = vmatpush1.msra.mxu0 0.0
  %2591 = vmatprep.subr.mxu0 0.0
  %2592 = vmatpush1.msra.mxu0 0.0
  %2593 = vmatprep.subr.mxu0 0.0
  %2594 = vmatpush1.msra.mxu0 0.0
  %2595 = vmatprep.subr.mxu0 0.0
  %2596 = vmatpush1.msra.mxu0 0.0
  %2597 = vmatprep.subr.mxu0 0.0
  %2598 = vmatpush1.msra.mxu0 0.0
  %2599 = vmatprep.subr.mxu0 0.0
  %2600 = vmatpush1.msra.mxu0 0.0
  %2601 = vmatprep.subr.mxu0 %v2581
  %2602 = vmatpush1.msra.mxu0 %v2580
  %2603 = vmatprep.subr.mxu0 %v2579
  %2604 = vmatpush1.msra.mxu0 %v2578
  %2605 = vmatprep.subr.mxu0 %v2577
  %2606 = vmatpush1.msra.mxu0 %v2576
  %2607 = vmatprep.subr.mxu0 %v2575
  %2608 = vmatpush1.msra.mxu0 %v2574
  %2609 = vmatprep.subr.mxu0 %v2573
  %2610 = vmatpush1.msra.mxu0 %v2572
  %2611 = vmatprep.subr.mxu0 %v2571
  %2612 = vmatpush1.msra.mxu0 %v2570
  %2613 = vmatprep.subr.mxu0 %v2569
  %2614 = vmatpush1.msra.mxu0 %v2568
  %2615 = vmatprep.subr.mxu0 %v2567
  %2616 = vmatpush1.msra.mxu0 %v2566
  %2617 = vmatprep.subr.mxu0 0.0
  %2618 = vmatpush2.msra.mxu0 0.0
  %2619 = vmatprep.subr.mxu0 0.0
  %2620 = vmatpush2.msra.mxu0 0.0
  %2621 = vmatprep.subr.mxu0 0.0
  %2622 = vmatpush2.msra.mxu0 0.0
  %2623 = vmatprep.subr.mxu0 0.0
  %2624 = vmatpush2.msra.mxu0 0.0
  %2625 = vmatprep.subr.mxu0 0.0
  %2626 = vmatpush2.msra.mxu0 0.0
  %2627 = vmatprep.subr.mxu0 0.0
  %2628 = vmatpush2.msra.mxu0 0.0
  %2629 = vmatprep.subr.mxu0 0.0
  %2630 = vmatpush2.msra.mxu0 0.0
  %2631 = vmatprep.subr.mxu0 0.0
  %2632 = vmatpush2.msra.mxu0 0.0
  %2633 = vmatprep.subr.mxu0 0.0
  %2634 = vmatpush2.msra.mxu0 0.0
  %2635 = vmatprep.subr.mxu0 0.0
  %2636 = vmatpush2.msra.mxu0 0.0
  %2637 = vmatprep.subr.mxu0 0.0
  %2638 = vmatpush2.msra.mxu0 0.0
  %2639 = vmatprep.subr.mxu0 0.0
  %2640 = vmatpush2.msra.mxu0 0.0
  %2641 = vmatprep.subr.mxu0 0.0
  %2642 = vmatpush2.msra.mxu0 0.0
  %2643 = vmatprep.subr.mxu0 0.0
  %2644 = vmatpush2.msra.mxu0 0.0
  %2645 = vmatprep.subr.mxu0 0.0
  %2646 = vmatpush2.msra.mxu0 0.0
  %2647 = vmatprep.subr.mxu0 0.0
  %2648 = vmatpush2.msra.mxu0 0.0
  %2649 = vmatprep.mubr.f32.mxu0 0.0
  %2650 = vmatmul.mubr.f32.gmra.mxu0 %v2583
  %v2651 = vpop.f32.mrf.mxu0
  %v2652 = vadd.f32 0.0, %v2651
  %v2653 = vpop.f32.mrf.mxu0
  %v2654 = vadd.f32 0.0, %v2653
  %2655 = vdwg.mxu0
  %v2658 = vcombine.low %v2652, %v2654
  %v2660 = vunpack.c.l.s4 1983009808
  %v2661 = vunpack.c.0.s8 %v2660
  %v2662 = vlaneseq
  %v2663 = vshrl.u32 %v2662, 7
  %v2664 = vsub.s32 %v2661, %v2663
  %v2665 = vrot.slane %v2658, %v2664
  %v2667 = vadd.f32 %v2564, %v2665
  %v2668 = vxor.u32 %v2667, 2147483648
  %v2669 = vmul.f32 %v2668, 1.442695
  %v2670 = vpow.pop %v2669
  %v2671 = vadd.f32 %v2670, 1.0
  %v2672 = vrcp.pop %v2671
  %v2673 = vmul.f32 1.0, %v2672
  %v2675 = vrot.slane %v2667, 2
  %v2677 = vtanh.pop %v2675
  %2678 = vrot.lane.b32.xlu0 %v2667, 64
  %v2679 = vpop.permute.xlu0 %2678
  %v2680 = vrot.slane %v2679, 2
  %v2682 = vxor.u32 %v2680, 2147483648
  %v2683 = vmul.f32 %v2682, 1.442695
  %v2684 = vpow.pop %v2683
  %v2685 = vadd.f32 %v2684, 1.0
  %v2686 = vrcp.pop %v2685
  %v2687 = vmul.f32 1.0, %v2686
  %v2688 = vmul.f32 %v2673, %v1915
  %v2689 = vmul.f32 %v2673, %v2677
  %2691 = vrot.lane.b32.xlu0 %v2689, 64
  %v2692 = vpop.permute.xlu0 %2691
  %v2694 = vadd.f32 %v2688, %v2692
  %v2695 = vtanh.pop %v2694
  %2697 = vrot.lane.b32.xlu0 %v2695, 64
  %v2698 = vpop.permute.xlu0 %2697
  %v2700 = vmul.f32 %v2687, %v2698
  %2702 = vrot.lane.b32.xlu0 %v2562, 32
  %v2703 = vpop.permute.xlu0 %2702
  %v2704 = vsel %vm830, %v2703, 0
  %2706 = vmatprep.subr.mxu0 0.0
  %2707 = vmatpush1.msra.mxu0 0.0
  %2708 = vmatprep.subr.mxu0 0.0
  %2709 = vmatpush1.msra.mxu0 0.0
  %2710 = vmatprep.subr.mxu0 0.0
  %2711 = vmatpush1.msra.mxu0 0.0
  %2712 = vmatprep.subr.mxu0 0.0
  %2713 = vmatpush1.msra.mxu0 0.0
  %2714 = vmatprep.subr.mxu0 0.0
  %2715 = vmatpush1.msra.mxu0 0.0
  %2716 = vmatprep.subr.mxu0 0.0
  %2717 = vmatpush1.msra.mxu0 0.0
  %2718 = vmatprep.subr.mxu0 0.0
  %2719 = vmatpush1.msra.mxu0 0.0
  %2720 = vmatprep.subr.mxu0 0.0
  %2721 = vmatpush1.msra.mxu0 0.0
  %2722 = vmatprep.subr.mxu0 0.0
  %2723 = vmatpush1.msra.mxu0 0.0
  %2724 = vmatprep.subr.mxu0 0.0
  %2725 = vmatpush1.msra.mxu0 0.0
  %2726 = vmatprep.subr.mxu0 0.0
  %2727 = vmatpush1.msra.mxu0 0.0
  %2728 = vmatprep.subr.mxu0 0.0
  %2729 = vmatpush1.msra.mxu0 0.0
  %2730 = vmatprep.subr.mxu0 0.0
  %2731 = vmatpush1.msra.mxu0 %v1070
  %2732 = vmatprep.subr.mxu0 0.0
  %2733 = vmatpush1.msra.mxu0 %v1069
  %2734 = vmatprep.subr.mxu0 0.0
  %2735 = vmatpush1.msra.mxu0 %v1068
  %2736 = vmatprep.subr.mxu0 0.0
  %2737 = vmatpush1.msra.mxu0 %v1067
  %2738 = vmatprep.subr.mxu0 0.0
  %2739 = vmatpush2.msra.mxu0 0.0
  %2740 = vmatprep.subr.mxu0 0.0
  %2741 = vmatpush2.msra.mxu0 0.0
  %2742 = vmatprep.subr.mxu0 0.0
  %2743 = vmatpush2.msra.mxu0 0.0
  %2744 = vmatprep.subr.mxu0 0.0
  %2745 = vmatpush2.msra.mxu0 0.0
  %2746 = vmatprep.subr.mxu0 0.0
  %2747 = vmatpush2.msra.mxu0 0.0
  %2748 = vmatprep.subr.mxu0 0.0
  %2749 = vmatpush2.msra.mxu0 0.0
  %2750 = vmatprep.subr.mxu0 0.0
  %2751 = vmatpush2.msra.mxu0 0.0
  %2752 = vmatprep.subr.mxu0 0.0
  %2753 = vmatpush2.msra.mxu0 0.0
  %2754 = vmatprep.subr.mxu0 0.0
  %2755 = vmatpush2.msra.mxu0 0.0
  %2756 = vmatprep.subr.mxu0 0.0
  %2757 = vmatpush2.msra.mxu0 0.0
  %2758 = vmatprep.subr.mxu0 0.0
  %2759 = vmatpush2.msra.mxu0 0.0
  %2760 = vmatprep.subr.mxu0 0.0
  %2761 = vmatpush2.msra.mxu0 0.0
  %2762 = vmatprep.subr.mxu0 0.0
  %2763 = vmatpush2.msra.mxu0 0.0
  %2764 = vmatprep.subr.mxu0 0.0
  %2765 = vmatpush2.msra.mxu0 0.0
  %2766 = vmatprep.subr.mxu0 0.0
  %2767 = vmatpush2.msra.mxu0 0.0
  %2768 = vmatprep.subr.mxu0 0.0
  %2769 = vmatpush2.msra.mxu0 0.0
  %2770 = vmatprep.mubr.f32.mxu0 0.0
  %2771 = vmatmul.mubr.f32.gmra.mxu0 %v2704
  %v2772 = vpop.f32.mrf.mxu0
  %v2773 = vadd.f32 %v1076, %v2772
  %v2774 = vpop.f32.mrf.mxu0
  %2775 = vdwg.mxu0
  %v2777 = vsel %vm946, %v2700, 0
  %2779 = vmatprep.subr.mxu0 0.0
  %2780 = vmatpush1.msra.mxu0 0.0
  %2781 = vmatprep.subr.mxu0 0.0
  %2782 = vmatpush1.msra.mxu0 0.0
  %2783 = vmatprep.subr.mxu0 0.0
  %2784 = vmatpush1.msra.mxu0 0.0
  %2785 = vmatprep.subr.mxu0 0.0
  %2786 = vmatpush1.msra.mxu0 0.0
  %2787 = vmatprep.subr.mxu0 0.0
  %2788 = vmatpush1.msra.mxu0 0.0
  %2789 = vmatprep.subr.mxu0 0.0
  %2790 = vmatpush1.msra.mxu0 0.0
  %2791 = vmatprep.subr.mxu0 0.0
  %2792 = vmatpush1.msra.mxu0 0.0
  %2793 = vmatprep.subr.mxu0 0.0
  %2794 = vmatpush1.msra.mxu0 0.0
  %2795 = vmatprep.subr.mxu0 0.0
  %2796 = vmatpush1.msra.mxu0 %v1160
  %2797 = vmatprep.subr.mxu0 0.0
  %2798 = vmatpush1.msra.mxu0 %v1159
  %2799 = vmatprep.subr.mxu0 0.0
  %2800 = vmatpush1.msra.mxu0 %v1158
  %2801 = vmatprep.subr.mxu0 0.0
  %2802 = vmatpush1.msra.mxu0 %v1157
  %2803 = vmatprep.subr.mxu0 0.0
  %2804 = vmatpush1.msra.mxu0 %v1156
  %2805 = vmatprep.subr.mxu0 0.0
  %2806 = vmatpush1.msra.mxu0 %v1155
  %2807 = vmatprep.subr.mxu0 0.0
  %2808 = vmatpush1.msra.mxu0 %v1154
  %2809 = vmatprep.subr.mxu0 0.0
  %2810 = vmatpush1.msra.mxu0 %v1153
  %2811 = vmatprep.subr.mxu0 0.0
  %2812 = vmatpush2.msra.mxu0 0.0
  %2813 = vmatprep.subr.mxu0 0.0
  %2814 = vmatpush2.msra.mxu0 0.0
  %2815 = vmatprep.subr.mxu0 0.0
  %2816 = vmatpush2.msra.mxu0 0.0
  %2817 = vmatprep.subr.mxu0 0.0
  %2818 = vmatpush2.msra.mxu0 0.0
  %2819 = vmatprep.subr.mxu0 0.0
  %2820 = vmatpush2.msra.mxu0 0.0
  %2821 = vmatprep.subr.mxu0 0.0
  %2822 = vmatpush2.msra.mxu0 0.0
  %2823 = vmatprep.subr.mxu0 0.0
  %2824 = vmatpush2.msra.mxu0 0.0
  %2825 = vmatprep.subr.mxu0 0.0
  %2826 = vmatpush2.msra.mxu0 0.0
  %2827 = vmatprep.subr.mxu0 0.0
  %2828 = vmatpush2.msra.mxu0 0.0
  %2829 = vmatprep.subr.mxu0 0.0
  %2830 = vmatpush2.msra.mxu0 0.0
  %2831 = vmatprep.subr.mxu0 0.0
  %2832 = vmatpush2.msra.mxu0 0.0
  %2833 = vmatprep.subr.mxu0 0.0
  %2834 = vmatpush2.msra.mxu0 0.0
  %2835 = vmatprep.subr.mxu0 0.0
  %2836 = vmatpush2.msra.mxu0 0.0
  %2837 = vmatprep.subr.mxu0 0.0
  %2838 = vmatpush2.msra.mxu0 0.0
  %2839 = vmatprep.subr.mxu0 0.0
  %2840 = vmatpush2.msra.mxu0 0.0
  %2841 = vmatprep.subr.mxu0 0.0
  %2842 = vmatpush2.msra.mxu0 0.0
  %2843 = vmatprep.mubr.f32.mxu0 0.0
  %2844 = vmatmul.mubr.f32.gmra.mxu0 %v2777
  %v2845 = vpop.f32.mrf.mxu0
  %v2846 = vadd.f32 %v1166, %v2845
  %v2847 = vpop.f32.mrf.mxu0
  %2848 = vdwg.mxu0
  %2849 = vmatprep.subr.mxu0 0.0
  %2850 = vmatpush1.msra.mxu0 0.0
  %2851 = vmatprep.subr.mxu0 0.0
  %2852 = vmatpush1.msra.mxu0 0.0
  %2853 = vmatprep.subr.mxu0 0.0
  %2854 = vmatpush1.msra.mxu0 0.0
  %2855 = vmatprep.subr.mxu0 0.0
  %2856 = vmatpush1.msra.mxu0 0.0
  %2857 = vmatprep.subr.mxu0 0.0
  %2858 = vmatpush1.msra.mxu0 0.0
  %2859 = vmatprep.subr.mxu0 0.0
  %2860 = vmatpush1.msra.mxu0 0.0
  %2861 = vmatprep.subr.mxu0 0.0
  %2862 = vmatpush1.msra.mxu0 0.0
  %2863 = vmatprep.subr.mxu0 0.0
  %2864 = vmatpush1.msra.mxu0 0.0
  %2865 = vmatprep.subr.mxu0 0.0
  %2866 = vmatpush1.msra.mxu0 %v1248
  %2867 = vmatprep.subr.mxu0 0.0
  %2868 = vmatpush1.msra.mxu0 %v1247
  %2869 = vmatprep.subr.mxu0 0.0
  %2870 = vmatpush1.msra.mxu0 %v1246
  %2871 = vmatprep.subr.mxu0 0.0
  %2872 = vmatpush1.msra.mxu0 %v1245
  %2873 = vmatprep.subr.mxu0 0.0
  %2874 = vmatpush1.msra.mxu0 %v1244
  %2875 = vmatprep.subr.mxu0 0.0
  %2876 = vmatpush1.msra.mxu0 %v1243
  %2877 = vmatprep.subr.mxu0 0.0
  %2878 = vmatpush1.msra.mxu0 %v1242
  %2879 = vmatprep.subr.mxu0 0.0
  %2880 = vmatpush1.msra.mxu0 %v1241
  %2881 = vmatprep.subr.mxu0 0.0
  %2882 = vmatpush2.msra.mxu0 0.0
  %2883 = vmatprep.subr.mxu0 0.0
  %2884 = vmatpush2.msra.mxu0 0.0
  %2885 = vmatprep.subr.mxu0 0.0
  %2886 = vmatpush2.msra.mxu0 0.0
  %2887 = vmatprep.subr.mxu0 0.0
  %2888 = vmatpush2.msra.mxu0 0.0
  %2889 = vmatprep.subr.mxu0 0.0
  %2890 = vmatpush2.msra.mxu0 0.0
  %2891 = vmatprep.subr.mxu0 0.0
  %2892 = vmatpush2.msra.mxu0 0.0
  %2893 = vmatprep.subr.mxu0 0.0
  %2894 = vmatpush2.msra.mxu0 0.0
  %2895 = vmatprep.subr.mxu0 0.0
  %2896 = vmatpush2.msra.mxu0 0.0
  %2897 = vmatprep.subr.mxu0 0.0
  %2898 = vmatpush2.msra.mxu0 0.0
  %2899 = vmatprep.subr.mxu0 0.0
  %2900 = vmatpush2.msra.mxu0 0.0
  %2901 = vmatprep.subr.mxu0 0.0
  %2902 = vmatpush2.msra.mxu0 0.0
  %2903 = vmatprep.subr.mxu0 0.0
  %2904 = vmatpush2.msra.mxu0 0.0
  %2905 = vmatprep.subr.mxu0 0.0
  %2906 = vmatpush2.msra.mxu0 0.0
  %2907 = vmatprep.subr.mxu0 0.0
  %2908 = vmatpush2.msra.mxu0 0.0
  %2909 = vmatprep.subr.mxu0 0.0
  %2910 = vmatpush2.msra.mxu0 0.0
  %2911 = vmatprep.subr.mxu0 0.0
  %2912 = vmatpush2.msra.mxu0 0.0
  %2913 = vmatprep.mubr.f32.mxu0 0.0
  %2914 = vmatmul.mubr.f32.gmra.mxu0 %v2777
  %v2915 = vpop.f32.mrf.mxu0
  %v2916 = vadd.f32 %v1254, %v2915
  %v2917 = vpop.f32.mrf.mxu0
  %2918 = vdwg.mxu0
  %v2919 = vmul.f32 %v2773, %v2846
  %v2920 = vsel %vm1327, %v2919, 0.0
  %2921 = vadd.xlane.f32.xlu0 %v2920
  %v2922 = vpop.xlane.xlu0 %2921
  %v2923 = vmul.f32 %v2922, 0.17677669
  %2925 = vrot.lane.b32.xlu0 %v2846, 96
  %v2926 = vpop.permute.xlu0 %2925
  %v2928 = vmul.f32 %v2773, %v2926
  %v2929 = vsel %vm1327, %v2928, 0.0
  %2930 = vadd.xlane.f32.xlu0 %v2929
  %v2931 = vpop.xlane.xlu0 %2930
  %v2932 = vmul.f32 %v2931, 0.17677669
  %v2933 = vmax.f32 %v2923, %v2932
  %v2934 = vsub.f32 %v2923, %v2933
  %v2935 = vmul.f32 %v2934, 1.442695
  %v2936 = vpow.pop %v2935
  %v2937 = vsub.f32 %v2932, %v2933
  %v2938 = vmul.f32 %v2937, 1.442695
  %v2939 = vpow.pop %v2938
  %v2940 = vadd.f32 %v2936, %v2939
  %v2941 = vmul.f32 %v2936, %v2916
  %v2942 = vmul.f32 %v2939, %v2916
  %2944 = vrot.lane.b32.xlu0 %v2942, 96
  %v2945 = vpop.permute.xlu0 %2944
  %v2947 = vadd.f32 %v2941, %v2945
  %v2948 = vrcp.pop %v2940
  %v2949 = vmul.f32 %v2947, %v2948
  %2950 = vmatprep.subr.mxu0 0.0
  %2951 = vmatpush1.msra.mxu0 0.0
  %2952 = vmatprep.subr.mxu0 0.0
  %2953 = vmatpush1.msra.mxu0 0.0
  %2954 = vmatprep.subr.mxu0 0.0
  %2955 = vmatpush1.msra.mxu0 0.0
  %2956 = vmatprep.subr.mxu0 0.0
  %2957 = vmatpush1.msra.mxu0 0.0
  %2958 = vmatprep.subr.mxu0 0.0
  %2959 = vmatpush1.msra.mxu0 0.0
  %2960 = vmatprep.subr.mxu0 0.0
  %2961 = vmatpush1.msra.mxu0 0.0
  %2962 = vmatprep.subr.mxu0 0.0
  %2963 = vmatpush1.msra.mxu0 0.0
  %2964 = vmatprep.subr.mxu0 0.0
  %2965 = vmatpush1.msra.mxu0 0.0
  %2966 = vmatprep.subr.mxu0 0.0
  %2967 = vmatpush1.msra.mxu0 0.0
  %2968 = vmatprep.subr.mxu0 0.0
  %2969 = vmatpush1.msra.mxu0 0.0
  %2970 = vmatprep.subr.mxu0 0.0
  %2971 = vmatpush1.msra.mxu0 0.0
  %2972 = vmatprep.subr.mxu0 0.0
  %2973 = vmatpush1.msra.mxu0 0.0
  %2974 = vmatprep.subr.mxu0 0.0
  %2975 = vmatpush1.msra.mxu0 %v1365
  %2976 = vmatprep.subr.mxu0 0.0
  %2977 = vmatpush1.msra.mxu0 %v1364
  %2978 = vmatprep.subr.mxu0 0.0
  %2979 = vmatpush1.msra.mxu0 %v1363
  %2980 = vmatprep.subr.mxu0 0.0
  %2981 = vmatpush1.msra.mxu0 %v1362
  %2982 = vmatprep.subr.mxu0 0.0
  %2983 = vmatpush2.msra.mxu0 0.0
  %2984 = vmatprep.subr.mxu0 0.0
  %2985 = vmatpush2.msra.mxu0 0.0
  %2986 = vmatprep.subr.mxu0 0.0
  %2987 = vmatpush2.msra.mxu0 0.0
  %2988 = vmatprep.subr.mxu0 0.0
  %2989 = vmatpush2.msra.mxu0 0.0
  %2990 = vmatprep.subr.mxu0 0.0
  %2991 = vmatpush2.msra.mxu0 0.0
  %2992 = vmatprep.subr.mxu0 0.0
  %2993 = vmatpush2.msra.mxu0 0.0
  %2994 = vmatprep.subr.mxu0 0.0
  %2995 = vmatpush2.msra.mxu0 0.0
  %2996 = vmatprep.subr.mxu0 0.0
  %2997 = vmatpush2.msra.mxu0 0.0
  %2998 = vmatprep.subr.mxu0 0.0
  %2999 = vmatpush2.msra.mxu0 0.0
  %3000 = vmatprep.subr.mxu0 0.0
  %3001 = vmatpush2.msra.mxu0 0.0
  %3002 = vmatprep.subr.mxu0 0.0
  %3003 = vmatpush2.msra.mxu0 0.0
  %3004 = vmatprep.subr.mxu0 0.0
  %3005 = vmatpush2.msra.mxu0 0.0
  %3006 = vmatprep.subr.mxu0 0.0
  %3007 = vmatpush2.msra.mxu0 0.0
  %3008 = vmatprep.subr.mxu0 0.0
  %3009 = vmatpush2.msra.mxu0 0.0
  %3010 = vmatprep.subr.mxu0 0.0
  %3011 = vmatpush2.msra.mxu0 0.0
  %3012 = vmatprep.subr.mxu0 0.0
  %3013 = vmatpush2.msra.mxu0 0.0
  %3014 = vmatprep.mubr.f32.mxu0 0.0
  %3015 = vmatmul.mubr.f32.gmra.mxu0 %v2704
  %v3016 = vpop.f32.mrf.mxu0
  %v3017 = vadd.f32 0.0, %v3016
  %v3018 = vpop.f32.mrf.mxu0
  %3019 = vdwg.mxu0
  %v3021 = vsel %vm830, %v2949, 0
  %3023 = vmatprep.subr.mxu0 0.0
  %3024 = vmatpush1.msra.mxu0 0.0
  %3025 = vmatprep.subr.mxu0 0.0
  %3026 = vmatpush1.msra.mxu0 0.0
  %3027 = vmatprep.subr.mxu0 0.0
  %3028 = vmatpush1.msra.mxu0 0.0
  %3029 = vmatprep.subr.mxu0 0.0
  %3030 = vmatpush1.msra.mxu0 0.0
  %3031 = vmatprep.subr.mxu0 0.0
  %3032 = vmatpush1.msra.mxu0 0.0
  %3033 = vmatprep.subr.mxu0 0.0
  %3034 = vmatpush1.msra.mxu0 0.0
  %3035 = vmatprep.subr.mxu0 0.0
  %3036 = vmatpush1.msra.mxu0 0.0
  %3037 = vmatprep.subr.mxu0 0.0
  %3038 = vmatpush1.msra.mxu0 0.0
  %3039 = vmatprep.subr.mxu0 0.0
  %3040 = vmatpush1.msra.mxu0 0.0
  %3041 = vmatprep.subr.mxu0 0.0
  %3042 = vmatpush1.msra.mxu0 0.0
  %3043 = vmatprep.subr.mxu0 0.0
  %3044 = vmatpush1.msra.mxu0 0.0
  %3045 = vmatprep.subr.mxu0 0.0
  %3046 = vmatpush1.msra.mxu0 0.0
  %3047 = vmatprep.subr.mxu0 0.0
  %3048 = vmatpush1.msra.mxu0 %v1361
  %3049 = vmatprep.subr.mxu0 0.0
  %3050 = vmatpush1.msra.mxu0 %v1360
  %3051 = vmatprep.subr.mxu0 0.0
  %3052 = vmatpush1.msra.mxu0 %v1359
  %3053 = vmatprep.subr.mxu0 0.0
  %3054 = vmatpush1.msra.mxu0 %v1358
  %3055 = vmatprep.subr.mxu0 0.0
  %3056 = vmatpush2.msra.mxu0 0.0
  %3057 = vmatprep.subr.mxu0 0.0
  %3058 = vmatpush2.msra.mxu0 0.0
  %3059 = vmatprep.subr.mxu0 0.0
  %3060 = vmatpush2.msra.mxu0 0.0
  %3061 = vmatprep.subr.mxu0 0.0
  %3062 = vmatpush2.msra.mxu0 0.0
  %3063 = vmatprep.subr.mxu0 0.0
  %3064 = vmatpush2.msra.mxu0 0.0
  %3065 = vmatprep.subr.mxu0 0.0
  %3066 = vmatpush2.msra.mxu0 0.0
  %3067 = vmatprep.subr.mxu0 0.0
  %3068 = vmatpush2.msra.mxu0 0.0
  %3069 = vmatprep.subr.mxu0 0.0
  %3070 = vmatpush2.msra.mxu0 0.0
  %3071 = vmatprep.subr.mxu0 0.0
  %3072 = vmatpush2.msra.mxu0 0.0
  %3073 = vmatprep.subr.mxu0 0.0
  %3074 = vmatpush2.msra.mxu0 0.0
  %3075 = vmatprep.subr.mxu0 0.0
  %3076 = vmatpush2.msra.mxu0 0.0
  %3077 = vmatprep.subr.mxu0 0.0
  %3078 = vmatpush2.msra.mxu0 0.0
  %3079 = vmatprep.subr.mxu0 0.0
  %3080 = vmatpush2.msra.mxu0 0.0
  %3081 = vmatprep.subr.mxu0 0.0
  %3082 = vmatpush2.msra.mxu0 0.0
  %3083 = vmatprep.subr.mxu0 0.0
  %3084 = vmatpush2.msra.mxu0 0.0
  %3085 = vmatprep.subr.mxu0 0.0
  %3086 = vmatpush2.msra.mxu0 0.0
  %3087 = vmatprep.mubr.f32.mxu0 0.0
  %3088 = vmatmul.mubr.f32.gmra.mxu0 %v3021
  %v3089 = vpop.f32.mrf.mxu0
  %v3090 = vadd.f32 %v3017, %v3089
  %v3091 = vpop.f32.mrf.mxu0
  %3092 = vdwg.mxu0
  %v3093 = vadd.f32 %v3090, %v1514
  %v3094 = vmax.f32 %v3093, 0.0
  %3095 = vmatprep.subr.mxu0 0.0
  %3096 = vmatpush1.msra.mxu0 0.0
  %3097 = vmatprep.subr.mxu0 0.0
  %3098 = vmatpush1.msra.mxu0 0.0
  %3099 = vmatprep.subr.mxu0 0.0
  %3100 = vmatpush1.msra.mxu0 0.0
  %3101 = vmatprep.subr.mxu0 0.0
  %3102 = vmatpush1.msra.mxu0 0.0
  %3103 = vmatprep.subr.mxu0 0.0
  %3104 = vmatpush1.msra.mxu0 0.0
  %3105 = vmatprep.subr.mxu0 0.0
  %3106 = vmatpush1.msra.mxu0 0.0
  %3107 = vmatprep.subr.mxu0 0.0
  %3108 = vmatpush1.msra.mxu0 0.0
  %3109 = vmatprep.subr.mxu0 0.0
  %3110 = vmatpush1.msra.mxu0 0.0
  %3111 = vmatprep.subr.mxu0 0.0
  %3112 = vmatpush1.msra.mxu0 0.0
  %3113 = vmatprep.subr.mxu0 0.0
  %3114 = vmatpush1.msra.mxu0 0.0
  %3115 = vmatprep.subr.mxu0 0.0
  %3116 = vmatpush1.msra.mxu0 0.0
  %3117 = vmatprep.subr.mxu0 0.0
  %3118 = vmatpush1.msra.mxu0 0.0
  %3119 = vmatprep.subr.mxu0 0.0
  %3120 = vmatpush1.msra.mxu0 %v1529
  %3121 = vmatprep.subr.mxu0 0.0
  %3122 = vmatpush1.msra.mxu0 %v1528
  %3123 = vmatprep.subr.mxu0 0.0
  %3124 = vmatpush1.msra.mxu0 %v1527
  %3125 = vmatprep.subr.mxu0 0.0
  %3126 = vmatpush1.msra.mxu0 %v1526
  %3127 = vmatprep.subr.mxu0 0.0
  %3128 = vmatpush2.msra.mxu0 0.0
  %3129 = vmatprep.subr.mxu0 0.0
  %3130 = vmatpush2.msra.mxu0 0.0
  %3131 = vmatprep.subr.mxu0 0.0
  %3132 = vmatpush2.msra.mxu0 0.0
  %3133 = vmatprep.subr.mxu0 0.0
  %3134 = vmatpush2.msra.mxu0 0.0
  %3135 = vmatprep.subr.mxu0 0.0
  %3136 = vmatpush2.msra.mxu0 0.0
  %3137 = vmatprep.subr.mxu0 0.0
  %3138 = vmatpush2.msra.mxu0 0.0
  %3139 = vmatprep.subr.mxu0 0.0
  %3140 = vmatpush2.msra.mxu0 0.0
  %3141 = vmatprep.subr.mxu0 0.0
  %3142 = vmatpush2.msra.mxu0 0.0
  %3143 = vmatprep.subr.mxu0 0.0
  %3144 = vmatpush2.msra.mxu0 0.0
  %3145 = vmatprep.subr.mxu0 0.0
  %3146 = vmatpush2.msra.mxu0 0.0
  %3147 = vmatprep.subr.mxu0 0.0
  %3148 = vmatpush2.msra.mxu0 0.0
  %3149 = vmatprep.subr.mxu0 0.0
  %3150 = vmatpush2.msra.mxu0 0.0
  %3151 = vmatprep.subr.mxu0 0.0
  %3152 = vmatpush2.msra.mxu0 0.0
  %3153 = vmatprep.subr.mxu0 0.0
  %3154 = vmatpush2.msra.mxu0 0.0
  %3155 = vmatprep.subr.mxu0 0.0
  %3156 = vmatpush2.msra.mxu0 0.0
  %3157 = vmatprep.subr.mxu0 0.0
  %3158 = vmatpush2.msra.mxu0 0.0
  %3159 = vmatprep.mubr.f32.mxu0 0.0
  %3160 = vmatmul.mubr.f32.gmra.mxu0 %v2704
  %v3161 = vpop.f32.mrf.mxu0
  %v3162 = vadd.f32 0.0, %v3161
  %v3163 = vpop.f32.mrf.mxu0
  %3164 = vdwg.mxu0
  %3165 = vmatprep.subr.mxu0 0.0
  %3166 = vmatpush1.msra.mxu0 0.0
  %3167 = vmatprep.subr.mxu0 0.0
  %3168 = vmatpush1.msra.mxu0 0.0
  %3169 = vmatprep.subr.mxu0 0.0
  %3170 = vmatpush1.msra.mxu0 0.0
  %3171 = vmatprep.subr.mxu0 0.0
  %3172 = vmatpush1.msra.mxu0 0.0
  %3173 = vmatprep.subr.mxu0 0.0
  %3174 = vmatpush1.msra.mxu0 0.0
  %3175 = vmatprep.subr.mxu0 0.0
  %3176 = vmatpush1.msra.mxu0 0.0
  %3177 = vmatprep.subr.mxu0 0.0
  %3178 = vmatpush1.msra.mxu0 0.0
  %3179 = vmatprep.subr.mxu0 0.0
  %3180 = vmatpush1.msra.mxu0 0.0
  %3181 = vmatprep.subr.mxu0 0.0
  %3182 = vmatpush1.msra.mxu0 %v1525
  %3183 = vmatprep.subr.mxu0 0.0
  %3184 = vmatpush1.msra.mxu0 %v1524
  %3185 = vmatprep.subr.mxu0 0.0
  %3186 = vmatpush1.msra.mxu0 %v1523
  %3187 = vmatprep.subr.mxu0 0.0
  %3188 = vmatpush1.msra.mxu0 %v1522
  %3189 = vmatprep.subr.mxu0 0.0
  %3190 = vmatpush1.msra.mxu0 %v1521
  %3191 = vmatprep.subr.mxu0 0.0
  %3192 = vmatpush1.msra.mxu0 %v1520
  %3193 = vmatprep.subr.mxu0 0.0
  %3194 = vmatpush1.msra.mxu0 %v1519
  %3195 = vmatprep.subr.mxu0 0.0
  %3196 = vmatpush1.msra.mxu0 %v1518
  %3197 = vmatprep.subr.mxu0 0.0
  %3198 = vmatpush2.msra.mxu0 0.0
  %3199 = vmatprep.subr.mxu0 0.0
  %3200 = vmatpush2.msra.mxu0 0.0
  %3201 = vmatprep.subr.mxu0 0.0
  %3202 = vmatpush2.msra.mxu0 0.0
  %3203 = vmatprep.subr.mxu0 0.0
  %3204 = vmatpush2.msra.mxu0 0.0
  %3205 = vmatprep.subr.mxu0 0.0
  %3206 = vmatpush2.msra.mxu0 0.0
  %3207 = vmatprep.subr.mxu0 0.0
  %3208 = vmatpush2.msra.mxu0 0.0
  %3209 = vmatprep.subr.mxu0 0.0
  %3210 = vmatpush2.msra.mxu0 0.0
  %3211 = vmatprep.subr.mxu0 0.0
  %3212 = vmatpush2.msra.mxu0 0.0
  %3213 = vmatprep.subr.mxu0 0.0
  %3214 = vmatpush2.msra.mxu0 0.0
  %3215 = vmatprep.subr.mxu0 0.0
  %3216 = vmatpush2.msra.mxu0 0.0
  %3217 = vmatprep.subr.mxu0 0.0
  %3218 = vmatpush2.msra.mxu0 0.0
  %3219 = vmatprep.subr.mxu0 0.0
  %3220 = vmatpush2.msra.mxu0 0.0
  %3221 = vmatprep.subr.mxu0 0.0
  %3222 = vmatpush2.msra.mxu0 0.0
  %3223 = vmatprep.subr.mxu0 0.0
  %3224 = vmatpush2.msra.mxu0 0.0
  %3225 = vmatprep.subr.mxu0 0.0
  %3226 = vmatpush2.msra.mxu0 0.0
  %3227 = vmatprep.subr.mxu0 0.0
  %3228 = vmatpush2.msra.mxu0 0.0
  %3229 = vmatprep.mubr.f32.mxu0 0.0
  %3230 = vmatmul.mubr.f32.gmra.mxu0 %v2777
  %v3231 = vpop.f32.mrf.mxu0
  %v3232 = vadd.f32 %v3162, %v3231
  %v3233 = vpop.f32.mrf.mxu0
  %3234 = vdwg.mxu0
  %v3235 = vadd.f32 %v3232, %v1675
  %v3236 = vmax.f32 %v3235, 0.0
  %s3237 = scalar_lea.vmem [#allocation2], 6
  %v3238 = vld [vmem:[%s3237] sm:$0x3]
  %s3239 = scalar_lea.vmem %s6, 96
  %v3240 = vld [vmem:[%s3239] sm:$0xff]
  %v3241 = vld [vmem:[%s3239 + $0x8] sm:$0xff]
  %v3242 = vld [vmem:[%s3239 + $0x10] sm:$0xff]
  %v3243 = vld [vmem:[%s3239 + $0x18] sm:$0xff]
  %v3245 = vsel %vm830, %v3094, 0
  %3247 = vmatprep.subr.mxu0 0.0
  %3248 = vmatpush1.msra.mxu0 0.0
  %3249 = vmatprep.subr.mxu0 0.0
  %3250 = vmatpush1.msra.mxu0 0.0
  %3251 = vmatprep.subr.mxu0 0.0
  %3252 = vmatpush1.msra.mxu0 0.0
  %3253 = vmatprep.subr.mxu0 0.0
  %3254 = vmatpush1.msra.mxu0 0.0
  %3255 = vmatprep.subr.mxu0 0.0
  %3256 = vmatpush1.msra.mxu0 0.0
  %3257 = vmatprep.subr.mxu0 0.0
  %3258 = vmatpush1.msra.mxu0 0.0
  %3259 = vmatprep.subr.mxu0 0.0
  %3260 = vmatpush1.msra.mxu0 0.0
  %3261 = vmatprep.subr.mxu0 0.0
  %3262 = vmatpush1.msra.mxu0 0.0
  %3263 = vmatprep.subr.mxu0 0.0
  %3264 = vmatpush1.msra.mxu0 0.0
  %3265 = vmatprep.subr.mxu0 0.0
  %3266 = vmatpush1.msra.mxu0 0.0
  %3267 = vmatprep.subr.mxu0 0.0
  %3268 = vmatpush1.msra.mxu0 0.0
  %3269 = vmatprep.subr.mxu0 0.0
  %3270 = vmatpush1.msra.mxu0 0.0
  %3271 = vmatprep.subr.mxu0 0.0
  %3272 = vmatpush1.msra.mxu0 %v3243
  %3273 = vmatprep.subr.mxu0 0.0
  %3274 = vmatpush1.msra.mxu0 %v3242
  %3275 = vmatprep.subr.mxu0 0.0
  %3276 = vmatpush1.msra.mxu0 %v3241
  %3277 = vmatprep.subr.mxu0 0.0
  %3278 = vmatpush1.msra.mxu0 %v3240
  %3279 = vmatprep.subr.mxu0 0.0
  %3280 = vmatpush2.msra.mxu0 0.0
  %3281 = vmatprep.subr.mxu0 0.0
  %3282 = vmatpush2.msra.mxu0 0.0
  %3283 = vmatprep.subr.mxu0 0.0
  %3284 = vmatpush2.msra.mxu0 0.0
  %3285 = vmatprep.subr.mxu0 0.0
  %3286 = vmatpush2.msra.mxu0 0.0
  %3287 = vmatprep.subr.mxu0 0.0
  %3288 = vmatpush2.msra.mxu0 0.0
  %3289 = vmatprep.subr.mxu0 0.0
  %3290 = vmatpush2.msra.mxu0 0.0
  %3291 = vmatprep.subr.mxu0 0.0
  %3292 = vmatpush2.msra.mxu0 0.0
  %3293 = vmatprep.subr.mxu0 0.0
  %3294 = vmatpush2.msra.mxu0 0.0
  %3295 = vmatprep.subr.mxu0 0.0
  %3296 = vmatpush2.msra.mxu0 0.0
  %3297 = vmatprep.subr.mxu0 0.0
  %3298 = vmatpush2.msra.mxu0 0.0
  %3299 = vmatprep.subr.mxu0 0.0
  %3300 = vmatpush2.msra.mxu0 0.0
  %3301 = vmatprep.subr.mxu0 0.0
  %3302 = vmatpush2.msra.mxu0 0.0
  %3303 = vmatprep.subr.mxu0 0.0
  %3304 = vmatpush2.msra.mxu0 0.0
  %3305 = vmatprep.subr.mxu0 0.0
  %3306 = vmatpush2.msra.mxu0 0.0
  %3307 = vmatprep.subr.mxu0 0.0
  %3308 = vmatpush2.msra.mxu0 0.0
  %3309 = vmatprep.subr.mxu0 0.0
  %3310 = vmatpush2.msra.mxu0 0.0
  %3311 = vmatprep.mubr.f32.mxu0 0.0
  %3312 = vmatmul.mubr.f32.gmra.mxu0 %v3245
  %v3313 = vpop.f32.mrf.mxu0
  %v3314 = vadd.f32 0.0, %v3313
  %v3315 = vpop.f32.mrf.mxu0
  %3316 = vdwg.mxu0
  %v3317 = vadd.f32 %v3238, %v3314
  %v3318 = vxor.u32 %v3317, 2147483648
  %v3319 = vmul.f32 %v3318, 1.442695
  %v3320 = vpow.pop %v3319
  %v3321 = vadd.f32 %v3320, 1.0
  %v3322 = vrcp.pop %v3321
  %v3323 = vmul.f32 1.0, %v3322
  %v3324 = vtanh.pop %v3317
  %v3325 = vmul.f32 %v3323, %v2556
  %3327 = vrot.lane.b32.xlu0 %v3324, 64
  %v3328 = vpop.permute.xlu0 %3327
  %v3330 = vmul.f32 %v3323, %v3328
  %3332 = vrot.lane.b32.xlu0 %v3330, 32
  %v3333 = vpop.permute.xlu0 %3332
  %v3335 = vadd.f32 %v3325, %v3333
  %v3336 = vtanh.pop %v3335
  %3338 = vrot.lane.b32.xlu0 %v3336, 64
  %v3339 = vpop.permute.xlu0 %3338
  %v3341 = vmul.f32 %v3323, %v3339
  %s3342 = scalar_lea.vmem [#allocation3], 12
  %v3343 = vld [vmem:[%s3342] sm:$0xf]
  %s3344 = scalar_lea.vmem %s7, 384
  %v3345 = vld [vmem:[%s3344] sm:$0xff]
  %v3346 = vld [vmem:[%s3344 + $0x8] sm:$0xff]
  %v3347 = vld [vmem:[%s3344 + $0x10] sm:$0xff]
  %v3348 = vld [vmem:[%s3344 + $0x18] sm:$0xff]
  %v3349 = vld [vmem:[%s3344 + $0x20] sm:$0xff]
  %v3350 = vld [vmem:[%s3344 + $0x28] sm:$0xff]
  %v3351 = vld [vmem:[%s3344 + $0x30] sm:$0xff]
  %v3352 = vld [vmem:[%s3344 + $0x38] sm:$0xff]
  %v3353 = vld [vmem:[%s3344 + $0x40] sm:$0xff]
  %v3354 = vld [vmem:[%s3344 + $0x48] sm:$0xff]
  %v3355 = vld [vmem:[%s3344 + $0x50] sm:$0xff]
  %v3356 = vld [vmem:[%s3344 + $0x58] sm:$0xff]
  %v3357 = vld [vmem:[%s3344 + $0x60] sm:$0xff]
  %v3358 = vld [vmem:[%s3344 + $0x68] sm:$0xff]
  %v3359 = vld [vmem:[%s3344 + $0x70] sm:$0xff]
  %v3360 = vld [vmem:[%s3344 + $0x78] sm:$0xff]
  %v3362 = vsel %vm946, %v3236, 0
  %3364 = vmatprep.subr.mxu0 0.0
  %3365 = vmatpush1.msra.mxu0 0.0
  %3366 = vmatprep.subr.mxu0 0.0
  %3367 = vmatpush1.msra.mxu0 0.0
  %3368 = vmatprep.subr.mxu0 0.0
  %3369 = vmatpush1.msra.mxu0 0.0
  %3370 = vmatprep.subr.mxu0 0.0
  %3371 = vmatpush1.msra.mxu0 0.0
  %3372 = vmatprep.subr.mxu0 0.0
  %3373 = vmatpush1.msra.mxu0 0.0
  %3374 = vmatprep.subr.mxu0 0.0
  %3375 = vmatpush1.msra.mxu0 0.0
  %3376 = vmatprep.subr.mxu0 0.0
  %3377 = vmatpush1.msra.mxu0 0.0
  %3378 = vmatprep.subr.mxu0 0.0
  %3379 = vmatpush1.msra.mxu0 0.0
  %3380 = vmatprep.subr.mxu0 %v3360
  %3381 = vmatpush1.msra.mxu0 %v3359
  %3382 = vmatprep.subr.mxu0 %v3358
  %3383 = vmatpush1.msra.mxu0 %v3357
  %3384 = vmatprep.subr.mxu0 %v3356
  %3385 = vmatpush1.msra.mxu0 %v3355
  %3386 = vmatprep.subr.mxu0 %v3354
  %3387 = vmatpush1.msra.mxu0 %v3353
  %3388 = vmatprep.subr.mxu0 %v3352
  %3389 = vmatpush1.msra.mxu0 %v3351
  %3390 = vmatprep.subr.mxu0 %v3350
  %3391 = vmatpush1.msra.mxu0 %v3349
  %3392 = vmatprep.subr.mxu0 %v3348
  %3393 = vmatpush1.msra.mxu0 %v3347
  %3394 = vmatprep.subr.mxu0 %v3346
  %3395 = vmatpush1.msra.mxu0 %v3345
  %3396 = vmatprep.subr.mxu0 0.0
  %3397 = vmatpush2.msra.mxu0 0.0
  %3398 = vmatprep.subr.mxu0 0.0
  %3399 = vmatpush2.msra.mxu0 0.0
  %3400 = vmatprep.subr.mxu0 0.0
  %3401 = vmatpush2.msra.mxu0 0.0
  %3402 = vmatprep.subr.mxu0 0.0
  %3403 = vmatpush2.msra.mxu0 0.0
  %3404 = vmatprep.subr.mxu0 0.0
  %3405 = vmatpush2.msra.mxu0 0.0
  %3406 = vmatprep.subr.mxu0 0.0
  %3407 = vmatpush2.msra.mxu0 0.0
  %3408 = vmatprep.subr.mxu0 0.0
  %3409 = vmatpush2.msra.mxu0 0.0
  %3410 = vmatprep.subr.mxu0 0.0
  %3411 = vmatpush2.msra.mxu0 0.0
  %3412 = vmatprep.subr.mxu0 0.0
  %3413 = vmatpush2.msra.mxu0 0.0
  %3414 = vmatprep.subr.mxu0 0.0
  %3415 = vmatpush2.msra.mxu0 0.0
  %3416 = vmatprep.subr.mxu0 0.0
  %3417 = vmatpush2.msra.mxu0 0.0
  %3418 = vmatprep.subr.mxu0 0.0
  %3419 = vmatpush2.msra.mxu0 0.0
  %3420 = vmatprep.subr.mxu0 0.0
  %3421 = vmatpush2.msra.mxu0 0.0
  %3422 = vmatprep.subr.mxu0 0.0
  %3423 = vmatpush2.msra.mxu0 0.0
  %3424 = vmatprep.subr.mxu0 0.0
  %3425 = vmatpush2.msra.mxu0 0.0
  %3426 = vmatprep.subr.mxu0 0.0
  %3427 = vmatpush2.msra.mxu0 0.0
  %3428 = vmatprep.mubr.f32.mxu0 0.0
  %3429 = vmatmul.mubr.f32.gmra.mxu0 %v3362
  %v3430 = vpop.f32.mrf.mxu0
  %v3431 = vadd.f32 0.0, %v3430
  %v3432 = vpop.f32.mrf.mxu0
  %v3433 = vadd.f32 0.0, %v3432
  %3434 = vdwg.mxu0
  %v3437 = vcombine.low %v3431, %v3433
  %v3439 = vunpack.c.l.s4 1983009808
  %v3440 = vunpack.c.0.s8 %v3439
  %v3441 = vlaneseq
  %v3442 = vshrl.u32 %v3441, 7
  %v3443 = vsub.s32 %v3440, %v3442
  %v3444 = vrot.slane %v3437, %v3443
  %v3446 = vadd.f32 %v3343, %v3444
  %v3447 = vxor.u32 %v3446, 2147483648
  %v3448 = vmul.f32 %v3447, 1.442695
  %v3449 = vpow.pop %v3448
  %v3450 = vadd.f32 %v3449, 1.0
  %v3451 = vrcp.pop %v3450
  %v3452 = vmul.f32 1.0, %v3451
  %v3454 = vrot.slane %v3446, 2
  %v3456 = vtanh.pop %v3454
  %3457 = vrot.lane.b32.xlu0 %v3446, 64
  %v3458 = vpop.permute.xlu0 %3457
  %v3459 = vrot.slane %v3458, 2
  %v3461 = vxor.u32 %v3459, 2147483648
  %v3462 = vmul.f32 %v3461, 1.442695
  %v3463 = vpow.pop %v3462
  %v3464 = vadd.f32 %v3463, 1.0
  %v3465 = vrcp.pop %v3464
  %v3466 = vmul.f32 1.0, %v3465
  %v3467 = vmul.f32 %v3452, %v2694
  %v3468 = vmul.f32 %v3452, %v3456
  %3470 = vrot.lane.b32.xlu0 %v3468, 64
  %v3471 = vpop.permute.xlu0 %3470
  %v3473 = vadd.f32 %v3467, %v3471
  %v3474 = vtanh.pop %v3473
  %3476 = vrot.lane.b32.xlu0 %v3474, 64
  %v3477 = vpop.permute.xlu0 %3476
  %v3479 = vmul.f32 %v3466, %v3477
  %3481 = vrot.lane.b32.xlu0 %v3341, 32
  %v3482 = vpop.permute.xlu0 %3481
  %v3483 = vsel %vm830, %v3482, 0
  %3485 = vmatprep.subr.mxu0 0.0
  %3486 = vmatpush1.msra.mxu0 0.0
  %3487 = vmatprep.subr.mxu0 0.0
  %3488 = vmatpush1.msra.mxu0 0.0
  %3489 = vmatprep.subr.mxu0 0.0
  %3490 = vmatpush1.msra.mxu0 0.0
  %3491 = vmatprep.subr.mxu0 0.0
  %3492 = vmatpush1.msra.mxu0 0.0
  %3493 = vmatprep.subr.mxu0 0.0
  %3494 = vmatpush1.msra.mxu0 0.0
  %3495 = vmatprep.subr.mxu0 0.0
  %3496 = vmatpush1.msra.mxu0 0.0
  %3497 = vmatprep.subr.mxu0 0.0
  %3498 = vmatpush1.msra.mxu0 0.0
  %3499 = vmatprep.subr.mxu0 0.0
  %3500 = vmatpush1.msra.mxu0 0.0
  %3501 = vmatprep.subr.mxu0 0.0
  %3502 = vmatpush1.msra.mxu0 0.0
  %3503 = vmatprep.subr.mxu0 0.0
  %3504 = vmatpush1.msra.mxu0 0.0
  %3505 = vmatprep.subr.mxu0 0.0
  %3506 = vmatpush1.msra.mxu0 0.0
  %3507 = vmatprep.subr.mxu0 0.0
  %3508 = vmatpush1.msra.mxu0 0.0
  %3509 = vmatprep.subr.mxu0 0.0
  %3510 = vmatpush1.msra.mxu0 %v1070
  %3511 = vmatprep.subr.mxu0 0.0
  %3512 = vmatpush1.msra.mxu0 %v1069
  %3513 = vmatprep.subr.mxu0 0.0
  %3514 = vmatpush1.msra.mxu0 %v1068
  %3515 = vmatprep.subr.mxu0 0.0
  %3516 = vmatpush1.msra.mxu0 %v1067
  %3517 = vmatprep.subr.mxu0 0.0
  %3518 = vmatpush2.msra.mxu0 0.0
  %3519 = vmatprep.subr.mxu0 0.0
  %3520 = vmatpush2.msra.mxu0 0.0
  %3521 = vmatprep.subr.mxu0 0.0
  %3522 = vmatpush2.msra.mxu0 0.0
  %3523 = vmatprep.subr.mxu0 0.0
  %3524 = vmatpush2.msra.mxu0 0.0
  %3525 = vmatprep.subr.mxu0 0.0
  %3526 = vmatpush2.msra.mxu0 0.0
  %3527 = vmatprep.subr.mxu0 0.0
  %3528 = vmatpush2.msra.mxu0 0.0
  %3529 = vmatprep.subr.mxu0 0.0
  %3530 = vmatpush2.msra.mxu0 0.0
  %3531 = vmatprep.subr.mxu0 0.0
  %3532 = vmatpush2.msra.mxu0 0.0
  %3533 = vmatprep.subr.mxu0 0.0
  %3534 = vmatpush2.msra.mxu0 0.0
  %3535 = vmatprep.subr.mxu0 0.0
  %3536 = vmatpush2.msra.mxu0 0.0
  %3537 = vmatprep.subr.mxu0 0.0
  %3538 = vmatpush2.msra.mxu0 0.0
  %3539 = vmatprep.subr.mxu0 0.0
  %3540 = vmatpush2.msra.mxu0 0.0
  %3541 = vmatprep.subr.mxu0 0.0
  %3542 = vmatpush2.msra.mxu0 0.0
  %3543 = vmatprep.subr.mxu0 0.0
  %3544 = vmatpush2.msra.mxu0 0.0
  %3545 = vmatprep.subr.mxu0 0.0
  %3546 = vmatpush2.msra.mxu0 0.0
  %3547 = vmatprep.subr.mxu0 0.0
  %3548 = vmatpush2.msra.mxu0 0.0
  %3549 = vmatprep.mubr.f32.mxu0 0.0
  %3550 = vmatmul.mubr.f32.gmra.mxu0 %v3483
  %v3551 = vpop.f32.mrf.mxu0
  %v3552 = vadd.f32 %v1076, %v3551
  %v3553 = vpop.f32.mrf.mxu0
  %3554 = vdwg.mxu0
  %v3556 = vsel %vm946, %v3479, 0
  %3558 = vmatprep.subr.mxu0 0.0
  %3559 = vmatpush1.msra.mxu0 0.0
  %3560 = vmatprep.subr.mxu0 0.0
  %3561 = vmatpush1.msra.mxu0 0.0
  %3562 = vmatprep.subr.mxu0 0.0
  %3563 = vmatpush1.msra.mxu0 0.0
  %3564 = vmatprep.subr.mxu0 0.0
  %3565 = vmatpush1.msra.mxu0 0.0
  %3566 = vmatprep.subr.mxu0 0.0
  %3567 = vmatpush1.msra.mxu0 0.0
  %3568 = vmatprep.subr.mxu0 0.0
  %3569 = vmatpush1.msra.mxu0 0.0
  %3570 = vmatprep.subr.mxu0 0.0
  %3571 = vmatpush1.msra.mxu0 0.0
  %3572 = vmatprep.subr.mxu0 0.0
  %3573 = vmatpush1.msra.mxu0 0.0
  %3574 = vmatprep.subr.mxu0 0.0
  %3575 = vmatpush1.msra.mxu0 %v1160
  %3576 = vmatprep.subr.mxu0 0.0
  %3577 = vmatpush1.msra.mxu0 %v1159
  %3578 = vmatprep.subr.mxu0 0.0
  %3579 = vmatpush1.msra.mxu0 %v1158
  %3580 = vmatprep.subr.mxu0 0.0
  %3581 = vmatpush1.msra.mxu0 %v1157
  %3582 = vmatprep.subr.mxu0 0.0
  %3583 = vmatpush1.msra.mxu0 %v1156
  %3584 = vmatprep.subr.mxu0 0.0
  %3585 = vmatpush1.msra.mxu0 %v1155
  %3586 = vmatprep.subr.mxu0 0.0
  %3587 = vmatpush1.msra.mxu0 %v1154
  %3588 = vmatprep.subr.mxu0 0.0
  %3589 = vmatpush1.msra.mxu0 %v1153
  %3590 = vmatprep.subr.mxu0 0.0
  %3591 = vmatpush2.msra.mxu0 0.0
  %3592 = vmatprep.subr.mxu0 0.0
  %3593 = vmatpush2.msra.mxu0 0.0
  %3594 = vmatprep.subr.mxu0 0.0
  %3595 = vmatpush2.msra.mxu0 0.0
  %3596 = vmatprep.subr.mxu0 0.0
  %3597 = vmatpush2.msra.mxu0 0.0
  %3598 = vmatprep.subr.mxu0 0.0
  %3599 = vmatpush2.msra.mxu0 0.0
  %3600 = vmatprep.subr.mxu0 0.0
  %3601 = vmatpush2.msra.mxu0 0.0
  %3602 = vmatprep.subr.mxu0 0.0
  %3603 = vmatpush2.msra.mxu0 0.0
  %3604 = vmatprep.subr.mxu0 0.0
  %3605 = vmatpush2.msra.mxu0 0.0
  %3606 = vmatprep.subr.mxu0 0.0
  %3607 = vmatpush2.msra.mxu0 0.0
  %3608 = vmatprep.subr.mxu0 0.0
  %3609 = vmatpush2.msra.mxu0 0.0
  %3610 = vmatprep.subr.mxu0 0.0
  %3611 = vmatpush2.msra.mxu0 0.0
  %3612 = vmatprep.subr.mxu0 0.0
  %3613 = vmatpush2.msra.mxu0 0.0
  %3614 = vmatprep.subr.mxu0 0.0
  %3615 = vmatpush2.msra.mxu0 0.0
  %3616 = vmatprep.subr.mxu0 0.0
  %3617 = vmatpush2.msra.mxu0 0.0
  %3618 = vmatprep.subr.mxu0 0.0
  %3619 = vmatpush2.msra.mxu0 0.0
  %3620 = vmatprep.subr.mxu0 0.0
  %3621 = vmatpush2.msra.mxu0 0.0
  %3622 = vmatprep.mubr.f32.mxu0 0.0
  %3623 = vmatmul.mubr.f32.gmra.mxu0 %v3556
  %v3624 = vpop.f32.mrf.mxu0
  %v3625 = vadd.f32 %v1166, %v3624
  %v3626 = vpop.f32.mrf.mxu0
  %3627 = vdwg.mxu0
  %3628 = vmatprep.subr.mxu0 0.0
  %3629 = vmatpush1.msra.mxu0 0.0
  %3630 = vmatprep.subr.mxu0 0.0
  %3631 = vmatpush1.msra.mxu0 0.0
  %3632 = vmatprep.subr.mxu0 0.0
  %3633 = vmatpush1.msra.mxu0 0.0
  %3634 = vmatprep.subr.mxu0 0.0
  %3635 = vmatpush1.msra.mxu0 0.0
  %3636 = vmatprep.subr.mxu0 0.0
  %3637 = vmatpush1.msra.mxu0 0.0
  %3638 = vmatprep.subr.mxu0 0.0
  %3639 = vmatpush1.msra.mxu0 0.0
  %3640 = vmatprep.subr.mxu0 0.0
  %3641 = vmatpush1.msra.mxu0 0.0
  %3642 = vmatprep.subr.mxu0 0.0
  %3643 = vmatpush1.msra.mxu0 0.0
  %3644 = vmatprep.subr.mxu0 0.0
  %3645 = vmatpush1.msra.mxu0 %v1248
  %3646 = vmatprep.subr.mxu0 0.0
  %3647 = vmatpush1.msra.mxu0 %v1247
  %3648 = vmatprep.subr.mxu0 0.0
  %3649 = vmatpush1.msra.mxu0 %v1246
  %3650 = vmatprep.subr.mxu0 0.0
  %3651 = vmatpush1.msra.mxu0 %v1245
  %3652 = vmatprep.subr.mxu0 0.0
  %3653 = vmatpush1.msra.mxu0 %v1244
  %3654 = vmatprep.subr.mxu0 0.0
  %3655 = vmatpush1.msra.mxu0 %v1243
  %3656 = vmatprep.subr.mxu0 0.0
  %3657 = vmatpush1.msra.mxu0 %v1242
  %3658 = vmatprep.subr.mxu0 0.0
  %3659 = vmatpush1.msra.mxu0 %v1241
  %3660 = vmatprep.subr.mxu0 0.0
  %3661 = vmatpush2.msra.mxu0 0.0
  %3662 = vmatprep.subr.mxu0 0.0
  %3663 = vmatpush2.msra.mxu0 0.0
  %3664 = vmatprep.subr.mxu0 0.0
  %3665 = vmatpush2.msra.mxu0 0.0
  %3666 = vmatprep.subr.mxu0 0.0
  %3667 = vmatpush2.msra.mxu0 0.0
  %3668 = vmatprep.subr.mxu0 0.0
  %3669 = vmatpush2.msra.mxu0 0.0
  %3670 = vmatprep.subr.mxu0 0.0
  %3671 = vmatpush2.msra.mxu0 0.0
  %3672 = vmatprep.subr.mxu0 0.0
  %3673 = vmatpush2.msra.mxu0 0.0
  %3674 = vmatprep.subr.mxu0 0.0
  %3675 = vmatpush2.msra.mxu0 0.0
  %3676 = vmatprep.subr.mxu0 0.0
  %3677 = vmatpush2.msra.mxu0 0.0
  %3678 = vmatprep.subr.mxu0 0.0
  %3679 = vmatpush2.msra.mxu0 0.0
  %3680 = vmatprep.subr.mxu0 0.0
  %3681 = vmatpush2.msra.mxu0 0.0
  %3682 = vmatprep.subr.mxu0 0.0
  %3683 = vmatpush2.msra.mxu0 0.0
  %3684 = vmatprep.subr.mxu0 0.0
  %3685 = vmatpush2.msra.mxu0 0.0
  %3686 = vmatprep.subr.mxu0 0.0
  %3687 = vmatpush2.msra.mxu0 0.0
  %3688 = vmatprep.subr.mxu0 0.0
  %3689 = vmatpush2.msra.mxu0 0.0
  %3690 = vmatprep.subr.mxu0 0.0
  %3691 = vmatpush2.msra.mxu0 0.0
  %3692 = vmatprep.mubr.f32.mxu0 0.0
  %3693 = vmatmul.mubr.f32.gmra.mxu0 %v3556
  %v3694 = vpop.f32.mrf.mxu0
  %v3695 = vadd.f32 %v1254, %v3694
  %v3696 = vpop.f32.mrf.mxu0
  %3697 = vdwg.mxu0
  %v3698 = vmul.f32 %v3552, %v3625
  %v3699 = vsel %vm1327, %v3698, 0.0
  %3700 = vadd.xlane.f32.xlu0 %v3699
  %v3701 = vpop.xlane.xlu0 %3700
  %v3702 = vmul.f32 %v3701, 0.17677669
  %3704 = vrot.lane.b32.xlu0 %v3625, 96
  %v3705 = vpop.permute.xlu0 %3704
  %v3707 = vmul.f32 %v3552, %v3705
  %v3708 = vsel %vm1327, %v3707, 0.0
  %3709 = vadd.xlane.f32.xlu0 %v3708
  %v3710 = vpop.xlane.xlu0 %3709
  %v3711 = vmul.f32 %v3710, 0.17677669
  %v3712 = vmax.f32 %v3702, %v3711
  %v3713 = vsub.f32 %v3702, %v3712
  %v3714 = vmul.f32 %v3713, 1.442695
  %v3715 = vpow.pop %v3714
  %v3716 = vsub.f32 %v3711, %v3712
  %v3717 = vmul.f32 %v3716, 1.442695
  %v3718 = vpow.pop %v3717
  %v3719 = vadd.f32 %v3715, %v3718
  %v3720 = vmul.f32 %v3715, %v3695
  %v3721 = vmul.f32 %v3718, %v3695
  %3723 = vrot.lane.b32.xlu0 %v3721, 96
  %v3724 = vpop.permute.xlu0 %3723
  %v3726 = vadd.f32 %v3720, %v3724
  %v3727 = vrcp.pop %v3719
  %v3728 = vmul.f32 %v3726, %v3727
  %3729 = vmatprep.subr.mxu0 0.0
  %3730 = vmatpush1.msra.mxu0 0.0
  %3731 = vmatprep.subr.mxu0 0.0
  %3732 = vmatpush1.msra.mxu0 0.0
  %3733 = vmatprep.subr.mxu0 0.0
  %3734 = vmatpush1.msra.mxu0 0.0
  %3735 = vmatprep.subr.mxu0 0.0
  %3736 = vmatpush1.msra.mxu0 0.0
  %3737 = vmatprep.subr.mxu0 0.0
  %3738 = vmatpush1.msra.mxu0 0.0
  %3739 = vmatprep.subr.mxu0 0.0
  %3740 = vmatpush1.msra.mxu0 0.0
  %3741 = vmatprep.subr.mxu0 0.0
  %3742 = vmatpush1.msra.mxu0 0.0
  %3743 = vmatprep.subr.mxu0 0.0
  %3744 = vmatpush1.msra.mxu0 0.0
  %3745 = vmatprep.subr.mxu0 0.0
  %3746 = vmatpush1.msra.mxu0 0.0
  %3747 = vmatprep.subr.mxu0 0.0
  %3748 = vmatpush1.msra.mxu0 0.0
  %3749 = vmatprep.subr.mxu0 0.0
  %3750 = vmatpush1.msra.mxu0 0.0
  %3751 = vmatprep.subr.mxu0 0.0
  %3752 = vmatpush1.msra.mxu0 0.0
  %3753 = vmatprep.subr.mxu0 0.0
  %3754 = vmatpush1.msra.mxu0 %v1365
  %3755 = vmatprep.subr.mxu0 0.0
  %3756 = vmatpush1.msra.mxu0 %v1364
  %3757 = vmatprep.subr.mxu0 0.0
  %3758 = vmatpush1.msra.mxu0 %v1363
  %3759 = vmatprep.subr.mxu0 0.0
  %3760 = vmatpush1.msra.mxu0 %v1362
  %3761 = vmatprep.subr.mxu0 0.0
  %3762 = vmatpush2.msra.mxu0 0.0
  %3763 = vmatprep.subr.mxu0 0.0
  %3764 = vmatpush2.msra.mxu0 0.0
  %3765 = vmatprep.subr.mxu0 0.0
  %3766 = vmatpush2.msra.mxu0 0.0
  %3767 = vmatprep.subr.mxu0 0.0
  %3768 = vmatpush2.msra.mxu0 0.0
  %3769 = vmatprep.subr.mxu0 0.0
  %3770 = vmatpush2.msra.mxu0 0.0
  %3771 = vmatprep.subr.mxu0 0.0
  %3772 = vmatpush2.msra.mxu0 0.0
  %3773 = vmatprep.subr.mxu0 0.0
  %3774 = vmatpush2.msra.mxu0 0.0
  %3775 = vmatprep.subr.mxu0 0.0
  %3776 = vmatpush2.msra.mxu0 0.0
  %3777 = vmatprep.subr.mxu0 0.0
  %3778 = vmatpush2.msra.mxu0 0.0
  %3779 = vmatprep.subr.mxu0 0.0
  %3780 = vmatpush2.msra.mxu0 0.0
  %3781 = vmatprep.subr.mxu0 0.0
  %3782 = vmatpush2.msra.mxu0 0.0
  %3783 = vmatprep.subr.mxu0 0.0
  %3784 = vmatpush2.msra.mxu0 0.0
  %3785 = vmatprep.subr.mxu0 0.0
  %3786 = vmatpush2.msra.mxu0 0.0
  %3787 = vmatprep.subr.mxu0 0.0
  %3788 = vmatpush2.msra.mxu0 0.0
  %3789 = vmatprep.subr.mxu0 0.0
  %3790 = vmatpush2.msra.mxu0 0.0
  %3791 = vmatprep.subr.mxu0 0.0
  %3792 = vmatpush2.msra.mxu0 0.0
  %3793 = vmatprep.mubr.f32.mxu0 0.0
  %3794 = vmatmul.mubr.f32.gmra.mxu0 %v3483
  %v3795 = vpop.f32.mrf.mxu0
  %v3796 = vadd.f32 0.0, %v3795
  %v3797 = vpop.f32.mrf.mxu0
  %3798 = vdwg.mxu0
  %v3800 = vsel %vm830, %v3728, 0
  %3802 = vmatprep.subr.mxu0 0.0
  %3803 = vmatpush1.msra.mxu0 0.0
  %3804 = vmatprep.subr.mxu0 0.0
  %3805 = vmatpush1.msra.mxu0 0.0
  %3806 = vmatprep.subr.mxu0 0.0
  %3807 = vmatpush1.msra.mxu0 0.0
  %3808 = vmatprep.subr.mxu0 0.0
  %3809 = vmatpush1.msra.mxu0 0.0
  %3810 = vmatprep.subr.mxu0 0.0
  %3811 = vmatpush1.msra.mxu0 0.0
  %3812 = vmatprep.subr.mxu0 0.0
  %3813 = vmatpush1.msra.mxu0 0.0
  %3814 = vmatprep.subr.mxu0 0.0
  %3815 = vmatpush1.msra.mxu0 0.0
  %3816 = vmatprep.subr.mxu0 0.0
  %3817 = vmatpush1.msra.mxu0 0.0
  %3818 = vmatprep.subr.mxu0 0.0
  %3819 = vmatpush1.msra.mxu0 0.0
  %3820 = vmatprep.subr.mxu0 0.0
  %3821 = vmatpush1.msra.mxu0 0.0
  %3822 = vmatprep.subr.mxu0 0.0
  %3823 = vmatpush1.msra.mxu0 0.0
  %3824 = vmatprep.subr.mxu0 0.0
  %3825 = vmatpush1.msra.mxu0 0.0
  %3826 = vmatprep.subr.mxu0 0.0
  %3827 = vmatpush1.msra.mxu0 %v1361
  %3828 = vmatprep.subr.mxu0 0.0
  %3829 = vmatpush1.msra.mxu0 %v1360
  %3830 = vmatprep.subr.mxu0 0.0
  %3831 = vmatpush1.msra.mxu0 %v1359
  %3832 = vmatprep.subr.mxu0 0.0
  %3833 = vmatpush1.msra.mxu0 %v1358
  %3834 = vmatprep.subr.mxu0 0.0
  %3835 = vmatpush2.msra.mxu0 0.0
  %3836 = vmatprep.subr.mxu0 0.0
  %3837 = vmatpush2.msra.mxu0 0.0
  %3838 = vmatprep.subr.mxu0 0.0
  %3839 = vmatpush2.msra.mxu0 0.0
  %3840 = vmatprep.subr.mxu0 0.0
  %3841 = vmatpush2.msra.mxu0 0.0
  %3842 = vmatprep.subr.mxu0 0.0
  %3843 = vmatpush2.msra.mxu0 0.0
  %3844 = vmatprep.subr.mxu0 0.0
  %3845 = vmatpush2.msra.mxu0 0.0
  %3846 = vmatprep.subr.mxu0 0.0
  %3847 = vmatpush2.msra.mxu0 0.0
  %3848 = vmatprep.subr.mxu0 0.0
  %3849 = vmatpush2.msra.mxu0 0.0
  %3850 = vmatprep.subr.mxu0 0.0
  %3851 = vmatpush2.msra.mxu0 0.0
  %3852 = vmatprep.subr.mxu0 0.0
  %3853 = vmatpush2.msra.mxu0 0.0
  %3854 = vmatprep.subr.mxu0 0.0
  %3855 = vmatpush2.msra.mxu0 0.0
  %3856 = vmatprep.subr.mxu0 0.0
  %3857 = vmatpush2.msra.mxu0 0.0
  %3858 = vmatprep.subr.mxu0 0.0
  %3859 = vmatpush2.msra.mxu0 0.0
  %3860 = vmatprep.subr.mxu0 0.0
  %3861 = vmatpush2.msra.mxu0 0.0
  %3862 = vmatprep.subr.mxu0 0.0
  %3863 = vmatpush2.msra.mxu0 0.0
  %3864 = vmatprep.subr.mxu0 0.0
  %3865 = vmatpush2.msra.mxu0 0.0
  %3866 = vmatprep.mubr.f32.mxu0 0.0
  %3867 = vmatmul.mubr.f32.gmra.mxu0 %v3800
  %v3868 = vpop.f32.mrf.mxu0
  %v3869 = vadd.f32 %v3796, %v3868
  %v3870 = vpop.f32.mrf.mxu0
  %3871 = vdwg.mxu0
  %v3872 = vadd.f32 %v3869, %v1514
  %v3873 = vmax.f32 %v3872, 0.0
  %v3874 = vld [vmem:[%s20] sm:$0xff]
  %v3875 = vld [vmem:[%s20 + $0x8] sm:$0xff]
  %v3876 = vld [vmem:[%s20 + $0x10] sm:$0xff]
  %v3877 = vld [vmem:[%s20 + $0x18] sm:$0xff]
  %v3878 = vld [vmem:[%s21] sm:$0x1]
  %v3880 = vlaneseq
  %v3881 = vshrl.u32 %v3880, 7
  %v3882 = vsub.s32 0, %v3881
  %v3883 = vrot.slane %v3878, %v3882
  %v3886 = vsel %vm830, %v3873, 0
  %3888 = vmatprep.subr.mxu0 0.0
  %3889 = vmatpush1.msra.mxu0 0.0
  %3890 = vmatprep.subr.mxu0 0.0
  %3891 = vmatpush1.msra.mxu0 0.0
  %3892 = vmatprep.subr.mxu0 0.0
  %3893 = vmatpush1.msra.mxu0 0.0
  %3894 = vmatprep.subr.mxu0 0.0
  %3895 = vmatpush1.msra.mxu0 0.0
  %3896 = vmatprep.subr.mxu0 0.0
  %3897 = vmatpush1.msra.mxu0 0.0
  %3898 = vmatprep.subr.mxu0 0.0
  %3899 = vmatpush1.msra.mxu0 0.0
  %3900 = vmatprep.subr.mxu0 0.0
  %3901 = vmatpush1.msra.mxu0 0.0
  %3902 = vmatprep.subr.mxu0 0.0
  %3903 = vmatpush1.msra.mxu0 0.0
  %3904 = vmatprep.subr.mxu0 0.0
  %3905 = vmatpush1.msra.mxu0 0.0
  %3906 = vmatprep.subr.mxu0 0.0
  %3907 = vmatpush1.msra.mxu0 0.0
  %3908 = vmatprep.subr.mxu0 0.0
  %3909 = vmatpush1.msra.mxu0 0.0
  %3910 = vmatprep.subr.mxu0 0.0
  %3911 = vmatpush1.msra.mxu0 0.0
  %3912 = vmatprep.subr.mxu0 0.0
  %3913 = vmatpush1.msra.mxu0 %v3877
  %3914 = vmatprep.subr.mxu0 0.0
  %3915 = vmatpush1.msra.mxu0 %v3876
  %3916 = vmatprep.subr.mxu0 0.0
  %3917 = vmatpush1.msra.mxu0 %v3875
  %3918 = vmatprep.subr.mxu0 0.0
  %3919 = vmatpush1.msra.mxu0 %v3874
  %3920 = vmatprep.subr.mxu0 0.0
  %3921 = vmatpush2.msra.mxu0 0.0
  %3922 = vmatprep.subr.mxu0 0.0
  %3923 = vmatpush2.msra.mxu0 0.0
  %3924 = vmatprep.subr.mxu0 0.0
  %3925 = vmatpush2.msra.mxu0 0.0
  %3926 = vmatprep.subr.mxu0 0.0
  %3927 = vmatpush2.msra.mxu0 0.0
  %3928 = vmatprep.subr.mxu0 0.0
  %3929 = vmatpush2.msra.mxu0 0.0
  %3930 = vmatprep.subr.mxu0 0.0
  %3931 = vmatpush2.msra.mxu0 0.0
  %3932 = vmatprep.subr.mxu0 0.0
  %3933 = vmatpush2.msra.mxu0 0.0
  %3934 = vmatprep.subr.mxu0 0.0
  %3935 = vmatpush2.msra.mxu0 0.0
  %3936 = vmatprep.subr.mxu0 0.0
  %3937 = vmatpush2.msra.mxu0 0.0
  %3938 = vmatprep.subr.mxu0 0.0
  %3939 = vmatpush2.msra.mxu0 0.0
  %3940 = vmatprep.subr.mxu0 0.0
  %3941 = vmatpush2.msra.mxu0 0.0
  %3942 = vmatprep.subr.mxu0 0.0
  %3943 = vmatpush2.msra.mxu0 0.0
  %3944 = vmatprep.subr.mxu0 0.0
  %3945 = vmatpush2.msra.mxu0 0.0
  %3946 = vmatprep.subr.mxu0 0.0
  %3947 = vmatpush2.msra.mxu0 0.0
  %3948 = vmatprep.subr.mxu0 0.0
  %3949 = vmatpush2.msra.mxu0 0.0
  %3950 = vmatprep.subr.mxu0 0.0
  %3951 = vmatpush2.msra.mxu0 0.0
  %3952 = vmatprep.mubr.f32.mxu0 0.0
  %3953 = vmatmul.mubr.f32.gmra.mxu0 %v3886
  %v3954 = vpop.f32.mrf.mxu0
  %v3955 = vadd.f32 %v3883, %v3954
  %v3956 = vpop.f32.mrf.mxu0
  %3957 = vdwg.mxu0
  %v3958 = vmax.f32 %v3955, 0.0
  %v3959 = vld [vmem:[%s22] sm:$0x1]
  %v3961 = vlaneseq
  %v3962 = vshrl.u32 %v3961, 7
  %v3963 = vsub.s32 0, %v3962
  %v3964 = vrot.slane %v3959, %v3963
  %v3966 = vmul.f32 %v3958, %v3964
  %vm3967 = vcmask 123904
  %v3968 = vsel %vm3967, %v3966, 0.0
  %3969 = vadd.xlane.f32.xlu0 %v3968
  %v3970 = vpop.xlane.xlu0 %3969
  %v3971 = vld [vmem:[#allocation4] sm:$0x1]
  %v3973 = vlaneseq
  %v3974 = vshrl.u32 %v3973, 7
  %v3975 = vsub.s32 0, %v3974
  %v3976 = vrot.slane %v3971, %v3975
  %v3978 = vadd.f32 %v3970, %v3976
  %vm3979 = vcmask 1024
  %3980 = vst.msk [vmem:[%s24] sm:$0x3] %vm3979, %v3978
  // Predicated region
  $region98: #{forward.1} parent=0 // pred_check
    _
  $region99: #{forward.1} parent=0 // pred_check_branch
    %3982 = sbr.rel (0) target = $region101
  $region100: #{forward.1} parent=0 // pred_region
    _
  $region101: #{forward.1} parent=0 // pred_fallthru
    _
  // Predicated region
  $region102: #{forward.1} parent=0 // pred_check
    _
  $region103: #{forward.1} parent=0 // pred_check_branch
    %3984 = sbr.rel (0) target = $region105
  $region104: #{forward.1} parent=0 // pred_region
    _
  $region105: #{forward.1} parent=0 // pred_fallthru
    _

</llo_original>
